<compile_context>
chip_gen: v6e
topology: v6e:2x2x1
jax: 0.10.0
libtpu: 0.0.40
codegen_flags: <defaults>
</compile_context>

<pallas_src>
import functools
import math

import jax
import jax.numpy as jnp
from jax.experimental import pallas as pl
from jax.experimental.pallas import tpu as pltpu


# ----------------------------------------------------------------------------
# tiling helper
# ----------------------------------------------------------------------------
def _pick_row_tile(m, target=512):
    """Largest row tile <= target that divides m (multiple of 8 preferred)."""
    for cand in (1024, 512, 256, 128, 64, 32, 16, 8):
        if cand <= target and m % cand == 0:
            return cand
    return m  # tiny/ragged slab: single full-extent block (allowed by BlockSpec rules)


# ----------------------------------------------------------------------------
# Kernel 1: fused multi-head self-attention + residual
#   grid = (batch, n_heads); the head axis accumulates into a VMEM scratch.
# ----------------------------------------------------------------------------
def _mha_residual_kernel(h_ref, wq_ref, wk_ref, wv_ref, wo_ref, o_ref,
                         acc_ref, *, norm):
    hd = pl.program_id(1)

    x = h_ref[0]                                          # (S, E), model dtype

    @pl.when(hd == 0)
    def _init():                                          # residual term, f32 accumulator
        acc_ref[...] = x.astype(jnp.float32)

    q = jnp.dot(x, wq_ref[0], preferred_element_type=jnp.float32)   # (S, D)
    k = jnp.dot(x, wk_ref[0], preferred_element_type=jnp.float32)   # (S, D)
    v = jnp.dot(x, wv_ref[0], preferred_element_type=jnp.float32)   # (S, D)

    # compatibility = norm * Q @ K^T  (contract the D axis directly, no explicit transpose)
    compat = norm * jax.lax.dot_general(
        q, k, (((1,), (1,)), ((), ())), preferred_element_type=jnp.float32)  # (S, S)
    compat = compat - jnp.max(compat, axis=-1, keepdims=True)
    p = jnp.exp(compat)
    attn = p / jnp.sum(p, axis=-1, keepdims=True)

    heads = jnp.dot(attn, v, preferred_element_type=jnp.float32)             # (S, D)
    acc_ref[...] += jnp.dot(heads.astype(wo_ref.dtype), wo_ref[0],
                            preferred_element_type=jnp.float32)              # (S, E)

    @pl.when(hd == pl.num_programs(1) - 1)
    def _store():
        o_ref[0] = acc_ref[...].astype(o_ref.dtype)


def mha_residual(h, wq, wk, wv, wo):
    B, S, E = h.shape
    H, _, D = wq.shape
    norm = 1.0 / math.sqrt(D)
    kernel = functools.partial(_mha_residual_kernel, norm=norm)
    flops = 2 * B * H * (3 * S * E * D + 2 * S * S * D + S * D * E)
    bytes_acc = (2 * B * S * E + H * 4 * E * D) * h.dtype.itemsize
    return pl.pallas_call(
        kernel,
        out_shape=jax.ShapeDtypeStruct((B, S, E), h.dtype),
        grid_spec=pltpu.PrefetchScalarGridSpec(
            num_scalar_prefetch=0,
            grid=(B, H),
            in_specs=[
                pl.BlockSpec((1, S, E), lambda b, hd: (b, 0, 0)),   # h (reused across heads)
                pl.BlockSpec((1, E, D), lambda b, hd: (hd, 0, 0)),  # W_query[head]
                pl.BlockSpec((1, E, D), lambda b, hd: (hd, 0, 0)),  # W_key[head]
                pl.BlockSpec((1, E, D), lambda b, hd: (hd, 0, 0)),  # W_val[head]
                pl.BlockSpec((1, D, E), lambda b, hd: (hd, 0, 0)),  # W_out[head]
            ],
            out_specs=pl.BlockSpec((1, S, E), lambda b, hd: (b, 0, 0)),
            scratch_shapes=[pltpu.VMEM((S, E), jnp.float32)],
        ),
        compiler_params=pltpu.CompilerParams(
            dimension_semantics=("parallel", "arbitrary")),
        cost_estimate=pl.CostEstimate(
            flops=flops, transcendentals=B * H * S * S, bytes_accessed=bytes_acc),
    )(h, wq, wk, wv, wo)


# ----------------------------------------------------------------------------
# Kernel 2: BatchNorm1d batch statistics (training-mode: biased var over all rows)
# ----------------------------------------------------------------------------
def _bn_stats_kernel(x_ref, mean_ref, var_ref, sum_ref, sq_ref, *, m_total):
    i = pl.program_id(0)

    @pl.when(i == 0)
    def _init():
        sum_ref[...] = jnp.zeros_like(sum_ref)
        sq_ref[...] = jnp.zeros_like(sq_ref)

    x = x_ref[...].astype(jnp.float32)
    sum_ref[...] += jnp.sum(x, axis=0, keepdims=True)
    sq_ref[...] += jnp.sum(x * x, axis=0, keepdims=True)

    @pl.when(i == pl.num_programs(0) - 1)
    def _fin():
        inv_m = 1.0 / m_total
        mean = sum_ref[...] * inv_m
        var = sq_ref[...] * inv_m - mean * mean
        mean_ref[...] = mean
        var_ref[...] = jnp.maximum(var, 0.0)


def bn_stats(x2, *, tile_m):
    M, E = x2.shape
    kernel = functools.partial(_bn_stats_kernel, m_total=float(M))
    return pl.pallas_call(
        kernel,
        out_shape=(jax.ShapeDtypeStruct((1, E), jnp.float32),
                   jax.ShapeDtypeStruct((1, E), jnp.float32)),
        grid_spec=pltpu.PrefetchScalarGridSpec(
            num_scalar_prefetch=0,
            grid=(M // tile_m,),
            in_specs=[pl.BlockSpec((tile_m, E), lambda i: (i, 0))],
            out_specs=(pl.BlockSpec((1, E), lambda i: (0, 0)),
                       pl.BlockSpec((1, E), lambda i: (0, 0))),
            scratch_shapes=[pltpu.VMEM((1, E), jnp.float32),
                            pltpu.VMEM((1, E), jnp.float32)],
        ),
        compiler_params=pltpu.CompilerParams(dimension_semantics=("arbitrary",)),
        cost_estimate=pl.CostEstimate(
            flops=3 * M * E, transcendentals=0,
            bytes_accessed=M * E * x2.dtype.itemsize + 2 * E * 4),
    )(x2)


# ----------------------------------------------------------------------------
# Kernel 3: fused BatchNorm-apply + FeedForward (Linear/ReLU/Linear) + residual
#   out = xn + relu(xn @ W1 + b1) @ W2 + b2,   xn = gamma * (x - mean) / sqrt(var+eps) + beta
# ----------------------------------------------------------------------------
def _bn_ff_residual_kernel(x_ref, mean_ref, var_ref, g_ref, beta_ref,
                           w1_ref, b1_ref, w2_ref, b2_ref, o_ref, *, eps):
    x = x_ref[...].astype(jnp.float32)                    # single load reused twice
    inv = jax.lax.rsqrt(var_ref[...] + eps)
    xn = (x - mean_ref[...]) * inv * g_ref[...] + beta_ref[...]
    h1 = jnp.dot(xn.astype(w1_ref.dtype), w1_ref[...],
                 preferred_element_type=jnp.float32) + b1_ref[...].astype(jnp.float32)
    h1 = jnp.maximum(h1, 0.0)
    y = jnp.dot(h1.astype(w2_ref.dtype), w2_ref[...],
                preferred_element_type=jnp.float32) + b2_ref[...].astype(jnp.float32)
    o_ref[...] = (xn + y).astype(o_ref.dtype)


def bn_ff_residual(x2, mean, var, gamma, beta, w1, b1, w2, b2, *, eps, tile_m):
    M, E = x2.shape
    F = w1.shape[1]
    kernel = functools.partial(_bn_ff_residual_kernel, eps=eps)
    return pl.pallas_call(
        kernel,
        out_shape=jax.ShapeDtypeStruct((M, E), x2.dtype),
        grid_spec=pltpu.PrefetchScalarGridSpec(
            num_scalar_prefetch=0,
            grid=(M // tile_m,),
            in_specs=[
                pl.BlockSpec((tile_m, E), lambda i: (i, 0)),
                pl.BlockSpec((1, E), lambda i: (0, 0)),   # mean
                pl.BlockSpec((1, E), lambda i: (0, 0)),   # var
                pl.BlockSpec((1, E), lambda i: (0, 0)),   # gamma
                pl.BlockSpec((1, E), lambda i: (0, 0)),   # beta
                pl.BlockSpec((E, F), lambda i: (0, 0)),   # W1 (resident)
                pl.BlockSpec((1, F), lambda i: (0, 0)),   # b1
                pl.BlockSpec((F, E), lambda i: (0, 0)),   # W2 (resident)
                pl.BlockSpec((1, E), lambda i: (0, 0)),   # b2
            ],
            out_specs=pl.BlockSpec((tile_m, E), lambda i: (i, 0)),
        ),
        compiler_params=pltpu.CompilerParams(dimension_semantics=("parallel",)),
        cost_estimate=pl.CostEstimate(
            flops=4 * M * E * F, transcendentals=0,
            bytes_accessed=(2 * M * E + 2 * E * F) * x2.dtype.itemsize),
    )(x2, mean, var, gamma, beta, w1, b1, w2, b2)


# ----------------------------------------------------------------------------
# Kernel 4: BatchNorm apply only (second Normalization of each layer)
# ----------------------------------------------------------------------------
def _bn_apply_kernel(x_ref, mean_ref, var_ref, g_ref, beta_ref, o_ref, *, eps):
    x = x_ref[...].astype(jnp.float32)
    inv = jax.lax.rsqrt(var_ref[...] + eps)
    o_ref[...] = ((x - mean_ref[...]) * inv * g_ref[...] + beta_ref[...]).astype(o_ref.dtype)


def bn_apply(x2, mean, var, gamma, beta, *, eps, tile_m):
    M, E = x2.shape
    kernel = functools.partial(_bn_apply_kernel, eps=eps)
    return pl.pallas_call(
        kernel,
        out_shape=jax.ShapeDtypeStruct((M, E), x2.dtype),
        grid_spec=pltpu.PrefetchScalarGridSpec(
            num_scalar_prefetch=0,
            grid=(M // tile_m,),
            in_specs=[
                pl.BlockSpec((tile_m, E), lambda i: (i, 0)),
                pl.BlockSpec((1, E), lambda i: (0, 0)),
                pl.BlockSpec((1, E), lambda i: (0, 0)),
                pl.BlockSpec((1, E), lambda i: (0, 0)),
                pl.BlockSpec((1, E), lambda i: (0, 0)),
            ],
            out_specs=pl.BlockSpec((tile_m, E), lambda i: (i, 0)),
        ),
        compiler_params=pltpu.CompilerParams(dimension_semantics=("parallel",)),
        cost_estimate=pl.CostEstimate(
            flops=4 * M * E, transcendentals=0,
            bytes_accessed=2 * M * E * x2.dtype.itemsize),
    )(x2, mean, var, gamma, beta)


# ----------------------------------------------------------------------------
# Kernel 5: init embedding Linear (node_dim -> embed_dim), bias fused
# ----------------------------------------------------------------------------
def _linear_kernel(x_ref, w_ref, b_ref, o_ref):
    y = jnp.dot(x_ref[...], w_ref[...], preferred_element_type=jnp.float32)
    o_ref[...] = (y + b_ref[...].astype(jnp.float32)).astype(o_ref.dtype)


def linear(x2, w, b_row, *, tile_m):
    M, K = x2.shape
    E = w.shape[1]
    return pl.pallas_call(
        _linear_kernel,
        out_shape=jax.ShapeDtypeStruct((M, E), x2.dtype),
        grid_spec=pltpu.PrefetchScalarGridSpec(
            num_scalar_prefetch=0,
            grid=(M // tile_m,),
            in_specs=[
                pl.BlockSpec((tile_m, K), lambda i: (i, 0)),
                pl.BlockSpec((K, E), lambda i: (0, 0)),
                pl.BlockSpec((1, E), lambda i: (0, 0)),
            ],
            out_specs=pl.BlockSpec((tile_m, E), lambda i: (i, 0)),
        ),
        compiler_params=pltpu.CompilerParams(dimension_semantics=("parallel",)),
        cost_estimate=pl.CostEstimate(
            flops=2 * M * K * E, transcendentals=0,
            bytes_accessed=(M * (K + E) + K * E) * x2.dtype.itemsize),
    )(x2, w, b_row)


# ----------------------------------------------------------------------------
# Full encoder forward (wrapper around the Pallas kernels)
# ----------------------------------------------------------------------------
def graph_attention_encoder(x, params, *, eps=1e-5, row_tile=512):
    B, S, node_dim = x.shape
    w_e, b_e = params["init_embed"]
    E = w_e.shape[1]
    M = B * S
    tile_m = _pick_row_tile(M, row_tile)

    # pad node_dim up to a sublane multiple (>=8) for a clean MXU K dim
    k_pad = max(8, ((node_dim + 7) // 8) * 8)
    x2 = jnp.zeros((M, k_pad), x.dtype).at[:, :node_dim].set(x.reshape(M, node_dim))
    w_pad = jnp.zeros((k_pad, E), w_e.dtype).at[:node_dim, :].set(w_e)
    h = linear(x2, w_pad, b_e.reshape(1, E), tile_m=tile_m).reshape(B, S, E)

    for layer in params["layers"]:
        wq, wk, wv, wo = layer["mha"]
        g1, be1 = layer["bn1"]
        w1, bb1, w2, bb2 = layer["ff"]
        g2, be2 = layer["bn2"]

        # sublayer 1: residual MHA, then BN1 stats
        y2 = mha_residual(h, wq, wk, wv, wo).reshape(M, E)
        mean1, var1 = bn_stats(y2, tile_m=tile_m)

        # sublayer 2: fused BN1-apply + FF + residual, then BN2
        z2 = bn_ff_residual(y2, mean1, var1, g1.reshape(1, E), be1.reshape(1, E),
                            w1, bb1.reshape(1, -1), w2, bb2.reshape(1, E),
                            eps=eps, tile_m=tile_m)
        mean2, var2 = bn_stats(z2, tile_m=tile_m)
        h = bn_apply(z2, mean2, var2, g2.reshape(1, E), be2.reshape(1, E),
                     eps=eps, tile_m=tile_m).reshape(B, S, E)
    return h


# ----------------------------------------------------------------------------
# Pure-JAX reference (mirrors the PyTorch module math)
# ----------------------------------------------------------------------------
def ref_encoder(x, params, eps=1e-5):
    B, S, node_dim = x.shape
    w_e, b_e = params["init_embed"]
    E = w_e.shape[1]
    h = (x.reshape(-1, node_dim) @ w_e + b_e).reshape(B, S, E)

    def bn(t, gamma, beta):
        t2 = t.reshape(-1, E)
        mean = t2.mean(axis=0)
        var = ((t2 - mean) ** 2).mean(axis=0)
        return ((t2 - mean) / jnp.sqrt(var + eps) * gamma + beta).reshape(t.shape)

    for layer in params["layers"]:
        wq, wk, wv, wo = layer["mha"]
        H, _, D = wq.shape
        norm = 1.0 / math.sqrt(D)
        q = jnp.einsum("bse,hed->hbsd", h, wq)
        k = jnp.einsum("bse,hed->hbsd", h, wk)
        v = jnp.einsum("bse,hed->hbsd", h, wv)
        compat = norm * jnp.einsum("hbqd,hbkd->hbqk", q, k)
        attn = jax.nn.softmax(compat, axis=-1)
        heads = jnp.einsum("hbqk,hbkd->hbqd", attn, v)          # (H,B,S,D)
        concat = jnp.transpose(heads, (1, 2, 0, 3)).reshape(B, S, H * D)
        y = h + concat @ wo.reshape(H * D, E)

        g1, be1 = layer["bn1"]
        y = bn(y, g1, be1)
        w1, bb1, w2, bb2 = layer["ff"]
        ff = (jnp.maximum(y.reshape(-1, E) @ w1 + bb1, 0.0) @ w2 + bb2).reshape(y.shape)
        z = y + ff
        g2, be2 = layer["bn2"]
        h = bn(z, g2, be2)
    return h


# ----------------------------------------------------------------------------
# Deterministic parameter init (PyTorch-style uniform bounds)
# ----------------------------------------------------------------------------
def init_params(key, *, n_heads, embed_dim, n_layers, node_dim, ff_hidden):
    D = embed_dim // n_heads

    def uni(k, shape, bound):
        return jax.random.uniform(k, shape, minval=-bound, maxval=bound, dtype=jnp.float32)

    keys = jax.random.split(key, 1 + n_layers)
    ke1, ke2 = jax.random.split(keys[0])
    params = {
        "init_embed": (uni(ke1, (node_dim, embed_dim), 1.0 / math.sqrt(node_dim)),
                       uni(ke2, (embed_dim,), 1.0 / math.sqrt(node_dim))),
        "layers": [],
    }
    for li in range(n_layers):
        kl = jax.random.split(keys[1 + li], 8)
        params["layers"].append({
            "mha": (uni(kl[0], (n_heads, embed_dim, D), 1.0 / math.sqrt(D)),
                    uni(kl[1], (n_heads, embed_dim, D), 1.0 / math.sqrt(D)),
                    uni(kl[2], (n_heads, embed_dim, D), 1.0 / math.sqrt(D)),
                    uni(kl[3], (n_heads, D, embed_dim), 1.0 / math.sqrt(embed_dim))),
            "bn1": (jnp.ones((embed_dim,), jnp.float32), jnp.zeros((embed_dim,), jnp.float32)),
            "ff": (uni(kl[4], (embed_dim, ff_hidden), 1.0 / math.sqrt(embed_dim)),
                   uni(kl[5], (ff_hidden,), 1.0 / math.sqrt(embed_dim)),
                   uni(kl[6], (ff_hidden, embed_dim), 1.0 / math.sqrt(ff_hidden)),
                   uni(kl[7], (embed_dim,), 1.0 / math.sqrt(ff_hidden))),
            "bn2": (jnp.ones((embed_dim,), jnp.float32), jnp.zeros((embed_dim,), jnp.float32)),
        })
    return params


if __name__ == "__main__":
    key = jax.random.PRNGKey(0)
    k_x, k_p = jax.random.split(key)

    # small but lane-dense demo shapes (embed_dim / ff_hidden multiples of 128)
    batch, graph_size, node_dim = 2, 32, 2
    n_heads, embed_dim, n_layers, ff_hidden = 8, 128, 2, 512

    x = jax.random.uniform(k_x, (batch, graph_size, node_dim), dtype=jnp.float32)
    params = init_params(k_p, n_heads=n_heads, embed_dim=embed_dim,
                         n_layers=n_layers, node_dim=node_dim, ff_hidden=ff_hidden)

    out = jax.jit(graph_attention_encoder)(x, params)
    jax.block_until_ready(out)

    ref = ref_encoder(x, params)
    err = float(jnp.max(jnp.abs(out - ref)))
    assert out.shape == (batch, graph_size, embed_dim)
    assert err < 2e-2, f"max abs error too large: {err}"

    print("KERNEL_OK")
</pallas_src>

<mosaic_0001>
module attributes {stable_mosaic.version = 11 : i64} {
  func.func @_bn_stats_kernel(%arg0: i32, %arg1: memref<64x128xf32, #tpu.memory_space<vmem>>, %arg2: memref<1x128xf32, #tpu.memory_space<vmem>>, %arg3: memref<1x128xf32, #tpu.memory_space<vmem>>, %arg4: memref<1x128xf32, #tpu.memory_space<vmem>>, %arg5: memref<1x128xf32, #tpu.memory_space<vmem>>) attributes {dimension_semantics = [#tpu.dimension_semantics<arbitrary>], iteration_bounds = array<i64: 1>, scalar_prefetch = 0 : i64, scratch_operands = 2 : i64, tpu.core_type = #tpu.core_type<tc>, window_params = [{transform_indices = @transform_0, window_bounds = array<i64: 64, 128>}, {pipeline_mode = #tpu.pipeline_mode<synchronous>, transform_indices = @transform_1, window_bounds = array<i64: 1, 128>}, {pipeline_mode = #tpu.pipeline_mode<synchronous>, transform_indices = @transform_2, window_bounds = array<i64: 1, 128>}]} {
    %c0_i32 = arith.constant 0 : i32
    %0 = arith.cmpi eq, %arg0, %c0_i32 : i32
    %1 = arith.extui %0 : i1 to i32
    %c0_i32_0 = arith.constant 0 : i32
    %2 = arith.cmpi ne, %1, %c0_i32_0 : i32
    scf.if %2 {
      %cst_13 = arith.constant 0.000000e+00 : f32
      %18 = vector.broadcast %cst_13 : f32 to vector<1x128xf32>
      %c0_14 = arith.constant 0 : index
      %c0_15 = arith.constant 0 : index
      %19 = vector.load %arg4[%c0_14, %c0_15] : memref<1x128xf32, #tpu.memory_space<vmem>>, vector<1x128xf32>
      tpu.vector_store %arg4[%c0_14, %c0_15], %18 {strides = array<i32>} : memref<1x128xf32, #tpu.memory_space<vmem>>, vector<1x128xf32>,
      %cst_16 = arith.constant 0.000000e+00 : f32
      %20 = vector.broadcast %cst_16 : f32 to vector<1x128xf32>
      %c0_17 = arith.constant 0 : index
      %c0_18 = arith.constant 0 : index
      %21 = vector.load %arg5[%c0_17, %c0_18] : memref<1x128xf32, #tpu.memory_space<vmem>>, vector<1x128xf32>
      tpu.vector_store %arg5[%c0_17, %c0_18], %20 {strides = array<i32>} : memref<1x128xf32, #tpu.memory_space<vmem>>, vector<1x128xf32>,
    } else {
    }
    %c0 = arith.constant 0 : index
    %c0_1 = arith.constant 0 : index
    %3 = vector.load %arg1[%c0, %c0_1] : memref<64x128xf32, #tpu.memory_space<vmem>>, vector<64x128xf32>
    %c0_2 = arith.constant 0 : index
    %c0_3 = arith.constant 0 : index
    %4 = vector.load %arg4[%c0_2, %c0_3] : memref<1x128xf32, #tpu.memory_space<vmem>>, vector<1x128xf32>
    %cst = arith.constant dense<0.000000e+00> : vector<128xf32>
    %5 = vector.multi_reduction <add>, %3, %cst [0] : vector<64x128xf32> to vector<128xf32>
    %6 = vector.shape_cast %5 : vector<128xf32> to vector<1x128xf32>
    %7 = arith.addf %4, %6 : vector<1x128xf32>
    %c0_4 = arith.constant 0 : index
    %c0_5 = arith.constant 0 : index
    %8 = vector.load %arg4[%c0_4, %c0_5] : memref<1x128xf32, #tpu.memory_space<vmem>>, vector<1x128xf32>
    tpu.vector_store %arg4[%c0_4, %c0_5], %7 {strides = array<i32>} : memref<1x128xf32, #tpu.memory_space<vmem>>, vector<1x128xf32>,
    %c0_6 = arith.constant 0 : index
    %c0_7 = arith.constant 0 : index
    %9 = vector.load %arg5[%c0_6, %c0_7] : memref<1x128xf32, #tpu.memory_space<vmem>>, vector<1x128xf32>
    %10 = arith.mulf %3, %3 : vector<64x128xf32>
    %cst_8 = arith.constant dense<0.000000e+00> : vector<128xf32>
    %11 = vector.multi_reduction <add>, %10, %cst_8 [0] : vector<64x128xf32> to vector<128xf32>
    %12 = vector.shape_cast %11 : vector<128xf32> to vector<1x128xf32>
    %13 = arith.addf %9, %12 : vector<1x128xf32>
    %c0_9 = arith.constant 0 : index
    %c0_10 = arith.constant 0 : index
    %14 = vector.load %arg5[%c0_9, %c0_10] : memref<1x128xf32, #tpu.memory_space<vmem>>, vector<1x128xf32>
    tpu.vector_store %arg5[%c0_9, %c0_10], %13 {strides = array<i32>} : memref<1x128xf32, #tpu.memory_space<vmem>>, vector<1x128xf32>,
    %c0_i32_11 = arith.constant 0 : i32
    %15 = arith.cmpi eq, %arg0, %c0_i32_11 : i32
    %16 = arith.extui %15 : i1 to i32
    %c0_i32_12 = arith.constant 0 : i32
    %17 = arith.cmpi ne, %16, %c0_i32_12 : i32
    scf.if %17 {
      %c0_13 = arith.constant 0 : index
      %c0_14 = arith.constant 0 : index
      %18 = vector.load %arg4[%c0_13, %c0_14] : memref<1x128xf32, #tpu.memory_space<vmem>>, vector<1x128xf32>
      %cst_15 = arith.constant 1.562500e-02 : f32
      %19 = vector.broadcast %cst_15 : f32 to vector<1x128xf32>
      %20 = arith.mulf %18, %19 : vector<1x128xf32>
      %c0_16 = arith.constant 0 : index
      %c0_17 = arith.constant 0 : index
      %21 = vector.load %arg5[%c0_16, %c0_17] : memref<1x128xf32, #tpu.memory_space<vmem>>, vector<1x128xf32>
      %cst_18 = arith.constant 1.562500e-02 : f32
      %22 = vector.broadcast %cst_18 : f32 to vector<1x128xf32>
      %23 = arith.mulf %21, %22 : vector<1x128xf32>
      %24 = arith.mulf %20, %20 : vector<1x128xf32>
      %25 = arith.subf %23, %24 : vector<1x128xf32>
      %c0_19 = arith.constant 0 : index
      %c0_20 = arith.constant 0 : index
      %26 = vector.load %arg2[%c0_19, %c0_20] : memref<1x128xf32, #tpu.memory_space<vmem>>, vector<1x128xf32>
      tpu.vector_store %arg2[%c0_19, %c0_20], %20 {strides = array<i32>} : memref<1x128xf32, #tpu.memory_space<vmem>>, vector<1x128xf32>,
      %cst_21 = arith.constant 0.000000e+00 : f32
      %27 = vector.broadcast %cst_21 : f32 to vector<1x128xf32>
      %28 = arith.maximumf %25, %27 : vector<1x128xf32>
      %c0_22 = arith.constant 0 : index
      %c0_23 = arith.constant 0 : index
      %29 = vector.load %arg3[%c0_22, %c0_23] : memref<1x128xf32, #tpu.memory_space<vmem>>, vector<1x128xf32>
      tpu.vector_store %arg3[%c0_22, %c0_23], %28 {strides = array<i32>} : memref<1x128xf32, #tpu.memory_space<vmem>>, vector<1x128xf32>,
    } else {
    }
    return
  }
  func.func @transform_0(%arg0: i32) -> (i32, i32) {
    %c0_i32 = arith.constant 0 : i32
    %c0_i32_0 = arith.constant 0 : i32
    return %arg0, %c0_i32 : i32, i32
  }
  func.func @transform_1(%arg0: i32) -> (i32, i32) {
    %c0_i32 = arith.constant 0 : i32
    %c0_i32_0 = arith.constant 0 : i32
    %c0_i32_1 = arith.constant 0 : i32
    return %c0_i32, %c0_i32_0 : i32, i32
  }
  func.func @transform_2(%arg0: i32) -> (i32, i32) {
    %c0_i32 = arith.constant 0 : i32
    %c0_i32_0 = arith.constant 0 : i32
    %c0_i32_1 = arith.constant 0 : i32
    return %c0_i32, %c0_i32_0 : i32, i32
  }
}

module attributes {stable_mosaic.version = 11 : i64} {
  func.func @_mha_residual_kernel(%arg0: i32, %arg1: i32, %arg2: memref<1x32x128xf32, #tpu.memory_space<vmem>>, %arg3: memref<1x128x16xf32, #tpu.memory_space<vmem>>, %arg4: memref<1x128x16xf32, #tpu.memory_space<vmem>>, %arg5: memref<1x128x16xf32, #tpu.memory_space<vmem>>, %arg6: memref<1x16x128xf32, #tpu.memory_space<vmem>>, %arg7: memref<1x32x128xf32, #tpu.memory_space<vmem>>, %arg8: memref<32x128xf32, #tpu.memory_space<vmem>>) attributes {dimension_semantics = [#tpu.dimension_semantics<parallel>, #tpu.dimension_semantics<arbitrary>], iteration_bounds = array<i64: 2, 8>, scalar_prefetch = 0 : i64, scratch_operands = 1 : i64, tpu.core_type = #tpu.core_type<tc>, window_params = [{transform_indices = @transform_0, window_bounds = array<i64: 1, 32, 128>}, {transform_indices = @transform_1, window_bounds = array<i64: 1, 128, 16>}, {transform_indices = @transform_2, window_bounds = array<i64: 1, 128, 16>}, {transform_indices = @transform_3, window_bounds = array<i64: 1, 128, 16>}, {transform_indices = @transform_4, window_bounds = array<i64: 1, 16, 128>}, {transform_indices = @transform_5, window_bounds = array<i64: 1, 32, 128>}]} {
    %c0 = arith.constant 0 : index
    %c0_0 = arith.constant 0 : index
    %c0_1 = arith.constant 0 : index
    %0 = vector.load %arg2[%c0, %c0_0, %c0_1] : memref<1x32x128xf32, #tpu.memory_space<vmem>>, vector<1x32x128xf32>
    %1 = vector.shape_cast %0 : vector<1x32x128xf32> to vector<32x128xf32>
    %c0_i32 = arith.constant 0 : i32
    %2 = arith.cmpi eq, %arg1, %c0_i32 : i32
    %3 = arith.extui %2 : i1 to i32
    %c0_i32_2 = arith.constant 0 : i32
    %4 = arith.cmpi ne, %3, %c0_i32_2 : i32
    scf.if %4 {
      %c0_28 = arith.constant 0 : index
      %c0_29 = arith.constant 0 : index
      %36 = vector.load %arg8[%c0_28, %c0_29] : memref<32x128xf32, #tpu.memory_space<vmem>>, vector<32x128xf32>
      tpu.vector_store %arg8[%c0_28, %c0_29], %1 {strides = array<i32>} : memref<32x128xf32, #tpu.memory_space<vmem>>, vector<32x128xf32>,
    } else {
    }
    %c0_3 = arith.constant 0 : index
    %c0_4 = arith.constant 0 : index
    %c0_5 = arith.constant 0 : index
    %5 = vector.load %arg3[%c0_3, %c0_4, %c0_5] : memref<1x128x16xf32, #tpu.memory_space<vmem>>, vector<1x128x16xf32>
    %6 = vector.shape_cast %5 : vector<1x128x16xf32> to vector<128x16xf32>
    %cst = arith.constant dense<0.000000e+00> : vector<32x16xf32>
    %7 = tpu.matmul %1, %6, %cst {dimension_numbers = #tpu.dot_dimension_numbers<[1], [0], [0], [1], [0, 0, 1, 1], [], []>} : vector<32x128xf32>, vector<128x16xf32>, vector<32x16xf32> -> vector<32x16xf32>
    %c0_6 = arith.constant 0 : index
    %c0_7 = arith.constant 0 : index
    %c0_8 = arith.constant 0 : index
    %8 = vector.load %arg4[%c0_6, %c0_7, %c0_8] : memref<1x128x16xf32, #tpu.memory_space<vmem>>, vector<1x128x16xf32>
    %9 = vector.shape_cast %8 : vector<1x128x16xf32> to vector<128x16xf32>
    %cst_9 = arith.constant dense<0.000000e+00> : vector<32x16xf32>
    %10 = tpu.matmul %1, %9, %cst_9 {dimension_numbers = #tpu.dot_dimension_numbers<[1], [0], [0], [1], [0, 0, 1, 1], [], []>} : vector<32x128xf32>, vector<128x16xf32>, vector<32x16xf32> -> vector<32x16xf32>
    %c0_10 = arith.constant 0 : index
    %c0_11 = arith.constant 0 : index
    %c0_12 = arith.constant 0 : index
    %11 = vector.load %arg5[%c0_10, %c0_11, %c0_12] : memref<1x128x16xf32, #tpu.memory_space<vmem>>, vector<1x128x16xf32>
    %12 = vector.shape_cast %11 : vector<1x128x16xf32> to vector<128x16xf32>
    %cst_13 = arith.constant dense<0.000000e+00> : vector<32x16xf32>
    %13 = tpu.matmul %1, %12, %cst_13 {dimension_numbers = #tpu.dot_dimension_numbers<[1], [0], [0], [1], [0, 0, 1, 1], [], []>} : vector<32x128xf32>, vector<128x16xf32>, vector<32x16xf32> -> vector<32x16xf32>
    %cst_14 = arith.constant dense<0.000000e+00> : vector<32x32xf32>
    %14 = tpu.matmul %7, %10, %cst_14 {dimension_numbers = #tpu.dot_dimension_numbers<[1], [1], [0], [0], [0, 0, 1, 0], [], []>} : vector<32x16xf32>, vector<32x16xf32>, vector<32x32xf32> -> vector<32x32xf32>
    %cst_15 = arith.constant 2.500000e-01 : f32
    %15 = vector.broadcast %cst_15 : f32 to vector<32x32xf32>
    %16 = arith.mulf %15, %14 : vector<32x32xf32>
    %cst_16 = arith.constant dense<0xFF800000> : vector<32xf32>
    %17 = vector.multi_reduction <maximumf>, %16, %cst_16 [1] : vector<32x32xf32> to vector<32xf32>
    %18 = vector.shape_cast %17 : vector<32xf32> to vector<32x1xf32>
    %19 = vector.broadcast %18 : vector<32x1xf32> to vector<32x32xf32>
    %20 = arith.subf %16, %19 : vector<32x32xf32>
    %21 = math.exp %20 : vector<32x32xf32>
    %cst_17 = arith.constant dense<0.000000e+00> : vector<32xf32>
    %22 = vector.multi_reduction <add>, %21, %cst_17 [1] : vector<32x32xf32> to vector<32xf32>
    %23 = vector.shape_cast %22 : vector<32xf32> to vector<32x1xf32>
    %24 = vector.broadcast %23 : vector<32x1xf32> to vector<32x32xf32>
    %25 = arith.divf %21, %24 : vector<32x32xf32>
    %cst_18 = arith.constant dense<0.000000e+00> : vector<32x16xf32>
    %26 = tpu.matmul %25, %13, %cst_18 {dimension_numbers = #tpu.dot_dimension_numbers<[1], [0], [0], [1], [0, 0, 1, 1], [], []>} : vector<32x32xf32>, vector<32x16xf32>, vector<32x16xf32> -> vector<32x16xf32>
    %c0_19 = arith.constant 0 : index
    %c0_20 = arith.constant 0 : index
    %27 = vector.load %arg8[%c0_19, %c0_20] : memref<32x128xf32, #tpu.memory_space<vmem>>, vector<32x128xf32>
    %c0_21 = arith.constant 0 : index
    %c0_22 = arith.constant 0 : index
    %c0_23 = arith.constant 0 : index
    %28 = vector.load %arg6[%c0_21, %c0_22, %c0_23] : memref<1x16x128xf32, #tpu.memory_space<vmem>>, vector<1x16x128xf32>
    %29 = vector.shape_cast %28 : vector<1x16x128xf32> to vector<16x128xf32>
    %cst_24 = arith.constant dense<0.000000e+00> : vector<32x128xf32>
    %30 = tpu.matmul %26, %29, %cst_24 {dimension_numbers = #tpu.dot_dimension_numbers<[1], [0], [0], [1], [0, 0, 1, 1], [], []>} : vector<32x16xf32>, vector<16x128xf32>, vector<32x128xf32> -> vector<32x128xf32>
    %31 = arith.addf %27, %30 : vector<32x128xf32>
    %c0_25 = arith.constant 0 : index
    %c0_26 = arith.constant 0 : index
    %32 = vector.load %arg8[%c0_25, %c0_26] : memref<32x128xf32, #tpu.memory_space<vmem>>, vector<32x128xf32>
    tpu.vector_store %arg8[%c0_25, %c0_26], %31 {strides = array<i32>} : memref<32x128xf32, #tpu.memory_space<vmem>>, vector<32x128xf32>,
    %c7_i32 = arith.constant 7 : i32
    %33 = arith.cmpi eq, %arg1, %c7_i32 : i32
    %34 = arith.extui %33 : i1 to i32
    %c0_i32_27 = arith.constant 0 : i32
    %35 = arith.cmpi ne, %34, %c0_i32_27 : i32
    scf.if %35 {
      %c0_28 = arith.constant 0 : index
      %c0_29 = arith.constant 0 : index
      %36 = vector.load %arg8[%c0_28, %c0_29] : memref<32x128xf32, #tpu.memory_space<vmem>>, vector<32x128xf32>
      %c0_30 = arith.constant 0 : index
      %c0_31 = arith.constant 0 : index
      %c0_32 = arith.constant 0 : index
      %37 = vector.load %arg7[%c0_30, %c0_31, %c0_32] : memref<1x32x128xf32, #tpu.memory_space<vmem>>, vector<1x32x128xf32>
      %38 = vector.shape_cast %37 : vector<1x32x128xf32> to vector<32x128xf32>
      %39 = vector.shape_cast %36 : vector<32x128xf32> to vector<1x32x128xf32>
      tpu.vector_store %arg7[%c0_30, %c0_31, %c0_32], %39 {strides = array<i32>} : memref<1x32x128xf32, #tpu.memory_space<vmem>>, vector<1x32x128xf32>,
    } else {
    }
    return
  }
  func.func @transform_0(%arg0: i32, %arg1: i32) -> (i32, i32, i32) {
    %c0_i32 = arith.constant 0 : i32
    %c0_i32_0 = arith.constant 0 : i32
    %c0_i32_1 = arith.constant 0 : i32
    return %arg0, %c0_i32, %c0_i32_0 : i32, i32, i32
  }
  func.func @transform_1(%arg0: i32, %arg1: i32) -> (i32, i32, i32) {
    %c0_i32 = arith.constant 0 : i32
    %c0_i32_0 = arith.constant 0 : i32
    %c0_i32_1 = arith.constant 0 : i32
    return %arg1, %c0_i32, %c0_i32_0 : i32, i32, i32
  }
  func.func @transform_2(%arg0: i32, %arg1: i32) -> (i32, i32, i32) {
    %c0_i32 = arith.constant 0 : i32
    %c0_i32_0 = arith.constant 0 : i32
    %c0_i32_1 = arith.constant 0 : i32
    return %arg1, %c0_i32, %c0_i32_0 : i32, i32, i32
  }
  func.func @transform_3(%arg0: i32, %arg1: i32) -> (i32, i32, i32) {
    %c0_i32 = arith.constant 0 : i32
    %c0_i32_0 = arith.constant 0 : i32
    %c0_i32_1 = arith.constant 0 : i32
    return %arg1, %c0_i32, %c0_i32_0 : i32, i32, i32
  }
  func.func @transform_4(%arg0: i32, %arg1: i32) -> (i32, i32, i32) {
    %c0_i32 = arith.constant 0 : i32
    %c0_i32_0 = arith.constant 0 : i32
    %c0_i32_1 = arith.constant 0 : i32
    return %arg1, %c0_i32, %c0_i32_0 : i32, i32, i32
  }
  func.func @transform_5(%arg0: i32, %arg1: i32) -> (i32, i32, i32) {
    %c0_i32 = arith.constant 0 : i32
    %c0_i32_0 = arith.constant 0 : i32
    %c0_i32_1 = arith.constant 0 : i32
    return %arg0, %c0_i32, %c0_i32_0 : i32, i32, i32
  }
}

module attributes {stable_mosaic.version = 11 : i64} {
  func.func @_linear_kernel(%arg0: i32, %arg1: memref<64x8xf32, #tpu.memory_space<vmem>>, %arg2: memref<8x128xf32, #tpu.memory_space<vmem>>, %arg3: memref<1x128xf32, #tpu.memory_space<vmem>>, %arg4: memref<64x128xf32, #tpu.memory_space<vmem>>) attributes {dimension_semantics = [#tpu.dimension_semantics<parallel>], iteration_bounds = array<i64: 1>, scalar_prefetch = 0 : i64, scratch_operands = 0 : i64, tpu.core_type = #tpu.core_type<tc>, window_params = [{transform_indices = @transform_0, window_bounds = array<i64: 64, 8>}, {pipeline_mode = #tpu.pipeline_mode<synchronous>, transform_indices = @transform_1, window_bounds = array<i64: 8, 128>}, {pipeline_mode = #tpu.pipeline_mode<synchronous>, transform_indices = @transform_2, window_bounds = array<i64: 1, 128>}, {transform_indices = @transform_3, window_bounds = array<i64: 64, 128>}]} {
    %c0 = arith.constant 0 : index
    %c0_0 = arith.constant 0 : index
    %0 = vector.load %arg1[%c0, %c0_0] : memref<64x8xf32, #tpu.memory_space<vmem>>, vector<64x8xf32>
    %c0_1 = arith.constant 0 : index
    %c0_2 = arith.constant 0 : index
    %1 = vector.load %arg2[%c0_1, %c0_2] : memref<8x128xf32, #tpu.memory_space<vmem>>, vector<8x128xf32>
    %cst = arith.constant dense<0.000000e+00> : vector<64x128xf32>
    %2 = tpu.matmul %0, %1, %cst {dimension_numbers = #tpu.dot_dimension_numbers<[1], [0], [0], [1], [0, 0, 1, 1], [], []>} : vector<64x8xf32>, vector<8x128xf32>, vector<64x128xf32> -> vector<64x128xf32>
    %c0_3 = arith.constant 0 : index
    %c0_4 = arith.constant 0 : index
    %3 = vector.load %arg3[%c0_3, %c0_4] : memref<1x128xf32, #tpu.memory_space<vmem>>, vector<1x128xf32>
    %4 = vector.broadcast %3 : vector<1x128xf32> to vector<64x128xf32>
    %5 = arith.addf %2, %4 : vector<64x128xf32>
    %c0_5 = arith.constant 0 : index
    %c0_6 = arith.constant 0 : index
    %6 = vector.load %arg4[%c0_5, %c0_6] : memref<64x128xf32, #tpu.memory_space<vmem>>, vector<64x128xf32>
    tpu.vector_store %arg4[%c0_5, %c0_6], %5 {strides = array<i32>} : memref<64x128xf32, #tpu.memory_space<vmem>>, vector<64x128xf32>,
    return
  }
  func.func @transform_0(%arg0: i32) -> (i32, i32) {
    %c0_i32 = arith.constant 0 : i32
    %c0_i32_0 = arith.constant 0 : i32
    return %arg0, %c0_i32 : i32, i32
  }
  func.func @transform_1(%arg0: i32) -> (i32, i32) {
    %c0_i32 = arith.constant 0 : i32
    %c0_i32_0 = arith.constant 0 : i32
    %c0_i32_1 = arith.constant 0 : i32
    return %c0_i32, %c0_i32_0 : i32, i32
  }
  func.func @transform_2(%arg0: i32) -> (i32, i32) {
    %c0_i32 = arith.constant 0 : i32
    %c0_i32_0 = arith.constant 0 : i32
    %c0_i32_1 = arith.constant 0 : i32
    return %c0_i32, %c0_i32_0 : i32, i32
  }
  func.func @transform_3(%arg0: i32) -> (i32, i32) {
    %c0_i32 = arith.constant 0 : i32
    %c0_i32_0 = arith.constant 0 : i32
    return %arg0, %c0_i32 : i32, i32
  }
}

module attributes {stable_mosaic.version = 11 : i64} {
  func.func @_bn_ff_residual_kernel(%arg0: i32, %arg1: memref<64x128xf32, #tpu.memory_space<vmem>>, %arg2: memref<1x128xf32, #tpu.memory_space<vmem>>, %arg3: memref<1x128xf32, #tpu.memory_space<vmem>>, %arg4: memref<1x128xf32, #tpu.memory_space<vmem>>, %arg5: memref<1x128xf32, #tpu.memory_space<vmem>>, %arg6: memref<128x512xf32, #tpu.memory_space<vmem>>, %arg7: memref<1x512xf32, #tpu.memory_space<vmem>>, %arg8: memref<512x128xf32, #tpu.memory_space<vmem>>, %arg9: memref<1x128xf32, #tpu.memory_space<vmem>>, %arg10: memref<64x128xf32, #tpu.memory_space<vmem>>) attributes {dimension_semantics = [#tpu.dimension_semantics<parallel>], iteration_bounds = array<i64: 1>, scalar_prefetch = 0 : i64, scratch_operands = 0 : i64, tpu.core_type = #tpu.core_type<tc>, window_params = [{transform_indices = @transform_0, window_bounds = array<i64: 64, 128>}, {pipeline_mode = #tpu.pipeline_mode<synchronous>, transform_indices = @transform_1, window_bounds = array<i64: 1, 128>}, {pipeline_mode = #tpu.pipeline_mode<synchronous>, transform_indices = @transform_2, window_bounds = array<i64: 1, 128>}, {pipeline_mode = #tpu.pipeline_mode<synchronous>, transform_indices = @transform_3, window_bounds = array<i64: 1, 128>}, {pipeline_mode = #tpu.pipeline_mode<synchronous>, transform_indices = @transform_4, window_bounds = array<i64: 1, 128>}, {pipeline_mode = #tpu.pipeline_mode<synchronous>, transform_indices = @transform_5, window_bounds = array<i64: 128, 512>}, {pipeline_mode = #tpu.pipeline_mode<synchronous>, transform_indices = @transform_6, window_bounds = array<i64: 1, 512>}, {pipeline_mode = #tpu.pipeline_mode<synchronous>, transform_indices = @transform_7, window_bounds = array<i64: 512, 128>}, {pipeline_mode = #tpu.pipeline_mode<synchronous>, transform_indices = @transform_8, window_bounds = array<i64: 1, 128>}, {transform_indices = @transform_9, window_bounds = array<i64: 64, 128>}]} {
    %c0 = arith.constant 0 : index
    %c0_0 = arith.constant 0 : index
    %0 = vector.load %arg1[%c0, %c0_0] : memref<64x128xf32, #tpu.memory_space<vmem>>, vector<64x128xf32>
    %c0_1 = arith.constant 0 : index
    %c0_2 = arith.constant 0 : index
    %1 = vector.load %arg3[%c0_1, %c0_2] : memref<1x128xf32, #tpu.memory_space<vmem>>, vector<1x128xf32>
    %cst = arith.constant 9.99999974E-6 : f32
    %2 = vector.broadcast %cst : f32 to vector<1x128xf32>
    %3 = arith.addf %1, %2 : vector<1x128xf32>
    %4 = math.rsqrt %3 : vector<1x128xf32>
    %c0_3 = arith.constant 0 : index
    %c0_4 = arith.constant 0 : index
    %5 = vector.load %arg2[%c0_3, %c0_4] : memref<1x128xf32, #tpu.memory_space<vmem>>, vector<1x128xf32>
    %6 = vector.broadcast %5 : vector<1x128xf32> to vector<64x128xf32>
    %7 = arith.subf %0, %6 : vector<64x128xf32>
    %8 = vector.broadcast %4 : vector<1x128xf32> to vector<64x128xf32>
    %9 = arith.mulf %7, %8 : vector<64x128xf32>
    %c0_5 = arith.constant 0 : index
    %c0_6 = arith.constant 0 : index
    %10 = vector.load %arg4[%c0_5, %c0_6] : memref<1x128xf32, #tpu.memory_space<vmem>>, vector<1x128xf32>
    %11 = vector.broadcast %10 : vector<1x128xf32> to vector<64x128xf32>
    %12 = arith.mulf %9, %11 : vector<64x128xf32>
    %c0_7 = arith.constant 0 : index
    %c0_8 = arith.constant 0 : index
    %13 = vector.load %arg5[%c0_7, %c0_8] : memref<1x128xf32, #tpu.memory_space<vmem>>, vector<1x128xf32>
    %14 = vector.broadcast %13 : vector<1x128xf32> to vector<64x128xf32>
    %15 = arith.addf %12, %14 : vector<64x128xf32>
    %c0_9 = arith.constant 0 : index
    %c0_10 = arith.constant 0 : index
    %16 = vector.load %arg6[%c0_9, %c0_10] : memref<128x512xf32, #tpu.memory_space<vmem>>, vector<128x512xf32>
    %cst_11 = arith.constant dense<0.000000e+00> : vector<64x512xf32>
    %17 = tpu.matmul %15, %16, %cst_11 {dimension_numbers = #tpu.dot_dimension_numbers<[1], [0], [0], [1], [0, 0, 1, 1], [], []>} : vector<64x128xf32>, vector<128x512xf32>, vector<64x512xf32> -> vector<64x512xf32>
    %c0_12 = arith.constant 0 : index
    %c0_13 = arith.constant 0 : index
    %18 = vector.load %arg7[%c0_12, %c0_13] : memref<1x512xf32, #tpu.memory_space<vmem>>, vector<1x512xf32>
    %19 = vector.broadcast %18 : vector<1x512xf32> to vector<64x512xf32>
    %20 = arith.addf %17, %19 : vector<64x512xf32>
    %cst_14 = arith.constant 0.000000e+00 : f32
    %21 = vector.broadcast %cst_14 : f32 to vector<64x512xf32>
    %22 = arith.maximumf %20, %21 : vector<64x512xf32>
    %c0_15 = arith.constant 0 : index
    %c0_16 = arith.constant 0 : index
    %23 = vector.load %arg8[%c0_15, %c0_16] : memref<512x128xf32, #tpu.memory_space<vmem>>, vector<512x128xf32>
    %cst_17 = arith.constant dense<0.000000e+00> : vector<64x128xf32>
    %24 = tpu.matmul %22, %23, %cst_17 {dimension_numbers = #tpu.dot_dimension_numbers<[1], [0], [0], [1], [0, 0, 1, 1], [], []>} : vector<64x512xf32>, vector<512x128xf32>, vector<64x128xf32> -> vector<64x128xf32>
    %c0_18 = arith.constant 0 : index
    %c0_19 = arith.constant 0 : index
    %25 = vector.load %arg9[%c0_18, %c0_19] : memref<1x128xf32, #tpu.memory_space<vmem>>, vector<1x128xf32>
    %26 = vector.broadcast %25 : vector<1x128xf32> to vector<64x128xf32>
    %27 = arith.addf %24, %26 : vector<64x128xf32>
    %28 = arith.addf %15, %27 : vector<64x128xf32>
    %c0_20 = arith.constant 0 : index
    %c0_21 = arith.constant 0 : index
    %29 = vector.load %arg10[%c0_20, %c0_21] : memref<64x128xf32, #tpu.memory_space<vmem>>, vector<64x128xf32>
    tpu.vector_store %arg10[%c0_20, %c0_21], %28 {strides = array<i32>} : memref<64x128xf32, #tpu.memory_space<vmem>>, vector<64x128xf32>,
    return
  }
  func.func @transform_0(%arg0: i32) -> (i32, i32) {
    %c0_i32 = arith.constant 0 : i32
    %c0_i32_0 = arith.constant 0 : i32
    return %arg0, %c0_i32 : i32, i32
  }
  func.func @transform_1(%arg0: i32) -> (i32, i32) {
    %c0_i32 = arith.constant 0 : i32
    %c0_i32_0 = arith.constant 0 : i32
    %c0_i32_1 = arith.constant 0 : i32
    return %c0_i32, %c0_i32_0 : i32, i32
  }
  func.func @transform_2(%arg0: i32) -> (i32, i32) {
    %c0_i32 = arith.constant 0 : i32
    %c0_i32_0 = arith.constant 0 : i32
    %c0_i32_1 = arith.constant 0 : i32
    return %c0_i32, %c0_i32_0 : i32, i32
  }
  func.func @transform_3(%arg0: i32) -> (i32, i32) {
    %c0_i32 = arith.constant 0 : i32
    %c0_i32_0 = arith.constant 0 : i32
    %c0_i32_1 = arith.constant 0 : i32
    return %c0_i32, %c0_i32_0 : i32, i32
  }
  func.func @transform_4(%arg0: i32) -> (i32, i32) {
    %c0_i32 = arith.constant 0 : i32
    %c0_i32_0 = arith.constant 0 : i32
    %c0_i32_1 = arith.constant 0 : i32
    return %c0_i32, %c0_i32_0 : i32, i32
  }
  func.func @transform_5(%arg0: i32) -> (i32, i32) {
    %c0_i32 = arith.constant 0 : i32
    %c0_i32_0 = arith.constant 0 : i32
    %c0_i32_1 = arith.constant 0 : i32
    return %c0_i32, %c0_i32_0 : i32, i32
  }
  func.func @transform_6(%arg0: i32) -> (i32, i32) {
    %c0_i32 = arith.constant 0 : i32
    %c0_i32_0 = arith.constant 0 : i32
    %c0_i32_1 = arith.constant 0 : i32
    return %c0_i32, %c0_i32_0 : i32, i32
  }
  func.func @transform_7(%arg0: i32) -> (i32, i32) {
    %c0_i32 = arith.constant 0 : i32
    %c0_i32_0 = arith.constant 0 : i32
    %c0_i32_1 = arith.constant 0 : i32
    return %c0_i32, %c0_i32_0 : i32, i32
  }
  func.func @transform_8(%arg0: i32) -> (i32, i32) {
    %c0_i32 = arith.constant 0 : i32
    %c0_i32_0 = arith.constant 0 : i32
    %c0_i32_1 = arith.constant 0 : i32
    return %c0_i32, %c0_i32_0 : i32, i32
  }
  func.func @transform_9(%arg0: i32) -> (i32, i32) {
    %c0_i32 = arith.constant 0 : i32
    %c0_i32_0 = arith.constant 0 : i32
    return %arg0, %c0_i32 : i32, i32
  }
}

module attributes {stable_mosaic.version = 11 : i64} {
  func.func @_bn_apply_kernel(%arg0: i32, %arg1: memref<64x128xf32, #tpu.memory_space<vmem>>, %arg2: memref<1x128xf32, #tpu.memory_space<vmem>>, %arg3: memref<1x128xf32, #tpu.memory_space<vmem>>, %arg4: memref<1x128xf32, #tpu.memory_space<vmem>>, %arg5: memref<1x128xf32, #tpu.memory_space<vmem>>, %arg6: memref<64x128xf32, #tpu.memory_space<vmem>>) attributes {dimension_semantics = [#tpu.dimension_semantics<parallel>], iteration_bounds = array<i64: 1>, scalar_prefetch = 0 : i64, scratch_operands = 0 : i64, tpu.core_type = #tpu.core_type<tc>, window_params = [{transform_indices = @transform_0, window_bounds = array<i64: 64, 128>}, {pipeline_mode = #tpu.pipeline_mode<synchronous>, transform_indices = @transform_1, window_bounds = array<i64: 1, 128>}, {pipeline_mode = #tpu.pipeline_mode<synchronous>, transform_indices = @transform_2, window_bounds = array<i64: 1, 128>}, {pipeline_mode = #tpu.pipeline_mode<synchronous>, transform_indices = @transform_3, window_bounds = array<i64: 1, 128>}, {pipeline_mode = #tpu.pipeline_mode<synchronous>, transform_indices = @transform_4, window_bounds = array<i64: 1, 128>}, {transform_indices = @transform_5, window_bounds = array<i64: 64, 128>}]} {
    %c0 = arith.constant 0 : index
    %c0_0 = arith.constant 0 : index
    %0 = vector.load %arg1[%c0, %c0_0] : memref<64x128xf32, #tpu.memory_space<vmem>>, vector<64x128xf32>
    %c0_1 = arith.constant 0 : index
    %c0_2 = arith.constant 0 : index
    %1 = vector.load %arg3[%c0_1, %c0_2] : memref<1x128xf32, #tpu.memory_space<vmem>>, vector<1x128xf32>
    %cst = arith.constant 9.99999974E-6 : f32
    %2 = vector.broadcast %cst : f32 to vector<1x128xf32>
    %3 = arith.addf %1, %2 : vector<1x128xf32>
    %4 = math.rsqrt %3 : vector<1x128xf32>
    %c0_3 = arith.constant 0 : index
    %c0_4 = arith.constant 0 : index
    %5 = vector.load %arg2[%c0_3, %c0_4] : memref<1x128xf32, #tpu.memory_space<vmem>>, vector<1x128xf32>
    %6 = vector.broadcast %5 : vector<1x128xf32> to vector<64x128xf32>
    %7 = arith.subf %0, %6 : vector<64x128xf32>
    %8 = vector.broadcast %4 : vector<1x128xf32> to vector<64x128xf32>
    %9 = arith.mulf %7, %8 : vector<64x128xf32>
    %c0_5 = arith.constant 0 : index
    %c0_6 = arith.constant 0 : index
    %10 = vector.load %arg4[%c0_5, %c0_6] : memref<1x128xf32, #tpu.memory_space<vmem>>, vector<1x128xf32>
    %11 = vector.broadcast %10 : vector<1x128xf32> to vector<64x128xf32>
    %12 = arith.mulf %9, %11 : vector<64x128xf32>
    %c0_7 = arith.constant 0 : index
    %c0_8 = arith.constant 0 : index
    %13 = vector.load %arg5[%c0_7, %c0_8] : memref<1x128xf32, #tpu.memory_space<vmem>>, vector<1x128xf32>
    %14 = vector.broadcast %13 : vector<1x128xf32> to vector<64x128xf32>
    %15 = arith.addf %12, %14 : vector<64x128xf32>
    %c0_9 = arith.constant 0 : index
    %c0_10 = arith.constant 0 : index
    %16 = vector.load %arg6[%c0_9, %c0_10] : memref<64x128xf32, #tpu.memory_space<vmem>>, vector<64x128xf32>
    tpu.vector_store %arg6[%c0_9, %c0_10], %15 {strides = array<i32>} : memref<64x128xf32, #tpu.memory_space<vmem>>, vector<64x128xf32>,
    return
  }
  func.func @transform_0(%arg0: i32) -> (i32, i32) {
    %c0_i32 = arith.constant 0 : i32
    %c0_i32_0 = arith.constant 0 : i32
    return %arg0, %c0_i32 : i32, i32
  }
  func.func @transform_1(%arg0: i32) -> (i32, i32) {
    %c0_i32 = arith.constant 0 : i32
    %c0_i32_0 = arith.constant 0 : i32
    %c0_i32_1 = arith.constant 0 : i32
    return %c0_i32, %c0_i32_0 : i32, i32
  }
  func.func @transform_2(%arg0: i32) -> (i32, i32) {
    %c0_i32 = arith.constant 0 : i32
    %c0_i32_0 = arith.constant 0 : i32
    %c0_i32_1 = arith.constant 0 : i32
    return %c0_i32, %c0_i32_0 : i32, i32
  }
  func.func @transform_3(%arg0: i32) -> (i32, i32) {
    %c0_i32 = arith.constant 0 : i32
    %c0_i32_0 = arith.constant 0 : i32
    %c0_i32_1 = arith.constant 0 : i32
    return %c0_i32, %c0_i32_0 : i32, i32
  }
  func.func @transform_4(%arg0: i32) -> (i32, i32) {
    %c0_i32 = arith.constant 0 : i32
    %c0_i32_0 = arith.constant 0 : i32
    %c0_i32_1 = arith.constant 0 : i32
    return %c0_i32, %c0_i32_0 : i32, i32
  }
  func.func @transform_5(%arg0: i32) -> (i32, i32) {
    %c0_i32 = arith.constant 0 : i32
    %c0_i32_0 = arith.constant 0 : i32
    return %arg0, %c0_i32 : i32, i32
  }
}

module attributes {stable_mosaic.version = 11 : i64} {
  func.func @_bn_apply_kernel(%arg0: i32, %arg1: memref<64x128xf32, #tpu.memory_space<vmem>>, %arg2: memref<1x128xf32, #tpu.memory_space<vmem>>, %arg3: memref<1x128xf32, #tpu.memory_space<vmem>>, %arg4: memref<1x128xf32, #tpu.memory_space<vmem>>, %arg5: memref<1x128xf32, #tpu.memory_space<vmem>>, %arg6: memref<64x128xf32, #tpu.memory_space<vmem>>) attributes {dimension_semantics = [#tpu.dimension_semantics<parallel>], iteration_bounds = array<i64: 1>, scalar_prefetch = 0 : i64, scratch_operands = 0 : i64, tpu.core_type = #tpu.core_type<tc>, window_params = [{transform_indices = @transform_0, window_bounds = array<i64: 64, 128>}, {pipeline_mode = #tpu.pipeline_mode<synchronous>, transform_indices = @transform_1, window_bounds = array<i64: 1, 128>}, {pipeline_mode = #tpu.pipeline_mode<synchronous>, transform_indices = @transform_2, window_bounds = array<i64: 1, 128>}, {pipeline_mode = #tpu.pipeline_mode<synchronous>, transform_indices = @transform_3, window_bounds = array<i64: 1, 128>}, {pipeline_mode = #tpu.pipeline_mode<synchronous>, transform_indices = @transform_4, window_bounds = array<i64: 1, 128>}, {transform_indices = @transform_5, window_bounds = array<i64: 64, 128>}]} {
    %c0 = arith.constant 0 : index
    %c0_0 = arith.constant 0 : index
    %0 = vector.load %arg1[%c0, %c0_0] : memref<64x128xf32, #tpu.memory_space<vmem>>, vector<64x128xf32>
    %c0_1 = arith.constant 0 : index
    %c0_2 = arith.constant 0 : index
    %1 = vector.load %arg3[%c0_1, %c0_2] : memref<1x128xf32, #tpu.memory_space<vmem>>, vector<1x128xf32>
    %cst = arith.constant 9.99999974E-6 : f32
    %2 = vector.broadcast %cst : f32 to vector<1x128xf32>
    %3 = arith.addf %1, %2 : vector<1x128xf32>
    %4 = math.rsqrt %3 : vector<1x128xf32>
    %c0_3 = arith.constant 0 : index
    %c0_4 = arith.constant 0 : index
    %5 = vector.load %arg2[%c0_3, %c0_4] : memref<1x128xf32, #tpu.memory_space<vmem>>, vector<1x128xf32>
    %6 = vector.broadcast %5 : vector<1x128xf32> to vector<64x128xf32>
    %7 = arith.subf %0, %6 : vector<64x128xf32>
    %8 = vector.broadcast %4 : vector<1x128xf32> to vector<64x128xf32>
    %9 = arith.mulf %7, %8 : vector<64x128xf32>
    %c0_5 = arith.constant 0 : index
    %c0_6 = arith.constant 0 : index
    %10 = vector.load %arg4[%c0_5, %c0_6] : memref<1x128xf32, #tpu.memory_space<vmem>>, vector<1x128xf32>
    %11 = vector.broadcast %10 : vector<1x128xf32> to vector<64x128xf32>
    %12 = arith.mulf %9, %11 : vector<64x128xf32>
    %c0_7 = arith.constant 0 : index
    %c0_8 = arith.constant 0 : index
    %13 = vector.load %arg5[%c0_7, %c0_8] : memref<1x128xf32, #tpu.memory_space<vmem>>, vector<1x128xf32>
    %14 = vector.broadcast %13 : vector<1x128xf32> to vector<64x128xf32>
    %15 = arith.addf %12, %14 : vector<64x128xf32>
    %c0_9 = arith.constant 0 : index
    %c0_10 = arith.constant 0 : index
    %16 = vector.load %arg6[%c0_9, %c0_10] : memref<64x128xf32, #tpu.memory_space<vmem>>, vector<64x128xf32>
    tpu.vector_store %arg6[%c0_9, %c0_10], %15 {strides = array<i32>} : memref<64x128xf32, #tpu.memory_space<vmem>>, vector<64x128xf32>,
    return
  }
  func.func @transform_0(%arg0: i32) -> (i32, i32) {
    %c0_i32 = arith.constant 0 : i32
    %c0_i32_0 = arith.constant 0 : i32
    return %arg0, %c0_i32 : i32, i32
  }
  func.func @transform_1(%arg0: i32) -> (i32, i32) {
    %c0_i32 = arith.constant 0 : i32
    %c0_i32_0 = arith.constant 0 : i32
    %c0_i32_1 = arith.constant 0 : i32
    return %c0_i32, %c0_i32_0 : i32, i32
  }
  func.func @transform_2(%arg0: i32) -> (i32, i32) {
    %c0_i32 = arith.constant 0 : i32
    %c0_i32_0 = arith.constant 0 : i32
    %c0_i32_1 = arith.constant 0 : i32
    return %c0_i32, %c0_i32_0 : i32, i32
  }
  func.func @transform_3(%arg0: i32) -> (i32, i32) {
    %c0_i32 = arith.constant 0 : i32
    %c0_i32_0 = arith.constant 0 : i32
    %c0_i32_1 = arith.constant 0 : i32
    return %c0_i32, %c0_i32_0 : i32, i32
  }
  func.func @transform_4(%arg0: i32) -> (i32, i32) {
    %c0_i32 = arith.constant 0 : i32
    %c0_i32_0 = arith.constant 0 : i32
    %c0_i32_1 = arith.constant 0 : i32
    return %c0_i32, %c0_i32_0 : i32, i32
  }
  func.func @transform_5(%arg0: i32) -> (i32, i32) {
    %c0_i32 = arith.constant 0 : i32
    %c0_i32_0 = arith.constant 0 : i32
    return %arg0, %c0_i32 : i32, i32
  }
}

</mosaic_0001>

<llo_original>
// kernel: graph_attention_encoder.13
$region0: #{graph_attention_encoder.13}
  #allocation0 [shape = 'u32[]', space=smem, size = 0x4, offset = 0x4, fixed_abs, tag = 'smem constant byte address 0x4 - core index']
  #allocation1 [shape = 'u32[144,128]{1,0:T(1,128)}', space=vmem, size = 0x12000, scoped, tag = 'internal scratch']
  #allocation2 [shape = 'f32[1,128]{1,0:T(1,128)}', space=vmem, size = 0x200, scoped, tag = 'scratch operand']
  #allocation3 [shape = 'f32[1,128]{1,0:T(1,128)}', space=vmem, size = 0x200, scoped, tag = 'scratch operand']
  %s0 = inlined_call_operand.vmem [shape: f32[64,128], index: 0, kind: input, shape index: {}]
  %s1 = inlined_call_operand.vmem [shape: f32[1,128], index: 1, kind: output, shape index: {0}]
  %s2 = inlined_call_operand.vmem [shape: f32[1,128], index: 2, kind: output, shape index: {1}]
  %3 = xla_tuple %s1, %s2
  %s4 = sld [smem:[#allocation0]]
  $region30: #{graph_attention_encoder.13} parent=0
    _
  %s6 = ssub.s32 1, %s4
  %s7 = scalar_select 0, %s6, %s4
  // Predicated region
  $region2: #{graph_attention_encoder.13} parent=0 // pred_check
    _
  $region3: #{graph_attention_encoder.13} parent=0 // pred_check_branch
    %9 = sbr.rel (0) target = $region5
  $region4: #{graph_attention_encoder.13} parent=0 // pred_region
    _
  $region5: #{graph_attention_encoder.13} parent=0 // pred_fallthru
    _
  %p10 = scmp.eq.s32.totalorder 0, 0
  // Predicated region
  $region6: #{graph_attention_encoder.13} parent=0 // pred_check
    %p11 = pneg %p10
  $region7: #{graph_attention_encoder.13} parent=0 // pred_check_branch
    %13 = sbr.rel (%p11) target = $region9
  $region8: #{graph_attention_encoder.13} parent=0 // pred_region
    %14 = vst [vmem:[#allocation2] sm:$0x1] 0.0
    %15 = vst [vmem:[#allocation3] sm:$0x1] 0.0
  $region9: #{graph_attention_encoder.13} parent=0 // pred_fallthru
    _
  %v16 = vld [vmem:[%s0] sm:$0xff]
  %v17 = vld [vmem:[%s0 + $0x8] sm:$0xff]
  %v18 = vld [vmem:[%s0 + $0x10] sm:$0xff]
  %v19 = vld [vmem:[%s0 + $0x18] sm:$0xff]
  %v20 = vld [vmem:[%s0 + $0x20] sm:$0xff]
  %v21 = vld [vmem:[%s0 + $0x28] sm:$0xff]
  %v22 = vld [vmem:[%s0 + $0x30] sm:$0xff]
  %v23 = vld [vmem:[%s0 + $0x38] sm:$0xff]
  %v24 = vld [vmem:[#allocation2] sm:$0x1]
  %v25 = vadd.f32 %v16, %v17
  %v26 = vadd.f32 %v25, %v18
  %v27 = vadd.f32 %v26, %v19
  %v28 = vadd.f32 %v27, %v20
  %v29 = vadd.f32 %v28, %v21
  %v30 = vadd.f32 %v29, %v22
  %v31 = vadd.f32 %v30, %v23
  %v32 = vrot.slane %v31, 4
  %v33 = vadd.f32 %v31, %v32
  %v34 = vrot.slane %v33, 2
  %v35 = vadd.f32 %v33, %v34
  %v36 = vrot.slane %v35, 1
  %v37 = vadd.f32 %v35, %v36
  %v38 = vadd.f32 %v24, %v37
  %39 = vst [vmem:[#allocation2] sm:$0x1] %v38
  %v40 = vld [vmem:[#allocation3] sm:$0x1]
  %v41 = vmul.f32 %v16, %v16
  %v42 = vmul.f32 %v17, %v17
  %v43 = vmul.f32 %v18, %v18
  %v44 = vmul.f32 %v19, %v19
  %v45 = vmul.f32 %v20, %v20
  %v46 = vmul.f32 %v21, %v21
  %v47 = vmul.f32 %v22, %v22
  %v48 = vmul.f32 %v23, %v23
  %v49 = vadd.f32 %v41, %v42
  %v50 = vadd.f32 %v49, %v43
  %v51 = vadd.f32 %v50, %v44
  %v52 = vadd.f32 %v51, %v45
  %v53 = vadd.f32 %v52, %v46
  %v54 = vadd.f32 %v53, %v47
  %v55 = vadd.f32 %v54, %v48
  %v56 = vrot.slane %v55, 4
  %v57 = vadd.f32 %v55, %v56
  %v58 = vrot.slane %v57, 2
  %v59 = vadd.f32 %v57, %v58
  %v60 = vrot.slane %v59, 1
  %v61 = vadd.f32 %v59, %v60
  %v62 = vadd.f32 %v40, %v61
  %63 = vst [vmem:[#allocation3] sm:$0x1] %v62
  // Predicated region
  $region10: #{graph_attention_encoder.13} parent=0 // pred_check
    %p64 = pneg %p10
  $region11: #{graph_attention_encoder.13} parent=0 // pred_check_branch
    %66 = sbr.rel (%p64) target = $region13
  $region12: #{graph_attention_encoder.13} parent=0 // pred_region
    %v67 = vld [vmem:[#allocation2] sm:$0x1]
    %v68 = vmul.f32 %v67, 0.015625
    %v69 = vld [vmem:[#allocation3] sm:$0x1]
    %v70 = vmul.f32 %v69, 0.015625
    %v71 = vmul.f32 %v68, %v68
    %v72 = vsub.f32 %v70, %v71
    %73 = vst [vmem:[%s1] sm:$0x1] %v68
    %v74 = vmax.f32 %v72, 0.0
    %75 = vst [vmem:[%s2] sm:$0x1] %v74
  $region13: #{graph_attention_encoder.13} parent=0 // pred_fallthru
    _
  // Predicated region
  $region14: #{graph_attention_encoder.13} parent=0 // pred_check
    _
  $region15: #{graph_attention_encoder.13} parent=0 // pred_check_branch
    %77 = sbr.rel (0) target = $region17
  $region16: #{graph_attention_encoder.13} parent=0 // pred_region
    _
  $region17: #{graph_attention_encoder.13} parent=0 // pred_fallthru
    _
  // Predicated region
  $region18: #{graph_attention_encoder.13} parent=0 // pred_check
    _
  $region19: #{graph_attention_encoder.13} parent=0 // pred_check_branch
    %79 = sbr.rel (0) target = $region21
  $region20: #{graph_attention_encoder.13} parent=0 // pred_region
    _
  $region21: #{graph_attention_encoder.13} parent=0 // pred_fallthru
    _
  // Predicated region
  $region22: #{graph_attention_encoder.13} parent=0 // pred_check
    _
  $region23: #{graph_attention_encoder.13} parent=0 // pred_check_branch
    %81 = sbr.rel (0) target = $region25
  $region24: #{graph_attention_encoder.13} parent=0 // pred_region
    _
  $region25: #{graph_attention_encoder.13} parent=0 // pred_fallthru
    _
  // Predicated region
  $region26: #{graph_attention_encoder.13} parent=0 // pred_check
    _
  $region27: #{graph_attention_encoder.13} parent=0 // pred_check_branch
    %83 = sbr.rel (0) target = $region29
  $region28: #{graph_attention_encoder.13} parent=0 // pred_region
    _
  $region29: #{graph_attention_encoder.13} parent=0 // pred_fallthru
    _

// kernel: graph_attention_encoder.11
$region0: #{graph_attention_encoder.11}
  #allocation0 [shape = 'u32[]', space=smem, size = 0x4, offset = 0x4, fixed_abs, tag = 'smem constant byte address 0x4 - core index']
  #allocation1 [shape = 'u32[144,128]{1,0:T(1,128)}', space=vmem, size = 0x12000, scoped, tag = 'internal scratch']
  %s0 = inlined_call_operand.vmem [shape: f32[64,8], index: 0, kind: input, shape index: {}]
  %s1 = inlined_call_operand.vmem [shape: f32[8,128], index: 1, kind: input, shape index: {}]
  %s2 = inlined_call_operand.vmem [shape: f32[1,128], index: 2, kind: input, shape index: {}]
  %s3 = inlined_call_operand.vmem [shape: f32[64,128], index: 3, kind: output, shape index: {}]
  %s4 = sld [smem:[#allocation0]]
  $region22: #{graph_attention_encoder.11} parent=0
    _
  %s6 = ssub.s32 1, %s4
  %s7 = scalar_select 0, %s6, %s4
  // Predicated region
  $region2: #{graph_attention_encoder.11} parent=0 // pred_check
    _
  $region3: #{graph_attention_encoder.11} parent=0 // pred_check_branch
    %9 = sbr.rel (0) target = $region5
  $region4: #{graph_attention_encoder.11} parent=0 // pred_region
    _
  $region5: #{graph_attention_encoder.11} parent=0 // pred_fallthru
    _
  // Predicated region
  $region6: #{graph_attention_encoder.11} parent=0 // pred_check
    _
  $region7: #{graph_attention_encoder.11} parent=0 // pred_check_branch
    %11 = sbr.rel (0) target = $region9
  $region8: #{graph_attention_encoder.11} parent=0 // pred_region
    _
  $region9: #{graph_attention_encoder.11} parent=0 // pred_fallthru
    _
  // Predicated region
  $region10: #{graph_attention_encoder.11} parent=0 // pred_check
    _
  $region11: #{graph_attention_encoder.11} parent=0 // pred_check_branch
    %13 = sbr.rel (0) target = $region13
  $region12: #{graph_attention_encoder.11} parent=0 // pred_region
    _
  $region13: #{graph_attention_encoder.11} parent=0 // pred_fallthru
    _
  %v14 = vld [vmem:[%s0] sm:$0xff]
  %v15 = vld [vmem:[%s0 + $0x8] sm:$0xff]
  %v16 = vld [vmem:[%s0 + $0x10] sm:$0xff]
  %v17 = vld [vmem:[%s0 + $0x18] sm:$0xff]
  %v18 = vld [vmem:[%s0 + $0x20] sm:$0xff]
  %v19 = vld [vmem:[%s0 + $0x28] sm:$0xff]
  %v20 = vld [vmem:[%s0 + $0x30] sm:$0xff]
  %v21 = vld [vmem:[%s0 + $0x38] sm:$0xff]
  %v22 = vld [vmem:[%s1] sm:$0xff]
  %v23 = vld [vmem:[%s2] sm:$0x1]
  %v25 = vlaneseq
  %v26 = vshrl.u32 %v25, 7
  %v27 = vsub.s32 0, %v26
  %v28 = vrot.slane %v23, %v27
  %vm30 = vcmask 64512
  %v32 = vsel %vm30, %v14, 0
  %v35 = vsel %vm30, %v15, 0
  %v38 = vsel %vm30, %v16, 0
  %v41 = vsel %vm30, %v17, 0
  %v44 = vsel %vm30, %v18, 0
  %v47 = vsel %vm30, %v19, 0
  %v50 = vsel %vm30, %v20, 0
  %v53 = vsel %vm30, %v21, 0
  %55 = vmatprep.subr.mxu0 0.0
  %56 = vmatpush1.msra.mxu0 0.0
  %57 = vmatprep.subr.mxu0 0.0
  %58 = vmatpush1.msra.mxu0 0.0
  %59 = vmatprep.subr.mxu0 0.0
  %60 = vmatpush1.msra.mxu0 0.0
  %61 = vmatprep.subr.mxu0 0.0
  %62 = vmatpush1.msra.mxu0 0.0
  %63 = vmatprep.subr.mxu0 0.0
  %64 = vmatpush1.msra.mxu0 0.0
  %65 = vmatprep.subr.mxu0 0.0
  %66 = vmatpush1.msra.mxu0 0.0
  %67 = vmatprep.subr.mxu0 0.0
  %68 = vmatpush1.msra.mxu0 0.0
  %69 = vmatprep.subr.mxu0 0.0
  %70 = vmatpush1.msra.mxu0 0.0
  %71 = vmatprep.subr.mxu0 0.0
  %72 = vmatpush1.msra.mxu0 0.0
  %73 = vmatprep.subr.mxu0 0.0
  %74 = vmatpush1.msra.mxu0 0.0
  %75 = vmatprep.subr.mxu0 0.0
  %76 = vmatpush1.msra.mxu0 0.0
  %77 = vmatprep.subr.mxu0 0.0
  %78 = vmatpush1.msra.mxu0 0.0
  %79 = vmatprep.subr.mxu0 0.0
  %80 = vmatpush1.msra.mxu0 0.0
  %81 = vmatprep.subr.mxu0 0.0
  %82 = vmatpush1.msra.mxu0 0.0
  %83 = vmatprep.subr.mxu0 0.0
  %84 = vmatpush1.msra.mxu0 0.0
  %85 = vmatprep.subr.mxu0 0.0
  %86 = vmatpush1.msra.mxu0 %v22
  %87 = vmatprep.subr.mxu0 0.0
  %88 = vmatpush2.msra.mxu0 0.0
  %89 = vmatprep.subr.mxu0 0.0
  %90 = vmatpush2.msra.mxu0 0.0
  %91 = vmatprep.subr.mxu0 0.0
  %92 = vmatpush2.msra.mxu0 0.0
  %93 = vmatprep.subr.mxu0 0.0
  %94 = vmatpush2.msra.mxu0 0.0
  %95 = vmatprep.subr.mxu0 0.0
  %96 = vmatpush2.msra.mxu0 0.0
  %97 = vmatprep.subr.mxu0 0.0
  %98 = vmatpush2.msra.mxu0 0.0
  %99 = vmatprep.subr.mxu0 0.0
  %100 = vmatpush2.msra.mxu0 0.0
  %101 = vmatprep.subr.mxu0 0.0
  %102 = vmatpush2.msra.mxu0 0.0
  %103 = vmatprep.subr.mxu0 0.0
  %104 = vmatpush2.msra.mxu0 0.0
  %105 = vmatprep.subr.mxu0 0.0
  %106 = vmatpush2.msra.mxu0 0.0
  %107 = vmatprep.subr.mxu0 0.0
  %108 = vmatpush2.msra.mxu0 0.0
  %109 = vmatprep.subr.mxu0 0.0
  %110 = vmatpush2.msra.mxu0 0.0
  %111 = vmatprep.subr.mxu0 0.0
  %112 = vmatpush2.msra.mxu0 0.0
  %113 = vmatprep.subr.mxu0 0.0
  %114 = vmatpush2.msra.mxu0 0.0
  %115 = vmatprep.subr.mxu0 0.0
  %116 = vmatpush2.msra.mxu0 0.0
  %117 = vmatprep.subr.mxu0 0.0
  %118 = vmatpush2.msra.mxu0 0.0
  %119 = vmatprep.mubr.f32.mxu0 0.0
  %120 = vmatmul.mubr.f32.gmra.mxu0 %v32
  %v121 = vpop.f32.mrf.mxu0
  %v122 = vadd.f32 %v28, %v121
  %v123 = vpop.f32.mrf.mxu0
  %124 = vmatprep.mubr.f32.mxu0 0.0
  %125 = vmatmul.mubr.f32.gmra.mxu0 %v35
  %v126 = vpop.f32.mrf.mxu0
  %v127 = vadd.f32 %v28, %v126
  %v128 = vpop.f32.mrf.mxu0
  %129 = vmatprep.mubr.f32.mxu0 0.0
  %130 = vmatmul.mubr.f32.gmra.mxu0 %v38
  %v131 = vpop.f32.mrf.mxu0
  %v132 = vadd.f32 %v28, %v131
  %v133 = vpop.f32.mrf.mxu0
  %134 = vmatprep.mubr.f32.mxu0 0.0
  %135 = vmatmul.mubr.f32.gmra.mxu0 %v41
  %v136 = vpop.f32.mrf.mxu0
  %v137 = vadd.f32 %v28, %v136
  %v138 = vpop.f32.mrf.mxu0
  %139 = vmatprep.mubr.f32.mxu0 0.0
  %140 = vmatmul.mubr.f32.gmra.mxu0 %v44
  %v141 = vpop.f32.mrf.mxu0
  %v142 = vadd.f32 %v28, %v141
  %v143 = vpop.f32.mrf.mxu0
  %144 = vmatprep.mubr.f32.mxu0 0.0
  %145 = vmatmul.mubr.f32.gmra.mxu0 %v47
  %v146 = vpop.f32.mrf.mxu0
  %v147 = vadd.f32 %v28, %v146
  %v148 = vpop.f32.mrf.mxu0
  %149 = vmatprep.mubr.f32.mxu0 0.0
  %150 = vmatmul.mubr.f32.gmra.mxu0 %v50
  %v151 = vpop.f32.mrf.mxu0
  %v152 = vadd.f32 %v28, %v151
  %v153 = vpop.f32.mrf.mxu0
  %154 = vmatprep.mubr.f32.mxu0 0.0
  %155 = vmatmul.mubr.f32.gmra.mxu0 %v53
  %v156 = vpop.f32.mrf.mxu0
  %v157 = vadd.f32 %v28, %v156
  %v158 = vpop.f32.mrf.mxu0
  %159 = vdwg.mxu0
  %160 = vst [vmem:[%s3] sm:$0xff] %v122
  %161 = vst [vmem:[%s3 + $0x8] sm:$0xff] %v127
  %162 = vst [vmem:[%s3 + $0x10] sm:$0xff] %v132
  %163 = vst [vmem:[%s3 + $0x18] sm:$0xff] %v137
  %164 = vst [vmem:[%s3 + $0x20] sm:$0xff] %v142
  %165 = vst [vmem:[%s3 + $0x28] sm:$0xff] %v147
  %166 = vst [vmem:[%s3 + $0x30] sm:$0xff] %v152
  %167 = vst [vmem:[%s3 + $0x38] sm:$0xff] %v157
  // Predicated region
  $region14: #{graph_attention_encoder.11} parent=0 // pred_check
    _
  $region15: #{graph_attention_encoder.11} parent=0 // pred_check_branch
    %169 = sbr.rel (0) target = $region17
  $region16: #{graph_attention_encoder.11} parent=0 // pred_region
    _
  $region17: #{graph_attention_encoder.11} parent=0 // pred_fallthru
    _
  // Predicated region
  $region18: #{graph_attention_encoder.11} parent=0 // pred_check
    _
  $region19: #{graph_attention_encoder.11} parent=0 // pred_check_branch
    %171 = sbr.rel (0) target = $region21
  $region20: #{graph_attention_encoder.11} parent=0 // pred_region
    _
  $region21: #{graph_attention_encoder.11} parent=0 // pred_fallthru
    _

// kernel: graph_attention_encoder.12
$region0: #{graph_attention_encoder.12}
  #allocation0 [shape = 'u32[]', space=smem, size = 0x4, offset = 0x4, fixed_abs, tag = 'smem constant byte address 0x4 - core index']
  #allocation1 [shape = 'u32[144,128]{1,0:T(1,128)}', space=vmem, size = 0x12000, scoped, tag = 'internal scratch']
  #allocation2 [shape = 'f32[32,128]{1,0:T(8,128)}', space=vmem, size = 0x4000, scoped, tag = 'scratch operand']
  %s0 = inlined_call_operand.vmem [shape: f32[2,32,128], index: 0, kind: input, shape index: {}]
  %s1 = inlined_call_operand.vmem [shape: f32[8,128,16], index: 1, kind: input, shape index: {}]
  %s2 = inlined_call_operand.vmem [shape: f32[8,128,16], index: 2, kind: input, shape index: {}]
  %s3 = inlined_call_operand.vmem [shape: f32[8,128,16], index: 3, kind: input, shape index: {}]
  %s4 = inlined_call_operand.vmem [shape: f32[8,16,128], index: 4, kind: input, shape index: {}]
  %s5 = inlined_call_operand.vmem [shape: f32[2,32,128], index: 5, kind: output, shape index: {}]
  %s6 = sld [smem:[#allocation0]]
  $region61: #{graph_attention_encoder.12} parent=0
    _
  %s8 = ssub.s32 1, %s6
  %s9 = scalar_select 0, %s8, %s6
  loop: start=0, step=1, limit=18
  $region2: #{graph_attention_encoder.12} parent=0 // loop_pre_header
    _
  $region3: #{graph_attention_encoder.12} parent=0 // loop_header
    %s11 = sphi 0, %s15
    %p12 = scmp.ge.s32.totalorder %s11, 18
    %s18 = sphi 0, %s30
    %s19 = sphi 0, %s26
    %s20 = sphi 0, %s18
    %s21 = sphi 0, %s19
    %s22 = sphi 0, %s20
    %s23 = sphi 0, %s21
    %s33 = sphi 0, %s35
    %s36 = sphi 0, %s33
    %s37 = sphi 0, %s36
    %s53 = sphi 0, %s37
    %s59 = sphi 0, %s61
    %s62 = sphi 0, %s59
    %s63 = sphi 0, %s62
    %s79 = sphi 0, %s63
    %s85 = sphi 0, %s87
    %s88 = sphi 0, %s85
    %s89 = sphi 0, %s88
    %s105 = sphi 0, %s89
    %s111 = sphi 0, %s113
    %s114 = sphi 0, %s111
    %s115 = sphi 0, %s114
    %s131 = sphi 0, %s115
    %s137 = sphi 0, %s139
    %s140 = sphi 0, %s137
    %s141 = sphi 0, %s140
    %s157 = sphi 0, %s141
    %s163 = sphi 0, %s165
    %s166 = sphi 0, %s163
    %s167 = sphi 0, %s166
    %s183 = sphi 0, %s167
  $region4: #{graph_attention_encoder.12} parent=0 // loop_header_branch
    %14 = sbr.rel (%p12) target = $region8
  $region5: #{graph_attention_encoder.12} parent=0 // loop_body
    %s16 = ssub.s32 %s11, 1
    %s17 = ssub.s32 %s11, 2
    %s24 = sadd.s32 1, %s19
    %p25 = scmp.ge.s32.totalorder %s24, 8
    %s26 = scalar_select %p25, 0, %s24
    %s27 = sadd.s32 1, %s18
    %s28 = scalar_select %p25, %s27, %s18
    %p29 = scmp.ge.s32.totalorder %s28, 2
    %s30 = scalar_select %p29, 0, %s28
    %s31 = ssub.s32 %s18, %s30
    %p32 = scmp.eq.s32.totalorder %s31, 0
    %s34 = sadd.s32 %s33, 1
    %s35 = scalar_select %p32, %s33, %s34
    %p38 = pneg %p32
    %p39 = scmp.eq.s32.totalorder %s11, 15
    %p40 = por %p38, %p39
    %p41 = scmp.ne.s32.totalorder %s33, %s36
    %p42 = scmp.eq.s32.totalorder %s11, 0
    %p43 = por %p41, %p42
    %p44 = scmp.ne.s32.totalorder %s33, %s36
    %p45 = scmp.eq.s32.totalorder %s16, 15
    %p46 = por %p44, %p45
    %p47 = scmp.ne.s32.totalorder %s36, %s37
    %p48 = scmp.eq.s32.totalorder %s16, 0
    %p49 = por %p47, %p48
    %p50 = scmp.ne.s32.totalorder %s36, %s37
    %p51 = scmp.eq.s32.totalorder %s17, 15
    %p52 = por %p50, %p51
    %p54 = scmp.ne.s32.totalorder %s37, %s53
    %p55 = scmp.eq.s32.totalorder %s17, 0
    %p56 = por %p54, %p55
    %s57 = ssub.s32 %s19, %s26
    %p58 = scmp.eq.s32.totalorder %s57, 0
    %s60 = sadd.s32 %s59, 1
    %s61 = scalar_select %p58, %s59, %s60
    %p64 = pneg %p58
    %p65 = scmp.eq.s32.totalorder %s11, 15
    %p66 = por %p64, %p65
    %p67 = scmp.ne.s32.totalorder %s59, %s62
    %p68 = scmp.eq.s32.totalorder %s11, 0
    %p69 = por %p67, %p68
    %p70 = scmp.ne.s32.totalorder %s59, %s62
    %p71 = scmp.eq.s32.totalorder %s16, 15
    %p72 = por %p70, %p71
    %p73 = scmp.ne.s32.totalorder %s62, %s63
    %p74 = scmp.eq.s32.totalorder %s16, 0
    %p75 = por %p73, %p74
    %p76 = scmp.ne.s32.totalorder %s62, %s63
    %p77 = scmp.eq.s32.totalorder %s17, 15
    %p78 = por %p76, %p77
    %p80 = scmp.ne.s32.totalorder %s63, %s79
    %p81 = scmp.eq.s32.totalorder %s17, 0
    %p82 = por %p80, %p81
    %s83 = ssub.s32 %s19, %s26
    %p84 = scmp.eq.s32.totalorder %s83, 0
    %s86 = sadd.s32 %s85, 1
    %s87 = scalar_select %p84, %s85, %s86
    %p90 = pneg %p84
    %p91 = scmp.eq.s32.totalorder %s11, 15
    %p92 = por %p90, %p91
    %p93 = scmp.ne.s32.totalorder %s85, %s88
    %p94 = scmp.eq.s32.totalorder %s11, 0
    %p95 = por %p93, %p94
    %p96 = scmp.ne.s32.totalorder %s85, %s88
    %p97 = scmp.eq.s32.totalorder %s16, 15
    %p98 = por %p96, %p97
    %p99 = scmp.ne.s32.totalorder %s88, %s89
    %p100 = scmp.eq.s32.totalorder %s16, 0
    %p101 = por %p99, %p100
    %p102 = scmp.ne.s32.totalorder %s88, %s89
    %p103 = scmp.eq.s32.totalorder %s17, 15
    %p104 = por %p102, %p103
    %p106 = scmp.ne.s32.totalorder %s89, %s105
    %p107 = scmp.eq.s32.totalorder %s17, 0
    %p108 = por %p106, %p107
    %s109 = ssub.s32 %s19, %s26
    %p110 = scmp.eq.s32.totalorder %s109, 0
    %s112 = sadd.s32 %s111, 1
    %s113 = scalar_select %p110, %s111, %s112
    %p116 = pneg %p110
    %p117 = scmp.eq.s32.totalorder %s11, 15
    %p118 = por %p116, %p117
    %p119 = scmp.ne.s32.totalorder %s111, %s114
    %p120 = scmp.eq.s32.totalorder %s11, 0
    %p121 = por %p119, %p120
    %p122 = scmp.ne.s32.totalorder %s111, %s114
    %p123 = scmp.eq.s32.totalorder %s16, 15
    %p124 = por %p122, %p123
    %p125 = scmp.ne.s32.totalorder %s114, %s115
    %p126 = scmp.eq.s32.totalorder %s16, 0
    %p127 = por %p125, %p126
    %p128 = scmp.ne.s32.totalorder %s114, %s115
    %p129 = scmp.eq.s32.totalorder %s17, 15
    %p130 = por %p128, %p129
    %p132 = scmp.ne.s32.totalorder %s115, %s131
    %p133 = scmp.eq.s32.totalorder %s17, 0
    %p134 = por %p132, %p133
    %s135 = ssub.s32 %s19, %s26
    %p136 = scmp.eq.s32.totalorder %s135, 0
    %s138 = sadd.s32 %s137, 1
    %s139 = scalar_select %p136, %s137, %s138
    %p142 = pneg %p136
    %p143 = scmp.eq.s32.totalorder %s11, 15
    %p144 = por %p142, %p143
    %p145 = scmp.ne.s32.totalorder %s137, %s140
    %p146 = scmp.eq.s32.totalorder %s11, 0
    %p147 = por %p145, %p146
    %p148 = scmp.ne.s32.totalorder %s137, %s140
    %p149 = scmp.eq.s32.totalorder %s16, 15
    %p150 = por %p148, %p149
    %p151 = scmp.ne.s32.totalorder %s140, %s141
    %p152 = scmp.eq.s32.totalorder %s16, 0
    %p153 = por %p151, %p152
    %p154 = scmp.ne.s32.totalorder %s140, %s141
    %p155 = scmp.eq.s32.totalorder %s17, 15
    %p156 = por %p154, %p155
    %p158 = scmp.ne.s32.totalorder %s141, %s157
    %p159 = scmp.eq.s32.totalorder %s17, 0
    %p160 = por %p158, %p159
    %s161 = ssub.s32 %s18, %s30
    %p162 = scmp.eq.s32.totalorder %s161, 0
    %s164 = sadd.s32 %s163, 1
    %s165 = scalar_select %p162, %s163, %s164
    %p168 = pneg %p162
    %p169 = scmp.eq.s32.totalorder %s11, 15
    %p170 = por %p168, %p169
    %p171 = scmp.ne.s32.totalorder %s163, %s166
    %p172 = scmp.eq.s32.totalorder %s11, 0
    %p173 = por %p171, %p172
    %p174 = scmp.ne.s32.totalorder %s163, %s166
    %p175 = scmp.eq.s32.totalorder %s16, 15
    %p176 = por %p174, %p175
    %p177 = scmp.ne.s32.totalorder %s166, %s167
    %p178 = scmp.eq.s32.totalorder %s16, 0
    %p179 = por %p177, %p178
    %p180 = scmp.ne.s32.totalorder %s166, %s167
    %p181 = scmp.eq.s32.totalorder %s17, 15
    %p182 = por %p180, %p181
    %p184 = scmp.ne.s32.totalorder %s167, %s183
    %p185 = scmp.eq.s32.totalorder %s17, 0
    %p186 = por %p184, %p185
    %p187 = scmp.le.s32.totalorder 1, %s11
    %p188 = scmp.lt.s32.totalorder %s11, 17
    %p189 = pnand %p187, %p188
    %p190 = pneg %p189
    // Predicated region
    $region9: #{graph_attention_encoder.12} parent=5 // pred_check
      _
    $region10: #{graph_attention_encoder.12} parent=5 // pred_check_branch
      %192 = sbr.rel (%p189) target = $region12
    $region11: #{graph_attention_encoder.12} parent=5 // pred_region
      %s193 = ssub.s32 %s11, 1
    $region12: #{graph_attention_encoder.12} parent=5 // pred_fallthru
      _
    %p194 = scmp.lt.s32.totalorder %s11, 16
    // Predicated region
    $region13: #{graph_attention_encoder.12} parent=5 // pred_check
      %p195 = pneg %p194
    $region14: #{graph_attention_encoder.12} parent=5 // pred_check_branch
      %197 = sbr.rel (%p195) target = $region16
    $region15: #{graph_attention_encoder.12} parent=5 // pred_region
      // Predicated region
      $region17: #{graph_attention_encoder.12} parent=15 // pred_check
        %p198 = pneg %p43
      $region18: #{graph_attention_encoder.12} parent=15 // pred_check_branch
        %200 = sbr.rel (%p198) target = $region20
      $region19: #{graph_attention_encoder.12} parent=15 // pred_region
        %p201 = scmp.lt.s32.totalorder %s18, 1
        %s202 = scalar_select %p201, %s18, 1
        %s203 = smul.addr %s202, 4
        %s204 = smul.addr %s203, 8
        %s205 = scalar_lea.vmem %s0, %s204
      $region20: #{graph_attention_encoder.12} parent=15 // pred_fallthru
        _
      // Predicated region
      $region21: #{graph_attention_encoder.12} parent=15 // pred_check
        %p206 = pneg %p69
      $region22: #{graph_attention_encoder.12} parent=15 // pred_check_branch
        %208 = sbr.rel (%p206) target = $region24
      $region23: #{graph_attention_encoder.12} parent=15 // pred_region
        %p209 = scmp.lt.s32.totalorder %s19, 7
        %s210 = scalar_select %p209, %s19, 7
        %s211 = smul.addr %s210, 16
        %s212 = smul.addr %s211, 8
        %s213 = scalar_lea.vmem %s1, %s212
      $region24: #{graph_attention_encoder.12} parent=15 // pred_fallthru
        _
      // Predicated region
      $region25: #{graph_attention_encoder.12} parent=15 // pred_check
        %p214 = pneg %p95
      $region26: #{graph_attention_encoder.12} parent=15 // pred_check_branch
        %216 = sbr.rel (%p214) target = $region28
      $region27: #{graph_attention_encoder.12} parent=15 // pred_region
        %p217 = scmp.lt.s32.totalorder %s19, 7
        %s218 = scalar_select %p217, %s19, 7
        %s219 = smul.addr %s218, 16
        %s220 = smul.addr %s219, 8
        %s221 = scalar_lea.vmem %s2, %s220
      $region28: #{graph_attention_encoder.12} parent=15 // pred_fallthru
        _
      // Predicated region
      $region29: #{graph_attention_encoder.12} parent=15 // pred_check
        %p222 = pneg %p121
      $region30: #{graph_attention_encoder.12} parent=15 // pred_check_branch
        %224 = sbr.rel (%p222) target = $region32
      $region31: #{graph_attention_encoder.12} parent=15 // pred_region
        %p225 = scmp.lt.s32.totalorder %s19, 7
        %s226 = scalar_select %p225, %s19, 7
        %s227 = smul.addr %s226, 16
        %s228 = smul.addr %s227, 8
        %s229 = scalar_lea.vmem %s3, %s228
      $region32: #{graph_attention_encoder.12} parent=15 // pred_fallthru
        _
      // Predicated region
      $region33: #{graph_attention_encoder.12} parent=15 // pred_check
        %p230 = pneg %p147
      $region34: #{graph_attention_encoder.12} parent=15 // pred_check_branch
        %232 = sbr.rel (%p230) target = $region36
      $region35: #{graph_attention_encoder.12} parent=15 // pred_region
        %p233 = scmp.lt.s32.totalorder %s19, 7
        %s234 = scalar_select %p233, %s19, 7
        %s235 = smul.addr %s234, 2
        %s236 = smul.addr %s235, 8
        %s237 = scalar_lea.vmem %s4, %s236
      $region36: #{graph_attention_encoder.12} parent=15 // pred_fallthru
        _
    $region16: #{graph_attention_encoder.12} parent=5 // pred_fallthru
      _
    %p238 = scmp.le.s32.totalorder 1, %s11
    %p239 = scmp.lt.s32.totalorder %s11, 17
    %p240 = pnand %p238, %p239
    %p241 = pneg %p240
    // Predicated region
    $region37: #{graph_attention_encoder.12} parent=5 // pred_check
      _
    $region38: #{graph_attention_encoder.12} parent=5 // pred_check_branch
      %243 = sbr.rel (%p240) target = $region40
    $region39: #{graph_attention_encoder.12} parent=5 // pred_region
      %s244 = ssub.s32 %s11, 1
      %p245 = scmp.lt.s32.totalorder %s20, 1
      %s246 = scalar_select %p245, %s20, 1
      %s247 = smul.addr %s246, 4
      %s248 = smul.addr %s247, 8
      %s249 = scalar_lea.vmem %s0, %s248
      %p250 = pneg %p49
      %p251 = pneg %p46
      %p252 = scmp.lt.s32.totalorder %s21, 7
      %s253 = scalar_select %p252, %s21, 7
      %s254 = smul.addr %s253, 16
      %s255 = smul.addr %s254, 8
      %s256 = scalar_lea.vmem %s1, %s255
      %p257 = pneg %p75
      %p258 = pneg %p72
      %p259 = scmp.lt.s32.totalorder %s21, 7
      %s260 = scalar_select %p259, %s21, 7
      %s261 = smul.addr %s260, 16
      %s262 = smul.addr %s261, 8
      %s263 = scalar_lea.vmem %s2, %s262
      %p264 = pneg %p101
      %p265 = pneg %p98
      %p266 = scmp.lt.s32.totalorder %s21, 7
      %s267 = scalar_select %p266, %s21, 7
      %s268 = smul.addr %s267, 16
      %s269 = smul.addr %s268, 8
      %s270 = scalar_lea.vmem %s3, %s269
      %p271 = pneg %p127
      %p272 = pneg %p124
      %p273 = scmp.lt.s32.totalorder %s21, 7
      %s274 = scalar_select %p273, %s21, 7
      %s275 = smul.addr %s274, 2
      %s276 = smul.addr %s275, 8
      %s277 = scalar_lea.vmem %s4, %s276
      %p278 = pneg %p153
      %p279 = pneg %p150
      %p280 = pneg %p179
      %p281 = pneg %p176
      %p282 = scmp.lt.s32.totalorder %s20, 1
      %s283 = scalar_select %p282, %s20, 1
      %s284 = smul.addr %s283, 4
      %s285 = smul.addr %s284, 8
      %s286 = scalar_lea.vmem %s5, %s285
      %p287 = scmp.lt.s32.totalorder %s20, 1
      %s288 = scalar_select %p287, %s20, 1
      %s289 = smul.addr %s288, 4
      %s290 = smul.addr %s289, 8
      %s291 = scalar_lea.vmem %s0, %s290
      %p292 = scmp.lt.s32.totalorder %s21, 7
      %s293 = scalar_select %p292, %s21, 7
      %s294 = smul.addr %s293, 16
      %s295 = smul.addr %s294, 8
      %s296 = scalar_lea.vmem %s1, %s295
      %p297 = scmp.lt.s32.totalorder %s21, 7
      %s298 = scalar_select %p297, %s21, 7
      %s299 = smul.addr %s298, 16
      %s300 = smul.addr %s299, 8
      %s301 = scalar_lea.vmem %s2, %s300
      %p302 = scmp.lt.s32.totalorder %s21, 7
      %s303 = scalar_select %p302, %s21, 7
      %s304 = smul.addr %s303, 16
      %s305 = smul.addr %s304, 8
      %s306 = scalar_lea.vmem %s3, %s305
      %p307 = scmp.lt.s32.totalorder %s21, 7
      %s308 = scalar_select %p307, %s21, 7
      %s309 = smul.addr %s308, 2
      %s310 = smul.addr %s309, 8
      %s311 = scalar_lea.vmem %s4, %s310
      %p312 = scmp.lt.s32.totalorder %s20, 1
      %s313 = scalar_select %p312, %s20, 1
      %s314 = smul.addr %s313, 4
      %s315 = smul.addr %s314, 8
      %s316 = scalar_lea.vmem %s5, %s315
      %v317 = vld [vmem:[%s291] sm:$0xff]
      %v318 = vld [vmem:[%s291 + $0x8] sm:$0xff]
      %v319 = vld [vmem:[%s291 + $0x10] sm:$0xff]
      %v320 = vld [vmem:[%s291 + $0x18] sm:$0xff]
      %p321 = scmp.eq.s32.totalorder %s21, 0
      // Predicated region
      $region41: #{graph_attention_encoder.12} parent=39 // pred_check
        %p322 = pneg %p321
      $region42: #{graph_attention_encoder.12} parent=39 // pred_check_branch
        %324 = sbr.rel (%p322) target = $region44
      $region43: #{graph_attention_encoder.12} parent=39 // pred_region
        %325 = vst [vmem:[#allocation2] sm:$0xff] %v317
        %326 = vst [vmem:[#allocation2 + $0x8] sm:$0xff] %v318
        %327 = vst [vmem:[#allocation2 + $0x10] sm:$0xff] %v319
        %328 = vst [vmem:[#allocation2 + $0x18] sm:$0xff] %v320
      $region44: #{graph_attention_encoder.12} parent=39 // pred_fallthru
        _
      %v329 = vld [vmem:[%s296] sm:$0xff]
      %v330 = vld [vmem:[%s296 + $0x8] sm:$0xff]
      %v331 = vld [vmem:[%s296 + $0x10] sm:$0xff]
      %v332 = vld [vmem:[%s296 + $0x18] sm:$0xff]
      %v333 = vld [vmem:[%s296 + $0x20] sm:$0xff]
      %v334 = vld [vmem:[%s296 + $0x28] sm:$0xff]
      %v335 = vld [vmem:[%s296 + $0x30] sm:$0xff]
      %v336 = vld [vmem:[%s296 + $0x38] sm:$0xff]
      %v337 = vld [vmem:[%s296 + $0x40] sm:$0xff]
      %v338 = vld [vmem:[%s296 + $0x48] sm:$0xff]
      %v339 = vld [vmem:[%s296 + $0x50] sm:$0xff]
      %v340 = vld [vmem:[%s296 + $0x58] sm:$0xff]
      %v341 = vld [vmem:[%s296 + $0x60] sm:$0xff]
      %v342 = vld [vmem:[%s296 + $0x68] sm:$0xff]
      %v343 = vld [vmem:[%s296 + $0x70] sm:$0xff]
      %v344 = vld [vmem:[%s296 + $0x78] sm:$0xff]
      %345 = vmatprep.subr.mxu0 0.0
      %346 = vmatpush1.msra.mxu0 %v344
      %347 = vmatprep.subr.mxu0 0.0
      %348 = vmatpush1.msra.mxu0 %v343
      %349 = vmatprep.subr.mxu0 0.0
      %350 = vmatpush1.msra.mxu0 %v342
      %351 = vmatprep.subr.mxu0 0.0
      %352 = vmatpush1.msra.mxu0 %v341
      %353 = vmatprep.subr.mxu0 0.0
      %354 = vmatpush1.msra.mxu0 %v340
      %355 = vmatprep.subr.mxu0 0.0
      %356 = vmatpush1.msra.mxu0 %v339
      %357 = vmatprep.subr.mxu0 0.0
      %358 = vmatpush1.msra.mxu0 %v338
      %359 = vmatprep.subr.mxu0 0.0
      %360 = vmatpush1.msra.mxu0 %v337
      %361 = vmatprep.subr.mxu0 0.0
      %362 = vmatpush1.msra.mxu0 %v336
      %363 = vmatprep.subr.mxu0 0.0
      %364 = vmatpush1.msra.mxu0 %v335
      %365 = vmatprep.subr.mxu0 0.0
      %366 = vmatpush1.msra.mxu0 %v334
      %367 = vmatprep.subr.mxu0 0.0
      %368 = vmatpush1.msra.mxu0 %v333
      %369 = vmatprep.subr.mxu0 0.0
      %370 = vmatpush1.msra.mxu0 %v332
      %371 = vmatprep.subr.mxu0 0.0
      %372 = vmatpush1.msra.mxu0 %v331
      %373 = vmatprep.subr.mxu0 0.0
      %374 = vmatpush1.msra.mxu0 %v330
      %375 = vmatprep.subr.mxu0 0.0
      %376 = vmatpush1.msra.mxu0 %v329
      %377 = vmatprep.subr.mxu0 0.0
      %378 = vmatpush2.msra.mxu0 0.0
      %379 = vmatprep.subr.mxu0 0.0
      %380 = vmatpush2.msra.mxu0 0.0
      %381 = vmatprep.subr.mxu0 0.0
      %382 = vmatpush2.msra.mxu0 0.0
      %383 = vmatprep.subr.mxu0 0.0
      %384 = vmatpush2.msra.mxu0 0.0
      %385 = vmatprep.subr.mxu0 0.0
      %386 = vmatpush2.msra.mxu0 0.0
      %387 = vmatprep.subr.mxu0 0.0
      %388 = vmatpush2.msra.mxu0 0.0
      %389 = vmatprep.subr.mxu0 0.0
      %390 = vmatpush2.msra.mxu0 0.0
      %391 = vmatprep.subr.mxu0 0.0
      %392 = vmatpush2.msra.mxu0 0.0
      %393 = vmatprep.subr.mxu0 0.0
      %394 = vmatpush2.msra.mxu0 0.0
      %395 = vmatprep.subr.mxu0 0.0
      %396 = vmatpush2.msra.mxu0 0.0
      %397 = vmatprep.subr.mxu0 0.0
      %398 = vmatpush2.msra.mxu0 0.0
      %399 = vmatprep.subr.mxu0 0.0
      %400 = vmatpush2.msra.mxu0 0.0
      %401 = vmatprep.subr.mxu0 0.0
      %402 = vmatpush2.msra.mxu0 0.0
      %403 = vmatprep.subr.mxu0 0.0
      %404 = vmatpush2.msra.mxu0 0.0
      %405 = vmatprep.subr.mxu0 0.0
      %406 = vmatpush2.msra.mxu0 0.0
      %407 = vmatprep.subr.mxu0 0.0
      %408 = vmatpush2.msra.mxu0 0.0
      %409 = vmatprep.mubr.f32.mxu0 0.0
      %410 = vmatmul.mubr.f32.gmra.mxu0 %v317
      %v411 = vpop.f32.mrf.mxu0
      %v412 = vadd.f32 0.0, %v411
      %v413 = vpop.f32.mrf.mxu0
      %414 = vmatprep.mubr.f32.mxu0 0.0
      %415 = vmatmul.mubr.f32.gmra.mxu0 %v318
      %v416 = vpop.f32.mrf.mxu0
      %v417 = vadd.f32 0.0, %v416
      %v418 = vpop.f32.mrf.mxu0
      %419 = vmatprep.mubr.f32.mxu0 0.0
      %420 = vmatmul.mubr.f32.gmra.mxu0 %v319
      %v421 = vpop.f32.mrf.mxu0
      %v422 = vadd.f32 0.0, %v421
      %v423 = vpop.f32.mrf.mxu0
      %424 = vmatprep.mubr.f32.mxu0 0.0
      %425 = vmatmul.mubr.f32.gmra.mxu0 %v320
      %v426 = vpop.f32.mrf.mxu0
      %v427 = vadd.f32 0.0, %v426
      %v428 = vpop.f32.mrf.mxu0
      %429 = vdwg.mxu0
      %v430 = vld [vmem:[%s301] sm:$0xff]
      %v431 = vld [vmem:[%s301 + $0x8] sm:$0xff]
      %v432 = vld [vmem:[%s301 + $0x10] sm:$0xff]
      %v433 = vld [vmem:[%s301 + $0x18] sm:$0xff]
      %v434 = vld [vmem:[%s301 + $0x20] sm:$0xff]
      %v435 = vld [vmem:[%s301 + $0x28] sm:$0xff]
      %v436 = vld [vmem:[%s301 + $0x30] sm:$0xff]
      %v437 = vld [vmem:[%s301 + $0x38] sm:$0xff]
      %v438 = vld [vmem:[%s301 + $0x40] sm:$0xff]
      %v439 = vld [vmem:[%s301 + $0x48] sm:$0xff]
      %v440 = vld [vmem:[%s301 + $0x50] sm:$0xff]
      %v441 = vld [vmem:[%s301 + $0x58] sm:$0xff]
      %v442 = vld [vmem:[%s301 + $0x60] sm:$0xff]
      %v443 = vld [vmem:[%s301 + $0x68] sm:$0xff]
      %v444 = vld [vmem:[%s301 + $0x70] sm:$0xff]
      %v445 = vld [vmem:[%s301 + $0x78] sm:$0xff]
      %446 = vmatprep.subr.mxu0 0.0
      %447 = vmatpush1.msra.mxu0 %v445
      %448 = vmatprep.subr.mxu0 0.0
      %449 = vmatpush1.msra.mxu0 %v444
      %450 = vmatprep.subr.mxu0 0.0
      %451 = vmatpush1.msra.mxu0 %v443
      %452 = vmatprep.subr.mxu0 0.0
      %453 = vmatpush1.msra.mxu0 %v442
      %454 = vmatprep.subr.mxu0 0.0
      %455 = vmatpush1.msra.mxu0 %v441
      %456 = vmatprep.subr.mxu0 0.0
      %457 = vmatpush1.msra.mxu0 %v440
      %458 = vmatprep.subr.mxu0 0.0
      %459 = vmatpush1.msra.mxu0 %v439
      %460 = vmatprep.subr.mxu0 0.0
      %461 = vmatpush1.msra.mxu0 %v438
      %462 = vmatprep.subr.mxu0 0.0
      %463 = vmatpush1.msra.mxu0 %v437
      %464 = vmatprep.subr.mxu0 0.0
      %465 = vmatpush1.msra.mxu0 %v436
      %466 = vmatprep.subr.mxu0 0.0
      %467 = vmatpush1.msra.mxu0 %v435
      %468 = vmatprep.subr.mxu0 0.0
      %469 = vmatpush1.msra.mxu0 %v434
      %470 = vmatprep.subr.mxu0 0.0
      %471 = vmatpush1.msra.mxu0 %v433
      %472 = vmatprep.subr.mxu0 0.0
      %473 = vmatpush1.msra.mxu0 %v432
      %474 = vmatprep.subr.mxu0 0.0
      %475 = vmatpush1.msra.mxu0 %v431
      %476 = vmatprep.subr.mxu0 0.0
      %477 = vmatpush1.msra.mxu0 %v430
      %478 = vmatprep.subr.mxu0 0.0
      %479 = vmatpush2.msra.mxu0 0.0
      %480 = vmatprep.subr.mxu0 0.0
      %481 = vmatpush2.msra.mxu0 0.0
      %482 = vmatprep.subr.mxu0 0.0
      %483 = vmatpush2.msra.mxu0 0.0
      %484 = vmatprep.subr.mxu0 0.0
      %485 = vmatpush2.msra.mxu0 0.0
      %486 = vmatprep.subr.mxu0 0.0
      %487 = vmatpush2.msra.mxu0 0.0
      %488 = vmatprep.subr.mxu0 0.0
      %489 = vmatpush2.msra.mxu0 0.0
      %490 = vmatprep.subr.mxu0 0.0
      %491 = vmatpush2.msra.mxu0 0.0
      %492 = vmatprep.subr.mxu0 0.0
      %493 = vmatpush2.msra.mxu0 0.0
      %494 = vmatprep.subr.mxu0 0.0
      %495 = vmatpush2.msra.mxu0 0.0
      %496 = vmatprep.subr.mxu0 0.0
      %497 = vmatpush2.msra.mxu0 0.0
      %498 = vmatprep.subr.mxu0 0.0
      %499 = vmatpush2.msra.mxu0 0.0
      %500 = vmatprep.subr.mxu0 0.0
      %501 = vmatpush2.msra.mxu0 0.0
      %502 = vmatprep.subr.mxu0 0.0
      %503 = vmatpush2.msra.mxu0 0.0
      %504 = vmatprep.subr.mxu0 0.0
      %505 = vmatpush2.msra.mxu0 0.0
      %506 = vmatprep.subr.mxu0 0.0
      %507 = vmatpush2.msra.mxu0 0.0
      %508 = vmatprep.subr.mxu0 0.0
      %509 = vmatpush2.msra.mxu0 0.0
      %510 = vmatprep.mubr.f32.mxu0 0.0
      %511 = vmatmul.mubr.f32.gmra.mxu0 %v317
      %v512 = vpop.f32.mrf.mxu0
      %v513 = vadd.f32 0.0, %v512
      %v514 = vpop.f32.mrf.mxu0
      %515 = vmatprep.mubr.f32.mxu0 0.0
      %516 = vmatmul.mubr.f32.gmra.mxu0 %v318
      %v517 = vpop.f32.mrf.mxu0
      %v518 = vadd.f32 0.0, %v517
      %v519 = vpop.f32.mrf.mxu0
      %520 = vmatprep.mubr.f32.mxu0 0.0
      %521 = vmatmul.mubr.f32.gmra.mxu0 %v319
      %v522 = vpop.f32.mrf.mxu0
      %v523 = vadd.f32 0.0, %v522
      %v524 = vpop.f32.mrf.mxu0
      %525 = vmatprep.mubr.f32.mxu0 0.0
      %526 = vmatmul.mubr.f32.gmra.mxu0 %v320
      %v527 = vpop.f32.mrf.mxu0
      %v528 = vadd.f32 0.0, %v527
      %v529 = vpop.f32.mrf.mxu0
      %530 = vdwg.mxu0
      %v531 = vld [vmem:[%s306] sm:$0xff]
      %v532 = vld [vmem:[%s306 + $0x8] sm:$0xff]
      %v533 = vld [vmem:[%s306 + $0x10] sm:$0xff]
      %v534 = vld [vmem:[%s306 + $0x18] sm:$0xff]
      %v535 = vld [vmem:[%s306 + $0x20] sm:$0xff]
      %v536 = vld [vmem:[%s306 + $0x28] sm:$0xff]
      %v537 = vld [vmem:[%s306 + $0x30] sm:$0xff]
      %v538 = vld [vmem:[%s306 + $0x38] sm:$0xff]
      %v539 = vld [vmem:[%s306 + $0x40] sm:$0xff]
      %v540 = vld [vmem:[%s306 + $0x48] sm:$0xff]
      %v541 = vld [vmem:[%s306 + $0x50] sm:$0xff]
      %v542 = vld [vmem:[%s306 + $0x58] sm:$0xff]
      %v543 = vld [vmem:[%s306 + $0x60] sm:$0xff]
      %v544 = vld [vmem:[%s306 + $0x68] sm:$0xff]
      %v545 = vld [vmem:[%s306 + $0x70] sm:$0xff]
      %v546 = vld [vmem:[%s306 + $0x78] sm:$0xff]
      %547 = vmatprep.subr.mxu0 0.0
      %548 = vmatpush1.msra.mxu0 %v546
      %549 = vmatprep.subr.mxu0 0.0
      %550 = vmatpush1.msra.mxu0 %v545
      %551 = vmatprep.subr.mxu0 0.0
      %552 = vmatpush1.msra.mxu0 %v544
      %553 = vmatprep.subr.mxu0 0.0
      %554 = vmatpush1.msra.mxu0 %v543
      %555 = vmatprep.subr.mxu0 0.0
      %556 = vmatpush1.msra.mxu0 %v542
      %557 = vmatprep.subr.mxu0 0.0
      %558 = vmatpush1.msra.mxu0 %v541
      %559 = vmatprep.subr.mxu0 0.0
      %560 = vmatpush1.msra.mxu0 %v540
      %561 = vmatprep.subr.mxu0 0.0
      %562 = vmatpush1.msra.mxu0 %v539
      %563 = vmatprep.subr.mxu0 0.0
      %564 = vmatpush1.msra.mxu0 %v538
      %565 = vmatprep.subr.mxu0 0.0
      %566 = vmatpush1.msra.mxu0 %v537
      %567 = vmatprep.subr.mxu0 0.0
      %568 = vmatpush1.msra.mxu0 %v536
      %569 = vmatprep.subr.mxu0 0.0
      %570 = vmatpush1.msra.mxu0 %v535
      %571 = vmatprep.subr.mxu0 0.0
      %572 = vmatpush1.msra.mxu0 %v534
      %573 = vmatprep.subr.mxu0 0.0
      %574 = vmatpush1.msra.mxu0 %v533
      %575 = vmatprep.subr.mxu0 0.0
      %576 = vmatpush1.msra.mxu0 %v532
      %577 = vmatprep.subr.mxu0 0.0
      %578 = vmatpush1.msra.mxu0 %v531
      %579 = vmatprep.subr.mxu0 0.0
      %580 = vmatpush2.msra.mxu0 0.0
      %581 = vmatprep.subr.mxu0 0.0
      %582 = vmatpush2.msra.mxu0 0.0
      %583 = vmatprep.subr.mxu0 0.0
      %584 = vmatpush2.msra.mxu0 0.0
      %585 = vmatprep.subr.mxu0 0.0
      %586 = vmatpush2.msra.mxu0 0.0
      %587 = vmatprep.subr.mxu0 0.0
      %588 = vmatpush2.msra.mxu0 0.0
      %589 = vmatprep.subr.mxu0 0.0
      %590 = vmatpush2.msra.mxu0 0.0
      %591 = vmatprep.subr.mxu0 0.0
      %592 = vmatpush2.msra.mxu0 0.0
      %593 = vmatprep.subr.mxu0 0.0
      %594 = vmatpush2.msra.mxu0 0.0
      %595 = vmatprep.subr.mxu0 0.0
      %596 = vmatpush2.msra.mxu0 0.0
      %597 = vmatprep.subr.mxu0 0.0
      %598 = vmatpush2.msra.mxu0 0.0
      %599 = vmatprep.subr.mxu0 0.0
      %600 = vmatpush2.msra.mxu0 0.0
      %601 = vmatprep.subr.mxu0 0.0
      %602 = vmatpush2.msra.mxu0 0.0
      %603 = vmatprep.subr.mxu0 0.0
      %604 = vmatpush2.msra.mxu0 0.0
      %605 = vmatprep.subr.mxu0 0.0
      %606 = vmatpush2.msra.mxu0 0.0
      %607 = vmatprep.subr.mxu0 0.0
      %608 = vmatpush2.msra.mxu0 0.0
      %609 = vmatprep.subr.mxu0 0.0
      %610 = vmatpush2.msra.mxu0 0.0
      %611 = vmatprep.mubr.f32.mxu0 0.0
      %612 = vmatmul.mubr.f32.gmra.mxu0 %v317
      %v613 = vpop.f32.mrf.mxu0
      %v614 = vadd.f32 0.0, %v613
      %v615 = vpop.f32.mrf.mxu0
      %616 = vmatprep.mubr.f32.mxu0 0.0
      %617 = vmatmul.mubr.f32.gmra.mxu0 %v318
      %v618 = vpop.f32.mrf.mxu0
      %v619 = vadd.f32 0.0, %v618
      %v620 = vpop.f32.mrf.mxu0
      %621 = vmatprep.mubr.f32.mxu0 0.0
      %622 = vmatmul.mubr.f32.gmra.mxu0 %v319
      %v623 = vpop.f32.mrf.mxu0
      %v624 = vadd.f32 0.0, %v623
      %v625 = vpop.f32.mrf.mxu0
      %626 = vmatprep.mubr.f32.mxu0 0.0
      %627 = vmatmul.mubr.f32.gmra.mxu0 %v320
      %v628 = vpop.f32.mrf.mxu0
      %v629 = vadd.f32 0.0, %v628
      %v630 = vpop.f32.mrf.mxu0
      %631 = vdwg.mxu0
      %vm632 = vcmask 130048
      %v634 = vsel %vm632, %v412, 0
      %v637 = vsel %vm632, %v417, 0
      %v640 = vsel %vm632, %v422, 0
      %v643 = vsel %vm632, %v427, 0
      %v646 = vsel %vm632, %v513, 0
      %v649 = vsel %vm632, %v518, 0
      %v652 = vsel %vm632, %v523, 0
      %v655 = vsel %vm632, %v528, 0
      %657 = vmatprep.subr.mxu0 0.0
      %658 = vmatpush1.xpose.msra.mxu0 0.0
      %659 = vmatprep.subr.mxu0 0.0
      %660 = vmatpush1.xpose.msra.mxu0 0.0
      %661 = vmatprep.subr.mxu0 0.0
      %662 = vmatpush1.xpose.msra.mxu0 0.0
      %663 = vmatprep.subr.mxu0 0.0
      %664 = vmatpush1.xpose.msra.mxu0 0.0
      %665 = vmatprep.subr.mxu0 0.0
      %666 = vmatpush1.xpose.msra.mxu0 0.0
      %667 = vmatprep.subr.mxu0 0.0
      %668 = vmatpush1.xpose.msra.mxu0 0.0
      %669 = vmatprep.subr.mxu0 0.0
      %670 = vmatpush1.xpose.msra.mxu0 0.0
      %671 = vmatprep.subr.mxu0 0.0
      %672 = vmatpush1.xpose.msra.mxu0 0.0
      %673 = vmatprep.subr.mxu0 0.0
      %674 = vmatpush1.xpose.msra.mxu0 0.0
      %675 = vmatprep.subr.mxu0 0.0
      %676 = vmatpush1.xpose.msra.mxu0 0.0
      %677 = vmatprep.subr.mxu0 0.0
      %678 = vmatpush1.xpose.msra.mxu0 0.0
      %679 = vmatprep.subr.mxu0 0.0
      %680 = vmatpush1.xpose.msra.mxu0 0.0
      %681 = vmatprep.subr.mxu0 0.0
      %682 = vmatpush1.xpose.msra.mxu0 %v655
      %683 = vmatprep.subr.mxu0 0.0
      %684 = vmatpush1.xpose.msra.mxu0 %v652
      %685 = vmatprep.subr.mxu0 0.0
      %686 = vmatpush1.xpose.msra.mxu0 %v649
      %687 = vmatprep.subr.mxu0 0.0
      %688 = vmatpush1.xpose.msra.mxu0 %v646
      %689 = vmatprep.subr.mxu0 0.0
      %690 = vmatpush2.xpose.msra.mxu0 0.0
      %691 = vmatprep.subr.mxu0 0.0
      %692 = vmatpush2.xpose.msra.mxu0 0.0
      %693 = vmatprep.subr.mxu0 0.0
      %694 = vmatpush2.xpose.msra.mxu0 0.0
      %695 = vmatprep.subr.mxu0 0.0
      %696 = vmatpush2.xpose.msra.mxu0 0.0
      %697 = vmatprep.subr.mxu0 0.0
      %698 = vmatpush2.xpose.msra.mxu0 0.0
      %699 = vmatprep.subr.mxu0 0.0
      %700 = vmatpush2.xpose.msra.mxu0 0.0
      %701 = vmatprep.subr.mxu0 0.0
      %702 = vmatpush2.xpose.msra.mxu0 0.0
      %703 = vmatprep.subr.mxu0 0.0
      %704 = vmatpush2.xpose.msra.mxu0 0.0
      %705 = vmatprep.subr.mxu0 0.0
      %706 = vmatpush2.xpose.msra.mxu0 0.0
      %707 = vmatprep.subr.mxu0 0.0
      %708 = vmatpush2.xpose.msra.mxu0 0.0
      %709 = vmatprep.subr.mxu0 0.0
      %710 = vmatpush2.xpose.msra.mxu0 0.0
      %711 = vmatprep.subr.mxu0 0.0
      %712 = vmatpush2.xpose.msra.mxu0 0.0
      %713 = vmatprep.subr.mxu0 0.0
      %714 = vmatpush2.xpose.msra.mxu0 0.0
      %715 = vmatprep.subr.mxu0 0.0
      %716 = vmatpush2.xpose.msra.mxu0 0.0
      %717 = vmatprep.subr.mxu0 0.0
      %718 = vmatpush2.xpose.msra.mxu0 0.0
      %719 = vmatprep.subr.mxu0 0.0
      %720 = vmatpush2.xpose.msra.mxu0 0.0
      %721 = vmatprep.mubr.f32.mxu0 0.0
      %722 = vmatmul.mubr.f32.gmra.mxu0 %v634
      %v723 = vpop.f32.mrf.mxu0
      %v724 = vadd.f32 0.0, %v723
      %v725 = vpop.f32.mrf.mxu0
      %726 = vmatprep.mubr.f32.mxu0 0.0
      %727 = vmatmul.mubr.f32.gmra.mxu0 %v637
      %v728 = vpop.f32.mrf.mxu0
      %v729 = vadd.f32 0.0, %v728
      %v730 = vpop.f32.mrf.mxu0
      %731 = vmatprep.mubr.f32.mxu0 0.0
      %732 = vmatmul.mubr.f32.gmra.mxu0 %v640
      %v733 = vpop.f32.mrf.mxu0
      %v734 = vadd.f32 0.0, %v733
      %v735 = vpop.f32.mrf.mxu0
      %736 = vmatprep.mubr.f32.mxu0 0.0
      %737 = vmatmul.mubr.f32.gmra.mxu0 %v643
      %v738 = vpop.f32.mrf.mxu0
      %v739 = vadd.f32 0.0, %v738
      %v740 = vpop.f32.mrf.mxu0
      %741 = vdwg.mxu0
      %v742 = vmul.f32 %v724, 0.25
      %v743 = vmul.f32 %v729, 0.25
      %v744 = vmul.f32 %v734, 0.25
      %v745 = vmul.f32 %v739, 0.25
      %vm746 = vcmask 261120
      %v747 = vsel %vm746, %v742, -inf
      %748 = vmax.xlane.f32.xlu0 %v747
      %v749 = vpop.xlane.xlu0 %748
      %v750 = vsel %vm746, %v743, -inf
      %751 = vmax.xlane.f32.xlu0 %v750
      %v752 = vpop.xlane.xlu0 %751
      %v753 = vsel %vm746, %v744, -inf
      %754 = vmax.xlane.f32.xlu0 %v753
      %v755 = vpop.xlane.xlu0 %754
      %v756 = vsel %vm746, %v745, -inf
      %757 = vmax.xlane.f32.xlu0 %v756
      %v758 = vpop.xlane.xlu0 %757
      %v759 = vsub.f32 %v742, %v749
      %v760 = vsub.f32 %v743, %v752
      %v761 = vsub.f32 %v744, %v755
      %v762 = vsub.f32 %v745, %v758
      %v763 = vmul.f32 %v759, 1.442695
      %v764 = vpow.pop %v763
      %v765 = vmul.f32 %v760, 1.442695
      %v766 = vpow.pop %v765
      %v767 = vmul.f32 %v761, 1.442695
      %v768 = vpow.pop %v767
      %v769 = vmul.f32 %v762, 1.442695
      %v770 = vpow.pop %v769
      %v771 = vsel %vm746, %v764, 0.0
      %772 = vadd.xlane.f32.xlu0 %v771
      %v773 = vpop.xlane.xlu0 %772
      %v774 = vsel %vm746, %v766, 0.0
      %775 = vadd.xlane.f32.xlu0 %v774
      %v776 = vpop.xlane.xlu0 %775
      %v777 = vsel %vm746, %v768, 0.0
      %778 = vadd.xlane.f32.xlu0 %v777
      %v779 = vpop.xlane.xlu0 %778
      %v780 = vsel %vm746, %v770, 0.0
      %781 = vadd.xlane.f32.xlu0 %v780
      %v782 = vpop.xlane.xlu0 %781
      %v783 = vrcp.pop %v773
      %v784 = vmul.f32 %v764, %v783
      %v785 = vrcp.pop %v776
      %v786 = vmul.f32 %v766, %v785
      %v787 = vrcp.pop %v779
      %v788 = vmul.f32 %v768, %v787
      %v789 = vrcp.pop %v782
      %v790 = vmul.f32 %v770, %v789
      %v792 = vsel %vm746, %v784, 0
      %v795 = vsel %vm746, %v786, 0
      %v798 = vsel %vm746, %v788, 0
      %v801 = vsel %vm746, %v790, 0
      %803 = vmatprep.subr.mxu0 0.0
      %804 = vmatpush1.msra.mxu0 0.0
      %805 = vmatprep.subr.mxu0 0.0
      %806 = vmatpush1.msra.mxu0 0.0
      %807 = vmatprep.subr.mxu0 0.0
      %808 = vmatpush1.msra.mxu0 0.0
      %809 = vmatprep.subr.mxu0 0.0
      %810 = vmatpush1.msra.mxu0 0.0
      %811 = vmatprep.subr.mxu0 0.0
      %812 = vmatpush1.msra.mxu0 0.0
      %813 = vmatprep.subr.mxu0 0.0
      %814 = vmatpush1.msra.mxu0 0.0
      %815 = vmatprep.subr.mxu0 0.0
      %816 = vmatpush1.msra.mxu0 0.0
      %817 = vmatprep.subr.mxu0 0.0
      %818 = vmatpush1.msra.mxu0 0.0
      %819 = vmatprep.subr.mxu0 0.0
      %820 = vmatpush1.msra.mxu0 0.0
      %821 = vmatprep.subr.mxu0 0.0
      %822 = vmatpush1.msra.mxu0 0.0
      %823 = vmatprep.subr.mxu0 0.0
      %824 = vmatpush1.msra.mxu0 0.0
      %825 = vmatprep.subr.mxu0 0.0
      %826 = vmatpush1.msra.mxu0 0.0
      %827 = vmatprep.subr.mxu0 0.0
      %828 = vmatpush1.msra.mxu0 %v629
      %829 = vmatprep.subr.mxu0 0.0
      %830 = vmatpush1.msra.mxu0 %v624
      %831 = vmatprep.subr.mxu0 0.0
      %832 = vmatpush1.msra.mxu0 %v619
      %833 = vmatprep.subr.mxu0 0.0
      %834 = vmatpush1.msra.mxu0 %v614
      %835 = vmatprep.subr.mxu0 0.0
      %836 = vmatpush2.msra.mxu0 0.0
      %837 = vmatprep.subr.mxu0 0.0
      %838 = vmatpush2.msra.mxu0 0.0
      %839 = vmatprep.subr.mxu0 0.0
      %840 = vmatpush2.msra.mxu0 0.0
      %841 = vmatprep.subr.mxu0 0.0
      %842 = vmatpush2.msra.mxu0 0.0
      %843 = vmatprep.subr.mxu0 0.0
      %844 = vmatpush2.msra.mxu0 0.0
      %845 = vmatprep.subr.mxu0 0.0
      %846 = vmatpush2.msra.mxu0 0.0
      %847 = vmatprep.subr.mxu0 0.0
      %848 = vmatpush2.msra.mxu0 0.0
      %849 = vmatprep.subr.mxu0 0.0
      %850 = vmatpush2.msra.mxu0 0.0
      %851 = vmatprep.subr.mxu0 0.0
      %852 = vmatpush2.msra.mxu0 0.0
      %853 = vmatprep.subr.mxu0 0.0
      %854 = vmatpush2.msra.mxu0 0.0
      %855 = vmatprep.subr.mxu0 0.0
      %856 = vmatpush2.msra.mxu0 0.0
      %857 = vmatprep.subr.mxu0 0.0
      %858 = vmatpush2.msra.mxu0 0.0
      %859 = vmatprep.subr.mxu0 0.0
      %860 = vmatpush2.msra.mxu0 0.0
      %861 = vmatprep.subr.mxu0 0.0
      %862 = vmatpush2.msra.mxu0 0.0
      %863 = vmatprep.subr.mxu0 0.0
      %864 = vmatpush2.msra.mxu0 0.0
      %865 = vmatprep.subr.mxu0 0.0
      %866 = vmatpush2.msra.mxu0 0.0
      %867 = vmatprep.mubr.f32.mxu0 0.0
      %868 = vmatmul.mubr.f32.gmra.mxu0 %v792
      %v869 = vpop.f32.mrf.mxu0
      %v870 = vadd.f32 0.0, %v869
      %v871 = vpop.f32.mrf.mxu0
      %872 = vmatprep.mubr.f32.mxu0 0.0
      %873 = vmatmul.mubr.f32.gmra.mxu0 %v795
      %v874 = vpop.f32.mrf.mxu0
      %v875 = vadd.f32 0.0, %v874
      %v876 = vpop.f32.mrf.mxu0
      %877 = vmatprep.mubr.f32.mxu0 0.0
      %878 = vmatmul.mubr.f32.gmra.mxu0 %v798
      %v879 = vpop.f32.mrf.mxu0
      %v880 = vadd.f32 0.0, %v879
      %v881 = vpop.f32.mrf.mxu0
      %882 = vmatprep.mubr.f32.mxu0 0.0
      %883 = vmatmul.mubr.f32.gmra.mxu0 %v801
      %v884 = vpop.f32.mrf.mxu0
      %v885 = vadd.f32 0.0, %v884
      %v886 = vpop.f32.mrf.mxu0
      %887 = vdwg.mxu0
      %v888 = vld [vmem:[#allocation2] sm:$0xff]
      %v889 = vld [vmem:[#allocation2 + $0x8] sm:$0xff]
      %v890 = vld [vmem:[#allocation2 + $0x10] sm:$0xff]
      %v891 = vld [vmem:[#allocation2 + $0x18] sm:$0xff]
      %v892 = vld [vmem:[%s311] sm:$0xff]
      %v893 = vld [vmem:[%s311 + $0x8] sm:$0xff]
      %v895 = vsel %vm632, %v870, 0
      %v898 = vsel %vm632, %v875, 0
      %v901 = vsel %vm632, %v880, 0
      %v904 = vsel %vm632, %v885, 0
      %906 = vmatprep.subr.mxu0 0.0
      %907 = vmatpush1.msra.mxu0 0.0
      %908 = vmatprep.subr.mxu0 0.0
      %909 = vmatpush1.msra.mxu0 0.0
      %910 = vmatprep.subr.mxu0 0.0
      %911 = vmatpush1.msra.mxu0 0.0
      %912 = vmatprep.subr.mxu0 0.0
      %913 = vmatpush1.msra.mxu0 0.0
      %914 = vmatprep.subr.mxu0 0.0
      %915 = vmatpush1.msra.mxu0 0.0
      %916 = vmatprep.subr.mxu0 0.0
      %917 = vmatpush1.msra.mxu0 0.0
      %918 = vmatprep.subr.mxu0 0.0
      %919 = vmatpush1.msra.mxu0 0.0
      %920 = vmatprep.subr.mxu0 0.0
      %921 = vmatpush1.msra.mxu0 0.0
      %922 = vmatprep.subr.mxu0 0.0
      %923 = vmatpush1.msra.mxu0 0.0
      %924 = vmatprep.subr.mxu0 0.0
      %925 = vmatpush1.msra.mxu0 0.0
      %926 = vmatprep.subr.mxu0 0.0
      %927 = vmatpush1.msra.mxu0 0.0
      %928 = vmatprep.subr.mxu0 0.0
      %929 = vmatpush1.msra.mxu0 0.0
      %930 = vmatprep.subr.mxu0 0.0
      %931 = vmatpush1.msra.mxu0 0.0
      %932 = vmatprep.subr.mxu0 0.0
      %933 = vmatpush1.msra.mxu0 0.0
      %934 = vmatprep.subr.mxu0 0.0
      %935 = vmatpush1.msra.mxu0 %v893
      %936 = vmatprep.subr.mxu0 0.0
      %937 = vmatpush1.msra.mxu0 %v892
      %938 = vmatprep.subr.mxu0 0.0
      %939 = vmatpush2.msra.mxu0 0.0
      %940 = vmatprep.subr.mxu0 0.0
      %941 = vmatpush2.msra.mxu0 0.0
      %942 = vmatprep.subr.mxu0 0.0
      %943 = vmatpush2.msra.mxu0 0.0
      %944 = vmatprep.subr.mxu0 0.0
      %945 = vmatpush2.msra.mxu0 0.0
      %946 = vmatprep.subr.mxu0 0.0
      %947 = vmatpush2.msra.mxu0 0.0
      %948 = vmatprep.subr.mxu0 0.0
      %949 = vmatpush2.msra.mxu0 0.0
      %950 = vmatprep.subr.mxu0 0.0
      %951 = vmatpush2.msra.mxu0 0.0
      %952 = vmatprep.subr.mxu0 0.0
      %953 = vmatpush2.msra.mxu0 0.0
      %954 = vmatprep.subr.mxu0 0.0
      %955 = vmatpush2.msra.mxu0 0.0
      %956 = vmatprep.subr.mxu0 0.0
      %957 = vmatpush2.msra.mxu0 0.0
      %958 = vmatprep.subr.mxu0 0.0
      %959 = vmatpush2.msra.mxu0 0.0
      %960 = vmatprep.subr.mxu0 0.0
      %961 = vmatpush2.msra.mxu0 0.0
      %962 = vmatprep.subr.mxu0 0.0
      %963 = vmatpush2.msra.mxu0 0.0
      %964 = vmatprep.subr.mxu0 0.0
      %965 = vmatpush2.msra.mxu0 0.0
      %966 = vmatprep.subr.mxu0 0.0
      %967 = vmatpush2.msra.mxu0 0.0
      %968 = vmatprep.subr.mxu0 0.0
      %969 = vmatpush2.msra.mxu0 0.0
      %970 = vmatprep.mubr.f32.mxu0 0.0
      %971 = vmatmul.mubr.f32.gmra.mxu0 %v895
      %v972 = vpop.f32.mrf.mxu0
      %v973 = vadd.f32 0.0, %v972
      %v974 = vpop.f32.mrf.mxu0
      %975 = vmatprep.mubr.f32.mxu0 0.0
      %976 = vmatmul.mubr.f32.gmra.mxu0 %v898
      %v977 = vpop.f32.mrf.mxu0
      %v978 = vadd.f32 0.0, %v977
      %v979 = vpop.f32.mrf.mxu0
      %980 = vmatprep.mubr.f32.mxu0 0.0
      %981 = vmatmul.mubr.f32.gmra.mxu0 %v901
      %v982 = vpop.f32.mrf.mxu0
      %v983 = vadd.f32 0.0, %v982
      %v984 = vpop.f32.mrf.mxu0
      %985 = vmatprep.mubr.f32.mxu0 0.0
      %986 = vmatmul.mubr.f32.gmra.mxu0 %v904
      %v987 = vpop.f32.mrf.mxu0
      %v988 = vadd.f32 0.0, %v987
      %v989 = vpop.f32.mrf.mxu0
      %990 = vdwg.mxu0
      %v991 = vadd.f32 %v888, %v973
      %v992 = vadd.f32 %v889, %v978
      %v993 = vadd.f32 %v890, %v983
      %v994 = vadd.f32 %v891, %v988
      %995 = vst [vmem:[#allocation2] sm:$0xff] %v991
      %996 = vst [vmem:[#allocation2 + $0x8] sm:$0xff] %v992
      %997 = vst [vmem:[#allocation2 + $0x10] sm:$0xff] %v993
      %998 = vst [vmem:[#allocation2 + $0x18] sm:$0xff] %v994
      %p999 = scmp.eq.s32.totalorder %s21, 7
      // Predicated region
      $region45: #{graph_attention_encoder.12} parent=39 // pred_check
        %p1000 = pneg %p999
      $region46: #{graph_attention_encoder.12} parent=39 // pred_check_branch
        %1002 = sbr.rel (%p1000) target = $region48
      $region47: #{graph_attention_encoder.12} parent=39 // pred_region
        %v1003 = vld [vmem:[#allocation2] sm:$0xff]
        %v1004 = vld [vmem:[#allocation2 + $0x8] sm:$0xff]
        %v1005 = vld [vmem:[#allocation2 + $0x10] sm:$0xff]
        %v1006 = vld [vmem:[#allocation2 + $0x18] sm:$0xff]
        %1007 = vst [vmem:[%s316] sm:$0xff] %v1003
        %1008 = vst [vmem:[%s316 + $0x8] sm:$0xff] %v1004
        %1009 = vst [vmem:[%s316 + $0x10] sm:$0xff] %v1005
        %1010 = vst [vmem:[%s316 + $0x18] sm:$0xff] %v1006
      $region48: #{graph_attention_encoder.12} parent=39 // pred_fallthru
        _
      %p1011 = scmp.lt.s32.totalorder %s20, 1
      %s1012 = scalar_select %p1011, %s20, 1
      %s1013 = smul.addr %s1012, 4
      %s1014 = smul.addr %s1013, 8
      %s1015 = scalar_lea.vmem %s5, %s1014
      // Predicated region
      $region49: #{graph_attention_encoder.12} parent=39 // pred_check
        %p1016 = pneg %p176
      $region50: #{graph_attention_encoder.12} parent=39 // pred_check_branch
        %1018 = sbr.rel (%p1016) target = $region52
      $region51: #{graph_attention_encoder.12} parent=39 // pred_region
        _
      $region52: #{graph_attention_encoder.12} parent=39 // pred_fallthru
        _
    $region40: #{graph_attention_encoder.12} parent=5 // pred_fallthru
      _
    %p1019 = scmp.le.s32.totalorder 2, %s11
    // Predicated region
    $region53: #{graph_attention_encoder.12} parent=5 // pred_check
      %p1020 = pneg %p1019
    $region54: #{graph_attention_encoder.12} parent=5 // pred_check_branch
      %1022 = sbr.rel (%p1020) target = $region56
    $region55: #{graph_attention_encoder.12} parent=5 // pred_region
      %s1023 = ssub.s32 %s11, 2
      // Predicated region
      $region57: #{graph_attention_encoder.12} parent=55 // pred_check
        %p1024 = pneg %p182
      $region58: #{graph_attention_encoder.12} parent=55 // pred_check_branch
        %1026 = sbr.rel (%p1024) target = $region60
      $region59: #{graph_attention_encoder.12} parent=55 // pred_region
        %p1027 = scmp.lt.s32.totalorder %s22, 1
        %s1028 = scalar_select %p1027, %s22, 1
        %s1029 = smul.addr %s1028, 4
        %s1030 = smul.addr %s1029, 8
        %s1031 = scalar_lea.vmem %s5, %s1030
      $region60: #{graph_attention_encoder.12} parent=55 // pred_fallthru
        _
    $region56: #{graph_attention_encoder.12} parent=5 // pred_fallthru
      _
  $region6: #{graph_attention_encoder.12} parent=0 // loop_footer
    %s15 = sadd.s32 1, %s11
  $region7: #{graph_attention_encoder.12} parent=0 // loop_footer_branch
    %10 = sbr.rel target = $region3
  $region8: #{graph_attention_encoder.12} parent=0 // loop_exit
    _

// kernel: graph_attention_encoder.21
$region0: #{graph_attention_encoder.21}
  #allocation0 [shape = 'u32[]', space=smem, size = 0x4, offset = 0x4, fixed_abs, tag = 'smem constant byte address 0x4 - core index']
  #allocation1 [shape = 'u32[144,128]{1,0:T(1,128)}', space=vmem, size = 0x12000, scoped, tag = 'internal scratch']
  %s0 = inlined_call_operand.vmem [shape: f32[64,128], index: 0, kind: input, shape index: {}]
  %s1 = inlined_call_operand.vmem [shape: f32[1,128], index: 1, kind: input, shape index: {}]
  %s2 = inlined_call_operand.vmem [shape: f32[1,128], index: 2, kind: input, shape index: {}]
  %s3 = inlined_call_operand.vmem [shape: f32[1,128], index: 3, kind: input, shape index: {}]
  %s4 = inlined_call_operand.vmem [shape: f32[1,128], index: 4, kind: input, shape index: {}]
  %s5 = inlined_call_operand.hbm [shape: f32[64,128], index: 5, kind: output, shape index: {}]
  %s6 = sld [smem:[#allocation0]]
  $region30: #{graph_attention_encoder.21} parent=0
    _
  %s8 = ssub.s32 1, %s6
  %s9 = scalar_select 0, %s8, %s6
  $region1: #{graph_attention_encoder.21} parent=0
    #allocation2 [shape = 'u8[32768]{0}', space=vmem, size = 0x8000, scoped, tag = 'output window, operand 0, single buffered']
    #allocation3 [shape = 's32[1]{0}', space=sflag, size = 0x4, scoped, tag = 'scoped memory for graph_attention_encoder.21']
    %10 = vsyncpa [#allocation3], 0
    // Predicated region
    $region2: #{graph_attention_encoder.21} parent=1 // pred_check
      _
    $region3: #{graph_attention_encoder.21} parent=1 // pred_check_branch
      %12 = sbr.rel (0) target = $region5
    $region4: #{graph_attention_encoder.21} parent=1 // pred_region
      _
    $region5: #{graph_attention_encoder.21} parent=1 // pred_fallthru
      _
    // Predicated region
    $region6: #{graph_attention_encoder.21} parent=1 // pred_check
      _
    $region7: #{graph_attention_encoder.21} parent=1 // pred_check_branch
      %14 = sbr.rel (0) target = $region9
    $region8: #{graph_attention_encoder.21} parent=1 // pred_region
      _
    $region9: #{graph_attention_encoder.21} parent=1 // pred_fallthru
      _
    // Predicated region
    $region10: #{graph_attention_encoder.21} parent=1 // pred_check
      _
    $region11: #{graph_attention_encoder.21} parent=1 // pred_check_branch
      %16 = sbr.rel (0) target = $region13
    $region12: #{graph_attention_encoder.21} parent=1 // pred_region
      _
    $region13: #{graph_attention_encoder.21} parent=1 // pred_fallthru
      _
    // Predicated region
    $region14: #{graph_attention_encoder.21} parent=1 // pred_check
      _
    $region15: #{graph_attention_encoder.21} parent=1 // pred_check_branch
      %18 = sbr.rel (0) target = $region17
    $region16: #{graph_attention_encoder.21} parent=1 // pred_region
      _
    $region17: #{graph_attention_encoder.21} parent=1 // pred_fallthru
      _
    // Predicated region
    $region18: #{graph_attention_encoder.21} parent=1 // pred_check
      _
    $region19: #{graph_attention_encoder.21} parent=1 // pred_check_branch
      %20 = sbr.rel (0) target = $region21
    $region20: #{graph_attention_encoder.21} parent=1 // pred_region
      _
    $region21: #{graph_attention_encoder.21} parent=1 // pred_fallthru
      _
    %v21 = vld [vmem:[%s0] sm:$0xff]
    %v22 = vld [vmem:[%s0 + $0x8] sm:$0xff]
    %v23 = vld [vmem:[%s0 + $0x10] sm:$0xff]
    %v24 = vld [vmem:[%s0 + $0x18] sm:$0xff]
    %v25 = vld [vmem:[%s0 + $0x20] sm:$0xff]
    %v26 = vld [vmem:[%s0 + $0x28] sm:$0xff]
    %v27 = vld [vmem:[%s0 + $0x30] sm:$0xff]
    %v28 = vld [vmem:[%s0 + $0x38] sm:$0xff]
    %v29 = vld [vmem:[%s2] sm:$0x1]
    %v30 = vadd.f32 %v29, 1e-05
    %v31 = vrsqrt.pop %v30
    %v32 = vld [vmem:[%s1] sm:$0x1]
    %v34 = vlaneseq
    %v35 = vshrl.u32 %v34, 7
    %v36 = vsub.s32 0, %v35
    %v37 = vrot.slane %v32, %v36
    %v39 = vsub.f32 %v21, %v37
    %v40 = vsub.f32 %v22, %v37
    %v41 = vsub.f32 %v23, %v37
    %v42 = vsub.f32 %v24, %v37
    %v43 = vsub.f32 %v25, %v37
    %v44 = vsub.f32 %v26, %v37
    %v45 = vsub.f32 %v27, %v37
    %v46 = vsub.f32 %v28, %v37
    %v48 = vlaneseq
    %v49 = vshrl.u32 %v48, 7
    %v50 = vsub.s32 0, %v49
    %v51 = vrot.slane %v31, %v50
    %v53 = vmul.f32 %v39, %v51
    %v54 = vmul.f32 %v40, %v51
    %v55 = vmul.f32 %v41, %v51
    %v56 = vmul.f32 %v42, %v51
    %v57 = vmul.f32 %v43, %v51
    %v58 = vmul.f32 %v44, %v51
    %v59 = vmul.f32 %v45, %v51
    %v60 = vmul.f32 %v46, %v51
    %v61 = vld [vmem:[%s3] sm:$0x1]
    %v63 = vlaneseq
    %v64 = vshrl.u32 %v63, 7
    %v65 = vsub.s32 0, %v64
    %v66 = vrot.slane %v61, %v65
    %v68 = vmul.f32 %v53, %v66
    %v69 = vmul.f32 %v54, %v66
    %v70 = vmul.f32 %v55, %v66
    %v71 = vmul.f32 %v56, %v66
    %v72 = vmul.f32 %v57, %v66
    %v73 = vmul.f32 %v58, %v66
    %v74 = vmul.f32 %v59, %v66
    %v75 = vmul.f32 %v60, %v66
    %v76 = vld [vmem:[%s4] sm:$0x1]
    %v78 = vlaneseq
    %v79 = vshrl.u32 %v78, 7
    %v80 = vsub.s32 0, %v79
    %v81 = vrot.slane %v76, %v80
    %v83 = vadd.f32 %v68, %v81
    %v84 = vadd.f32 %v69, %v81
    %v85 = vadd.f32 %v70, %v81
    %v86 = vadd.f32 %v71, %v81
    %v87 = vadd.f32 %v72, %v81
    %v88 = vadd.f32 %v73, %v81
    %v89 = vadd.f32 %v74, %v81
    %v90 = vadd.f32 %v75, %v81
    %91 = vst [vmem:[#allocation2] sm:$0xff] %v83
    %92 = vst [vmem:[#allocation2 + $0x8] sm:$0xff] %v84
    %93 = vst [vmem:[#allocation2 + $0x10] sm:$0xff] %v85
    %94 = vst [vmem:[#allocation2 + $0x18] sm:$0xff] %v86
    %95 = vst [vmem:[#allocation2 + $0x20] sm:$0xff] %v87
    %96 = vst [vmem:[#allocation2 + $0x28] sm:$0xff] %v88
    %97 = vst [vmem:[#allocation2 + $0x30] sm:$0xff] %v89
    %98 = vst [vmem:[#allocation2 + $0x38] sm:$0xff] %v90
    // Predicated region
    $region22: #{graph_attention_encoder.21} parent=1 // pred_check
      _
    $region23: #{graph_attention_encoder.21} parent=1 // pred_check_branch
      %100 = sbr.rel (0) target = $region25
    $region24: #{graph_attention_encoder.21} parent=1 // pred_region
      %s102 = ssub.s32 1024, 1024
      %103 = vsyncadd [#allocation3], %s102
      %s104 = sshll.u32 [#allocation2], 4
      %s105 = int_to_ptr.vmem [resolvable:$true] %s104
      %110 = dma.vmem_to_hbm [thread:$0]  %s105, 1024, %s5, [#allocation3], 128, 128, 8
    $region25: #{graph_attention_encoder.21} parent=1 // pred_fallthru
      _
    // Predicated region
    $region26: #{graph_attention_encoder.21} parent=1 // pred_check
      _
    $region27: #{graph_attention_encoder.21} parent=1 // pred_check_branch
      %112 = sbr.rel (0) target = $region29
    $region28: #{graph_attention_encoder.21} parent=1 // pred_region
      %113 = dma.done [#allocation3], 1024
    $region29: #{graph_attention_encoder.21} parent=1 // pred_fallthru
      _
    %114 = vsyncpa [#allocation3], 1

// kernel: graph_attention_encoder.16
$region0: #{graph_attention_encoder.16}
  #allocation0 [shape = 'u32[]', space=smem, size = 0x4, offset = 0x4, fixed_abs, tag = 'smem constant byte address 0x4 - core index']
  #allocation1 [shape = 'u32[144,128]{1,0:T(1,128)}', space=vmem, size = 0x12000, scoped, tag = 'internal scratch']
  %s0 = inlined_call_operand.vmem [shape: f32[64,128], index: 0, kind: input, shape index: {}]
  %s1 = inlined_call_operand.vmem [shape: f32[1,128], index: 1, kind: input, shape index: {}]
  %s2 = inlined_call_operand.vmem [shape: f32[1,128], index: 2, kind: input, shape index: {}]
  %s3 = inlined_call_operand.vmem [shape: f32[1,128], index: 3, kind: input, shape index: {}]
  %s4 = inlined_call_operand.vmem [shape: f32[1,128], index: 4, kind: input, shape index: {}]
  %s5 = inlined_call_operand.vmem [shape: f32[64,128], index: 5, kind: output, shape index: {}]
  %s6 = sld [smem:[#allocation0]]
  $region30: #{graph_attention_encoder.16} parent=0
    _
  %s8 = ssub.s32 1, %s6
  %s9 = scalar_select 0, %s8, %s6
  // Predicated region
  $region2: #{graph_attention_encoder.16} parent=0 // pred_check
    _
  $region3: #{graph_attention_encoder.16} parent=0 // pred_check_branch
    %11 = sbr.rel (0) target = $region5
  $region4: #{graph_attention_encoder.16} parent=0 // pred_region
    _
  $region5: #{graph_attention_encoder.16} parent=0 // pred_fallthru
    _
  // Predicated region
  $region6: #{graph_attention_encoder.16} parent=0 // pred_check
    _
  $region7: #{graph_attention_encoder.16} parent=0 // pred_check_branch
    %13 = sbr.rel (0) target = $region9
  $region8: #{graph_attention_encoder.16} parent=0 // pred_region
    _
  $region9: #{graph_attention_encoder.16} parent=0 // pred_fallthru
    _
  // Predicated region
  $region10: #{graph_attention_encoder.16} parent=0 // pred_check
    _
  $region11: #{graph_attention_encoder.16} parent=0 // pred_check_branch
    %15 = sbr.rel (0) target = $region13
  $region12: #{graph_attention_encoder.16} parent=0 // pred_region
    _
  $region13: #{graph_attention_encoder.16} parent=0 // pred_fallthru
    _
  // Predicated region
  $region14: #{graph_attention_encoder.16} parent=0 // pred_check
    _
  $region15: #{graph_attention_encoder.16} parent=0 // pred_check_branch
    %17 = sbr.rel (0) target = $region17
  $region16: #{graph_attention_encoder.16} parent=0 // pred_region
    _
  $region17: #{graph_attention_encoder.16} parent=0 // pred_fallthru
    _
  // Predicated region
  $region18: #{graph_attention_encoder.16} parent=0 // pred_check
    _
  $region19: #{graph_attention_encoder.16} parent=0 // pred_check_branch
    %19 = sbr.rel (0) target = $region21
  $region20: #{graph_attention_encoder.16} parent=0 // pred_region
    _
  $region21: #{graph_attention_encoder.16} parent=0 // pred_fallthru
    _
  %v20 = vld [vmem:[%s0] sm:$0xff]
  %v21 = vld [vmem:[%s0 + $0x8] sm:$0xff]
  %v22 = vld [vmem:[%s0 + $0x10] sm:$0xff]
  %v23 = vld [vmem:[%s0 + $0x18] sm:$0xff]
  %v24 = vld [vmem:[%s0 + $0x20] sm:$0xff]
  %v25 = vld [vmem:[%s0 + $0x28] sm:$0xff]
  %v26 = vld [vmem:[%s0 + $0x30] sm:$0xff]
  %v27 = vld [vmem:[%s0 + $0x38] sm:$0xff]
  %v28 = vld [vmem:[%s2] sm:$0x1]
  %v29 = vadd.f32 %v28, 1e-05
  %v30 = vrsqrt.pop %v29
  %v31 = vld [vmem:[%s1] sm:$0x1]
  %v33 = vlaneseq
  %v34 = vshrl.u32 %v33, 7
  %v35 = vsub.s32 0, %v34
  %v36 = vrot.slane %v31, %v35
  %v38 = vsub.f32 %v20, %v36
  %v39 = vsub.f32 %v21, %v36
  %v40 = vsub.f32 %v22, %v36
  %v41 = vsub.f32 %v23, %v36
  %v42 = vsub.f32 %v24, %v36
  %v43 = vsub.f32 %v25, %v36
  %v44 = vsub.f32 %v26, %v36
  %v45 = vsub.f32 %v27, %v36
  %v47 = vlaneseq
  %v48 = vshrl.u32 %v47, 7
  %v49 = vsub.s32 0, %v48
  %v50 = vrot.slane %v30, %v49
  %v52 = vmul.f32 %v38, %v50
  %v53 = vmul.f32 %v39, %v50
  %v54 = vmul.f32 %v40, %v50
  %v55 = vmul.f32 %v41, %v50
  %v56 = vmul.f32 %v42, %v50
  %v57 = vmul.f32 %v43, %v50
  %v58 = vmul.f32 %v44, %v50
  %v59 = vmul.f32 %v45, %v50
  %v60 = vld [vmem:[%s3] sm:$0x1]
  %v62 = vlaneseq
  %v63 = vshrl.u32 %v62, 7
  %v64 = vsub.s32 0, %v63
  %v65 = vrot.slane %v60, %v64
  %v67 = vmul.f32 %v52, %v65
  %v68 = vmul.f32 %v53, %v65
  %v69 = vmul.f32 %v54, %v65
  %v70 = vmul.f32 %v55, %v65
  %v71 = vmul.f32 %v56, %v65
  %v72 = vmul.f32 %v57, %v65
  %v73 = vmul.f32 %v58, %v65
  %v74 = vmul.f32 %v59, %v65
  %v75 = vld [vmem:[%s4] sm:$0x1]
  %v77 = vlaneseq
  %v78 = vshrl.u32 %v77, 7
  %v79 = vsub.s32 0, %v78
  %v80 = vrot.slane %v75, %v79
  %v82 = vadd.f32 %v67, %v80
  %v83 = vadd.f32 %v68, %v80
  %v84 = vadd.f32 %v69, %v80
  %v85 = vadd.f32 %v70, %v80
  %v86 = vadd.f32 %v71, %v80
  %v87 = vadd.f32 %v72, %v80
  %v88 = vadd.f32 %v73, %v80
  %v89 = vadd.f32 %v74, %v80
  %90 = vst [vmem:[%s5] sm:$0xff] %v82
  %91 = vst [vmem:[%s5 + $0x8] sm:$0xff] %v83
  %92 = vst [vmem:[%s5 + $0x10] sm:$0xff] %v84
  %93 = vst [vmem:[%s5 + $0x18] sm:$0xff] %v85
  %94 = vst [vmem:[%s5 + $0x20] sm:$0xff] %v86
  %95 = vst [vmem:[%s5 + $0x28] sm:$0xff] %v87
  %96 = vst [vmem:[%s5 + $0x30] sm:$0xff] %v88
  %97 = vst [vmem:[%s5 + $0x38] sm:$0xff] %v89
  // Predicated region
  $region22: #{graph_attention_encoder.16} parent=0 // pred_check
    _
  $region23: #{graph_attention_encoder.16} parent=0 // pred_check_branch
    %99 = sbr.rel (0) target = $region25
  $region24: #{graph_attention_encoder.16} parent=0 // pred_region
    _
  $region25: #{graph_attention_encoder.16} parent=0 // pred_fallthru
    _
  // Predicated region
  $region26: #{graph_attention_encoder.16} parent=0 // pred_check
    _
  $region27: #{graph_attention_encoder.16} parent=0 // pred_check_branch
    %101 = sbr.rel (0) target = $region29
  $region28: #{graph_attention_encoder.16} parent=0 // pred_region
    _
  $region29: #{graph_attention_encoder.16} parent=0 // pred_fallthru
    _

// kernel: graph_attention_encoder.14
$region0: #{graph_attention_encoder.14}
  #allocation0 [shape = 'u32[]', space=smem, size = 0x4, offset = 0x4, fixed_abs, tag = 'smem constant byte address 0x4 - core index']
  #allocation1 [shape = 'u32[144,128]{1,0:T(1,128)}', space=vmem, size = 0x12000, scoped, tag = 'internal scratch']
  %s0 = inlined_call_operand.vmem [shape: f32[64,128], index: 0, kind: input, shape index: {}]
  %s1 = inlined_call_operand.vmem [shape: f32[1,128], index: 1, kind: input, shape index: {}]
  %s2 = inlined_call_operand.vmem [shape: f32[1,128], index: 2, kind: input, shape index: {}]
  %s3 = inlined_call_operand.vmem [shape: f32[1,128], index: 3, kind: input, shape index: {}]
  %s4 = inlined_call_operand.vmem [shape: f32[1,128], index: 4, kind: input, shape index: {}]
  %s5 = inlined_call_operand.vmem [shape: f32[128,512], index: 5, kind: input, shape index: {}]
  %s6 = inlined_call_operand.vmem [shape: f32[1,512], index: 6, kind: input, shape index: {}]
  %s7 = inlined_call_operand.vmem [shape: f32[512,128], index: 7, kind: input, shape index: {}]
  %s8 = inlined_call_operand.vmem [shape: f32[1,128], index: 8, kind: input, shape index: {}]
  %s9 = inlined_call_operand.vmem [shape: f32[64,128], index: 9, kind: output, shape index: {}]
  %s10 = sld [smem:[#allocation0]]
  $region46: #{graph_attention_encoder.14} parent=0
    _
  %s12 = ssub.s32 1, %s10
  %s13 = scalar_select 0, %s12, %s10
  // Predicated region
  $region2: #{graph_attention_encoder.14} parent=0 // pred_check
    _
  $region3: #{graph_attention_encoder.14} parent=0 // pred_check_branch
    %15 = sbr.rel (0) target = $region5
  $region4: #{graph_attention_encoder.14} parent=0 // pred_region
    _
  $region5: #{graph_attention_encoder.14} parent=0 // pred_fallthru
    _
  // Predicated region
  $region6: #{graph_attention_encoder.14} parent=0 // pred_check
    _
  $region7: #{graph_attention_encoder.14} parent=0 // pred_check_branch
    %17 = sbr.rel (0) target = $region9
  $region8: #{graph_attention_encoder.14} parent=0 // pred_region
    _
  $region9: #{graph_attention_encoder.14} parent=0 // pred_fallthru
    _
  // Predicated region
  $region10: #{graph_attention_encoder.14} parent=0 // pred_check
    _
  $region11: #{graph_attention_encoder.14} parent=0 // pred_check_branch
    %19 = sbr.rel (0) target = $region13
  $region12: #{graph_attention_encoder.14} parent=0 // pred_region
    _
  $region13: #{graph_attention_encoder.14} parent=0 // pred_fallthru
    _
  // Predicated region
  $region14: #{graph_attention_encoder.14} parent=0 // pred_check
    _
  $region15: #{graph_attention_encoder.14} parent=0 // pred_check_branch
    %21 = sbr.rel (0) target = $region17
  $region16: #{graph_attention_encoder.14} parent=0 // pred_region
    _
  $region17: #{graph_attention_encoder.14} parent=0 // pred_fallthru
    _
  // Predicated region
  $region18: #{graph_attention_encoder.14} parent=0 // pred_check
    _
  $region19: #{graph_attention_encoder.14} parent=0 // pred_check_branch
    %23 = sbr.rel (0) target = $region21
  $region20: #{graph_attention_encoder.14} parent=0 // pred_region
    _
  $region21: #{graph_attention_encoder.14} parent=0 // pred_fallthru
    _
  // Predicated region
  $region22: #{graph_attention_encoder.14} parent=0 // pred_check
    _
  $region23: #{graph_attention_encoder.14} parent=0 // pred_check_branch
    %25 = sbr.rel (0) target = $region25
  $region24: #{graph_attention_encoder.14} parent=0 // pred_region
    _
  $region25: #{graph_attention_encoder.14} parent=0 // pred_fallthru
    _
  // Predicated region
  $region26: #{graph_attention_encoder.14} parent=0 // pred_check
    _
  $region27: #{graph_attention_encoder.14} parent=0 // pred_check_branch
    %27 = sbr.rel (0) target = $region29
  $region28: #{graph_attention_encoder.14} parent=0 // pred_region
    _
  $region29: #{graph_attention_encoder.14} parent=0 // pred_fallthru
    _
  // Predicated region
  $region30: #{graph_attention_encoder.14} parent=0 // pred_check
    _
  $region31: #{graph_attention_encoder.14} parent=0 // pred_check_branch
    %29 = sbr.rel (0) target = $region33
  $region32: #{graph_attention_encoder.14} parent=0 // pred_region
    _
  $region33: #{graph_attention_encoder.14} parent=0 // pred_fallthru
    _
  // Predicated region
  $region34: #{graph_attention_encoder.14} parent=0 // pred_check
    _
  $region35: #{graph_attention_encoder.14} parent=0 // pred_check_branch
    %31 = sbr.rel (0) target = $region37
  $region36: #{graph_attention_encoder.14} parent=0 // pred_region
    _
  $region37: #{graph_attention_encoder.14} parent=0 // pred_fallthru
    _
  %v32 = vld [vmem:[%s0] sm:$0xff]
  %v33 = vld [vmem:[%s0 + $0x8] sm:$0xff]
  %v34 = vld [vmem:[%s0 + $0x10] sm:$0xff]
  %v35 = vld [vmem:[%s0 + $0x18] sm:$0xff]
  %v36 = vld [vmem:[%s0 + $0x20] sm:$0xff]
  %v37 = vld [vmem:[%s0 + $0x28] sm:$0xff]
  %v38 = vld [vmem:[%s0 + $0x30] sm:$0xff]
  %v39 = vld [vmem:[%s0 + $0x38] sm:$0xff]
  %v40 = vld [vmem:[%s2] sm:$0x1]
  %v41 = vadd.f32 %v40, 1e-05
  %v42 = vrsqrt.pop %v41
  %v43 = vld [vmem:[%s1] sm:$0x1]
  %v45 = vlaneseq
  %v46 = vshrl.u32 %v45, 7
  %v47 = vsub.s32 0, %v46
  %v48 = vrot.slane %v43, %v47
  %v50 = vsub.f32 %v32, %v48
  %v51 = vsub.f32 %v33, %v48
  %v52 = vsub.f32 %v34, %v48
  %v53 = vsub.f32 %v35, %v48
  %v54 = vsub.f32 %v36, %v48
  %v55 = vsub.f32 %v37, %v48
  %v56 = vsub.f32 %v38, %v48
  %v57 = vsub.f32 %v39, %v48
  %v59 = vlaneseq
  %v60 = vshrl.u32 %v59, 7
  %v61 = vsub.s32 0, %v60
  %v62 = vrot.slane %v42, %v61
  %v64 = vmul.f32 %v50, %v62
  %v65 = vmul.f32 %v51, %v62
  %v66 = vmul.f32 %v52, %v62
  %v67 = vmul.f32 %v53, %v62
  %v68 = vmul.f32 %v54, %v62
  %v69 = vmul.f32 %v55, %v62
  %v70 = vmul.f32 %v56, %v62
  %v71 = vmul.f32 %v57, %v62
  %v72 = vld [vmem:[%s3] sm:$0x1]
  %v74 = vlaneseq
  %v75 = vshrl.u32 %v74, 7
  %v76 = vsub.s32 0, %v75
  %v77 = vrot.slane %v72, %v76
  %v79 = vmul.f32 %v64, %v77
  %v80 = vmul.f32 %v65, %v77
  %v81 = vmul.f32 %v66, %v77
  %v82 = vmul.f32 %v67, %v77
  %v83 = vmul.f32 %v68, %v77
  %v84 = vmul.f32 %v69, %v77
  %v85 = vmul.f32 %v70, %v77
  %v86 = vmul.f32 %v71, %v77
  %v87 = vld [vmem:[%s4] sm:$0x1]
  %v89 = vlaneseq
  %v90 = vshrl.u32 %v89, 7
  %v91 = vsub.s32 0, %v90
  %v92 = vrot.slane %v87, %v91
  %v94 = vadd.f32 %v79, %v92
  %v95 = vadd.f32 %v80, %v92
  %v96 = vadd.f32 %v81, %v92
  %v97 = vadd.f32 %v82, %v92
  %v98 = vadd.f32 %v83, %v92
  %v99 = vadd.f32 %v84, %v92
  %v100 = vadd.f32 %v85, %v92
  %v101 = vadd.f32 %v86, %v92
  %v102 = vld [vmem:[%s5] sm:$0xff]
  %v103 = vld [vmem:[%s5 + $0x8] sm:$0xff]
  %v104 = vld [vmem:[%s5 + $0x10] sm:$0xff]
  %v105 = vld [vmem:[%s5 + $0x18] sm:$0xff]
  %v106 = vld [vmem:[%s5 + $0x20] sm:$0xff]
  %v107 = vld [vmem:[%s5 + $0x28] sm:$0xff]
  %v108 = vld [vmem:[%s5 + $0x30] sm:$0xff]
  %v109 = vld [vmem:[%s5 + $0x38] sm:$0xff]
  %v110 = vld [vmem:[%s5 + $0x40] sm:$0xff]
  %v111 = vld [vmem:[%s5 + $0x48] sm:$0xff]
  %v112 = vld [vmem:[%s5 + $0x50] sm:$0xff]
  %v113 = vld [vmem:[%s5 + $0x58] sm:$0xff]
  %v114 = vld [vmem:[%s5 + $0x60] sm:$0xff]
  %v115 = vld [vmem:[%s5 + $0x68] sm:$0xff]
  %v116 = vld [vmem:[%s5 + $0x70] sm:$0xff]
  %v117 = vld [vmem:[%s5 + $0x78] sm:$0xff]
  %v118 = vld [vmem:[%s5 + $0x80] sm:$0xff]
  %v119 = vld [vmem:[%s5 + $0x88] sm:$0xff]
  %v120 = vld [vmem:[%s5 + $0x90] sm:$0xff]
  %v121 = vld [vmem:[%s5 + $0x98] sm:$0xff]
  %v122 = vld [vmem:[%s5 + $0xa0] sm:$0xff]
  %v123 = vld [vmem:[%s5 + $0xa8] sm:$0xff]
  %v124 = vld [vmem:[%s5 + $0xb0] sm:$0xff]
  %v125 = vld [vmem:[%s5 + $0xb8] sm:$0xff]
  %v126 = vld [vmem:[%s5 + $0xc0] sm:$0xff]
  %v127 = vld [vmem:[%s5 + $0xc8] sm:$0xff]
  %v128 = vld [vmem:[%s5 + $0xd0] sm:$0xff]
  %v129 = vld [vmem:[%s5 + $0xd8] sm:$0xff]
  %v130 = vld [vmem:[%s5 + $0xe0] sm:$0xff]
  %v131 = vld [vmem:[%s5 + $0xe8] sm:$0xff]
  %v132 = vld [vmem:[%s5 + $0xf0] sm:$0xff]
  %v133 = vld [vmem:[%s5 + $0xf8] sm:$0xff]
  %v134 = vld [vmem:[%s5 + $0x100] sm:$0xff]
  %v135 = vld [vmem:[%s5 + $0x108] sm:$0xff]
  %v136 = vld [vmem:[%s5 + $0x110] sm:$0xff]
  %v137 = vld [vmem:[%s5 + $0x118] sm:$0xff]
  %v138 = vld [vmem:[%s5 + $0x120] sm:$0xff]
  %v139 = vld [vmem:[%s5 + $0x128] sm:$0xff]
  %v140 = vld [vmem:[%s5 + $0x130] sm:$0xff]
  %v141 = vld [vmem:[%s5 + $0x138] sm:$0xff]
  %v142 = vld [vmem:[%s5 + $0x140] sm:$0xff]
  %v143 = vld [vmem:[%s5 + $0x148] sm:$0xff]
  %v144 = vld [vmem:[%s5 + $0x150] sm:$0xff]
  %v145 = vld [vmem:[%s5 + $0x158] sm:$0xff]
  %v146 = vld [vmem:[%s5 + $0x160] sm:$0xff]
  %v147 = vld [vmem:[%s5 + $0x168] sm:$0xff]
  %v148 = vld [vmem:[%s5 + $0x170] sm:$0xff]
  %v149 = vld [vmem:[%s5 + $0x178] sm:$0xff]
  %v150 = vld [vmem:[%s5 + $0x180] sm:$0xff]
  %v151 = vld [vmem:[%s5 + $0x188] sm:$0xff]
  %v152 = vld [vmem:[%s5 + $0x190] sm:$0xff]
  %v153 = vld [vmem:[%s5 + $0x198] sm:$0xff]
  %v154 = vld [vmem:[%s5 + $0x1a0] sm:$0xff]
  %v155 = vld [vmem:[%s5 + $0x1a8] sm:$0xff]
  %v156 = vld [vmem:[%s5 + $0x1b0] sm:$0xff]
  %v157 = vld [vmem:[%s5 + $0x1b8] sm:$0xff]
  %v158 = vld [vmem:[%s5 + $0x1c0] sm:$0xff]
  %v159 = vld [vmem:[%s5 + $0x1c8] sm:$0xff]
  %v160 = vld [vmem:[%s5 + $0x1d0] sm:$0xff]
  %v161 = vld [vmem:[%s5 + $0x1d8] sm:$0xff]
  %v162 = vld [vmem:[%s5 + $0x1e0] sm:$0xff]
  %v163 = vld [vmem:[%s5 + $0x1e8] sm:$0xff]
  %v164 = vld [vmem:[%s5 + $0x1f0] sm:$0xff]
  %v165 = vld [vmem:[%s5 + $0x1f8] sm:$0xff]
  %v166 = vld [vmem:[%s6] sm:$0xf]
  %v168 = vlaneseq
  %v169 = vshrl.u32 %v168, 7
  %v170 = vsub.s32 0, %v169
  %v171 = vrot.slane %v166, %v170
  %v172 = vlaneseq
  %v173 = vshrl.u32 %v172, 7
  %v174 = vsub.s32 1, %v173
  %v175 = vrot.slane %v166, %v174
  %v176 = vlaneseq
  %v177 = vshrl.u32 %v176, 7
  %v178 = vsub.s32 2, %v177
  %v179 = vrot.slane %v166, %v178
  %v180 = vlaneseq
  %v181 = vshrl.u32 %v180, 7
  %v182 = vsub.s32 3, %v181
  %v183 = vrot.slane %v166, %v182
  %188 = vmatprep.subr.mxu0 %v163
  %189 = vmatpush1.msra.mxu0 %v162
  %190 = vmatprep.subr.mxu0 %v159
  %191 = vmatpush1.msra.mxu0 %v158
  %192 = vmatprep.subr.mxu0 %v155
  %193 = vmatpush1.msra.mxu0 %v154
  %194 = vmatprep.subr.mxu0 %v151
  %195 = vmatpush1.msra.mxu0 %v150
  %196 = vmatprep.subr.mxu0 %v147
  %197 = vmatpush1.msra.mxu0 %v146
  %198 = vmatprep.subr.mxu0 %v143
  %199 = vmatpush1.msra.mxu0 %v142
  %200 = vmatprep.subr.mxu0 %v139
  %201 = vmatpush1.msra.mxu0 %v138
  %202 = vmatprep.subr.mxu0 %v135
  %203 = vmatpush1.msra.mxu0 %v134
  %204 = vmatprep.subr.mxu0 %v131
  %205 = vmatpush1.msra.mxu0 %v130
  %206 = vmatprep.subr.mxu0 %v127
  %207 = vmatpush1.msra.mxu0 %v126
  %208 = vmatprep.subr.mxu0 %v123
  %209 = vmatpush1.msra.mxu0 %v122
  %210 = vmatprep.subr.mxu0 %v119
  %211 = vmatpush1.msra.mxu0 %v118
  %212 = vmatprep.subr.mxu0 %v115
  %213 = vmatpush1.msra.mxu0 %v114
  %214 = vmatprep.subr.mxu0 %v111
  %215 = vmatpush1.msra.mxu0 %v110
  %216 = vmatprep.subr.mxu0 %v107
  %217 = vmatpush1.msra.mxu0 %v106
  %218 = vmatprep.subr.mxu0 %v103
  %219 = vmatpush1.msra.mxu0 %v102
  %220 = vmatprep.subr.mxu0 0.0
  %221 = vmatpush2.msra.mxu0 0.0
  %222 = vmatprep.subr.mxu0 0.0
  %223 = vmatpush2.msra.mxu0 0.0
  %224 = vmatprep.subr.mxu0 0.0
  %225 = vmatpush2.msra.mxu0 0.0
  %226 = vmatprep.subr.mxu0 0.0
  %227 = vmatpush2.msra.mxu0 0.0
  %228 = vmatprep.subr.mxu0 0.0
  %229 = vmatpush2.msra.mxu0 0.0
  %230 = vmatprep.subr.mxu0 0.0
  %231 = vmatpush2.msra.mxu0 0.0
  %232 = vmatprep.subr.mxu0 0.0
  %233 = vmatpush2.msra.mxu0 0.0
  %234 = vmatprep.subr.mxu0 0.0
  %235 = vmatpush2.msra.mxu0 0.0
  %236 = vmatprep.subr.mxu0 0.0
  %237 = vmatpush2.msra.mxu0 0.0
  %238 = vmatprep.subr.mxu0 0.0
  %239 = vmatpush2.msra.mxu0 0.0
  %240 = vmatprep.subr.mxu0 0.0
  %241 = vmatpush2.msra.mxu0 0.0
  %242 = vmatprep.subr.mxu0 0.0
  %243 = vmatpush2.msra.mxu0 0.0
  %244 = vmatprep.subr.mxu0 0.0
  %245 = vmatpush2.msra.mxu0 0.0
  %246 = vmatprep.subr.mxu0 0.0
  %247 = vmatpush2.msra.mxu0 0.0
  %248 = vmatprep.subr.mxu0 0.0
  %249 = vmatpush2.msra.mxu0 0.0
  %250 = vmatprep.subr.mxu0 0.0
  %251 = vmatpush2.msra.mxu0 0.0
  %252 = vmatprep.mubr.f32.mxu0 0.0
  %253 = vmatmul.mubr.f32.gmra.mxu0 %v94
  %v254 = vpop.f32.mrf.mxu0
  %v255 = vadd.f32 %v171, %v254
  %v256 = vpop.f32.mrf.mxu0
  %v257 = vadd.f32 %v175, %v256
  %258 = vmatprep.mubr.f32.mxu0 0.0
  %259 = vmatmul.mubr.f32.gmra.mxu0 %v95
  %v260 = vpop.f32.mrf.mxu0
  %v261 = vadd.f32 %v171, %v260
  %v262 = vpop.f32.mrf.mxu0
  %v263 = vadd.f32 %v175, %v262
  %264 = vmatprep.mubr.f32.mxu0 0.0
  %265 = vmatmul.mubr.f32.gmra.mxu0 %v96
  %v266 = vpop.f32.mrf.mxu0
  %v267 = vadd.f32 %v171, %v266
  %v268 = vpop.f32.mrf.mxu0
  %v269 = vadd.f32 %v175, %v268
  %270 = vmatprep.mubr.f32.mxu0 0.0
  %271 = vmatmul.mubr.f32.gmra.mxu0 %v97
  %v272 = vpop.f32.mrf.mxu0
  %v273 = vadd.f32 %v171, %v272
  %v274 = vpop.f32.mrf.mxu0
  %v275 = vadd.f32 %v175, %v274
  %276 = vmatprep.mubr.f32.mxu0 0.0
  %277 = vmatmul.mubr.f32.gmra.mxu0 %v98
  %v278 = vpop.f32.mrf.mxu0
  %v279 = vadd.f32 %v171, %v278
  %v280 = vpop.f32.mrf.mxu0
  %v281 = vadd.f32 %v175, %v280
  %282 = vmatprep.mubr.f32.mxu0 0.0
  %283 = vmatmul.mubr.f32.gmra.mxu0 %v99
  %v284 = vpop.f32.mrf.mxu0
  %v285 = vadd.f32 %v171, %v284
  %v286 = vpop.f32.mrf.mxu0
  %v287 = vadd.f32 %v175, %v286
  %288 = vmatprep.mubr.f32.mxu0 0.0
  %289 = vmatmul.mubr.f32.gmra.mxu0 %v100
  %v290 = vpop.f32.mrf.mxu0
  %v291 = vadd.f32 %v171, %v290
  %v292 = vpop.f32.mrf.mxu0
  %v293 = vadd.f32 %v175, %v292
  %294 = vmatprep.mubr.f32.mxu0 0.0
  %295 = vmatmul.mubr.f32.gmra.mxu0 %v101
  %v296 = vpop.f32.mrf.mxu0
  %v297 = vadd.f32 %v171, %v296
  %v298 = vpop.f32.mrf.mxu0
  %v299 = vadd.f32 %v175, %v298
  %300 = vdwg.mxu0
  %301 = vmatprep.subr.mxu0 %v165
  %302 = vmatpush1.msra.mxu0 %v164
  %303 = vmatprep.subr.mxu0 %v161
  %304 = vmatpush1.msra.mxu0 %v160
  %305 = vmatprep.subr.mxu0 %v157
  %306 = vmatpush1.msra.mxu0 %v156
  %307 = vmatprep.subr.mxu0 %v153
  %308 = vmatpush1.msra.mxu0 %v152
  %309 = vmatprep.subr.mxu0 %v149
  %310 = vmatpush1.msra.mxu0 %v148
  %311 = vmatprep.subr.mxu0 %v145
  %312 = vmatpush1.msra.mxu0 %v144
  %313 = vmatprep.subr.mxu0 %v141
  %314 = vmatpush1.msra.mxu0 %v140
  %315 = vmatprep.subr.mxu0 %v137
  %316 = vmatpush1.msra.mxu0 %v136
  %317 = vmatprep.subr.mxu0 %v133
  %318 = vmatpush1.msra.mxu0 %v132
  %319 = vmatprep.subr.mxu0 %v129
  %320 = vmatpush1.msra.mxu0 %v128
  %321 = vmatprep.subr.mxu0 %v125
  %322 = vmatpush1.msra.mxu0 %v124
  %323 = vmatprep.subr.mxu0 %v121
  %324 = vmatpush1.msra.mxu0 %v120
  %325 = vmatprep.subr.mxu0 %v117
  %326 = vmatpush1.msra.mxu0 %v116
  %327 = vmatprep.subr.mxu0 %v113
  %328 = vmatpush1.msra.mxu0 %v112
  %329 = vmatprep.subr.mxu0 %v109
  %330 = vmatpush1.msra.mxu0 %v108
  %331 = vmatprep.subr.mxu0 %v105
  %332 = vmatpush1.msra.mxu0 %v104
  %333 = vmatprep.subr.mxu0 0.0
  %334 = vmatpush2.msra.mxu0 0.0
  %335 = vmatprep.subr.mxu0 0.0
  %336 = vmatpush2.msra.mxu0 0.0
  %337 = vmatprep.subr.mxu0 0.0
  %338 = vmatpush2.msra.mxu0 0.0
  %339 = vmatprep.subr.mxu0 0.0
  %340 = vmatpush2.msra.mxu0 0.0
  %341 = vmatprep.subr.mxu0 0.0
  %342 = vmatpush2.msra.mxu0 0.0
  %343 = vmatprep.subr.mxu0 0.0
  %344 = vmatpush2.msra.mxu0 0.0
  %345 = vmatprep.subr.mxu0 0.0
  %346 = vmatpush2.msra.mxu0 0.0
  %347 = vmatprep.subr.mxu0 0.0
  %348 = vmatpush2.msra.mxu0 0.0
  %349 = vmatprep.subr.mxu0 0.0
  %350 = vmatpush2.msra.mxu0 0.0
  %351 = vmatprep.subr.mxu0 0.0
  %352 = vmatpush2.msra.mxu0 0.0
  %353 = vmatprep.subr.mxu0 0.0
  %354 = vmatpush2.msra.mxu0 0.0
  %355 = vmatprep.subr.mxu0 0.0
  %356 = vmatpush2.msra.mxu0 0.0
  %357 = vmatprep.subr.mxu0 0.0
  %358 = vmatpush2.msra.mxu0 0.0
  %359 = vmatprep.subr.mxu0 0.0
  %360 = vmatpush2.msra.mxu0 0.0
  %361 = vmatprep.subr.mxu0 0.0
  %362 = vmatpush2.msra.mxu0 0.0
  %363 = vmatprep.subr.mxu0 0.0
  %364 = vmatpush2.msra.mxu0 0.0
  %365 = vmatprep.mubr.f32.mxu0 0.0
  %366 = vmatmul.mubr.f32.gmra.mxu0 %v94
  %v367 = vpop.f32.mrf.mxu0
  %v368 = vadd.f32 %v179, %v367
  %v369 = vpop.f32.mrf.mxu0
  %v370 = vadd.f32 %v183, %v369
  %371 = vmatprep.mubr.f32.mxu0 0.0
  %372 = vmatmul.mubr.f32.gmra.mxu0 %v95
  %v373 = vpop.f32.mrf.mxu0
  %v374 = vadd.f32 %v179, %v373
  %v375 = vpop.f32.mrf.mxu0
  %v376 = vadd.f32 %v183, %v375
  %377 = vmatprep.mubr.f32.mxu0 0.0
  %378 = vmatmul.mubr.f32.gmra.mxu0 %v96
  %v379 = vpop.f32.mrf.mxu0
  %v380 = vadd.f32 %v179, %v379
  %v381 = vpop.f32.mrf.mxu0
  %v382 = vadd.f32 %v183, %v381
  %383 = vmatprep.mubr.f32.mxu0 0.0
  %384 = vmatmul.mubr.f32.gmra.mxu0 %v97
  %v385 = vpop.f32.mrf.mxu0
  %v386 = vadd.f32 %v179, %v385
  %v387 = vpop.f32.mrf.mxu0
  %v388 = vadd.f32 %v183, %v387
  %389 = vmatprep.mubr.f32.mxu0 0.0
  %390 = vmatmul.mubr.f32.gmra.mxu0 %v98
  %v391 = vpop.f32.mrf.mxu0
  %v392 = vadd.f32 %v179, %v391
  %v393 = vpop.f32.mrf.mxu0
  %v394 = vadd.f32 %v183, %v393
  %395 = vmatprep.mubr.f32.mxu0 0.0
  %396 = vmatmul.mubr.f32.gmra.mxu0 %v99
  %v397 = vpop.f32.mrf.mxu0
  %v398 = vadd.f32 %v179, %v397
  %v399 = vpop.f32.mrf.mxu0
  %v400 = vadd.f32 %v183, %v399
  %401 = vmatprep.mubr.f32.mxu0 0.0
  %402 = vmatmul.mubr.f32.gmra.mxu0 %v100
  %v403 = vpop.f32.mrf.mxu0
  %v404 = vadd.f32 %v179, %v403
  %v405 = vpop.f32.mrf.mxu0
  %v406 = vadd.f32 %v183, %v405
  %407 = vmatprep.mubr.f32.mxu0 0.0
  %408 = vmatmul.mubr.f32.gmra.mxu0 %v101
  %v409 = vpop.f32.mrf.mxu0
  %v410 = vadd.f32 %v179, %v409
  %v411 = vpop.f32.mrf.mxu0
  %v412 = vadd.f32 %v183, %v411
  %413 = vdwg.mxu0
  %v414 = vmax.f32 %v255, 0.0
  %v415 = vmax.f32 %v257, 0.0
  %v416 = vmax.f32 %v368, 0.0
  %v417 = vmax.f32 %v370, 0.0
  %v418 = vmax.f32 %v261, 0.0
  %v419 = vmax.f32 %v263, 0.0
  %v420 = vmax.f32 %v374, 0.0
  %v421 = vmax.f32 %v376, 0.0
  %v422 = vmax.f32 %v267, 0.0
  %v423 = vmax.f32 %v269, 0.0
  %v424 = vmax.f32 %v380, 0.0
  %v425 = vmax.f32 %v382, 0.0
  %v426 = vmax.f32 %v273, 0.0
  %v427 = vmax.f32 %v275, 0.0
  %v428 = vmax.f32 %v386, 0.0
  %v429 = vmax.f32 %v388, 0.0
  %v430 = vmax.f32 %v279, 0.0
  %v431 = vmax.f32 %v281, 0.0
  %v432 = vmax.f32 %v392, 0.0
  %v433 = vmax.f32 %v394, 0.0
  %v434 = vmax.f32 %v285, 0.0
  %v435 = vmax.f32 %v287, 0.0
  %v436 = vmax.f32 %v398, 0.0
  %v437 = vmax.f32 %v400, 0.0
  %v438 = vmax.f32 %v291, 0.0
  %v439 = vmax.f32 %v293, 0.0
  %v440 = vmax.f32 %v404, 0.0
  %v441 = vmax.f32 %v406, 0.0
  %v442 = vmax.f32 %v297, 0.0
  %v443 = vmax.f32 %v299, 0.0
  %v444 = vmax.f32 %v410, 0.0
  %v445 = vmax.f32 %v412, 0.0
  %v446 = vld [vmem:[%s7] sm:$0xff]
  %v447 = vld [vmem:[%s7 + $0x8] sm:$0xff]
  %v448 = vld [vmem:[%s7 + $0x10] sm:$0xff]
  %v449 = vld [vmem:[%s7 + $0x18] sm:$0xff]
  %v450 = vld [vmem:[%s7 + $0x20] sm:$0xff]
  %v451 = vld [vmem:[%s7 + $0x28] sm:$0xff]
  %v452 = vld [vmem:[%s7 + $0x30] sm:$0xff]
  %v453 = vld [vmem:[%s7 + $0x38] sm:$0xff]
  %v454 = vld [vmem:[%s7 + $0x40] sm:$0xff]
  %v455 = vld [vmem:[%s7 + $0x48] sm:$0xff]
  %v456 = vld [vmem:[%s7 + $0x50] sm:$0xff]
  %v457 = vld [vmem:[%s7 + $0x58] sm:$0xff]
  %v458 = vld [vmem:[%s7 + $0x60] sm:$0xff]
  %v459 = vld [vmem:[%s7 + $0x68] sm:$0xff]
  %v460 = vld [vmem:[%s7 + $0x70] sm:$0xff]
  %v461 = vld [vmem:[%s7 + $0x78] sm:$0xff]
  %v462 = vld [vmem:[%s7 + $0x80] sm:$0xff]
  %v463 = vld [vmem:[%s7 + $0x88] sm:$0xff]
  %v464 = vld [vmem:[%s7 + $0x90] sm:$0xff]
  %v465 = vld [vmem:[%s7 + $0x98] sm:$0xff]
  %v466 = vld [vmem:[%s7 + $0xa0] sm:$0xff]
  %v467 = vld [vmem:[%s7 + $0xa8] sm:$0xff]
  %v468 = vld [vmem:[%s7 + $0xb0] sm:$0xff]
  %v469 = vld [vmem:[%s7 + $0xb8] sm:$0xff]
  %v470 = vld [vmem:[%s7 + $0xc0] sm:$0xff]
  %v471 = vld [vmem:[%s7 + $0xc8] sm:$0xff]
  %v472 = vld [vmem:[%s7 + $0xd0] sm:$0xff]
  %v473 = vld [vmem:[%s7 + $0xd8] sm:$0xff]
  %v474 = vld [vmem:[%s7 + $0xe0] sm:$0xff]
  %v475 = vld [vmem:[%s7 + $0xe8] sm:$0xff]
  %v476 = vld [vmem:[%s7 + $0xf0] sm:$0xff]
  %v477 = vld [vmem:[%s7 + $0xf8] sm:$0xff]
  %v478 = vld [vmem:[%s7 + $0x100] sm:$0xff]
  %v479 = vld [vmem:[%s7 + $0x108] sm:$0xff]
  %v480 = vld [vmem:[%s7 + $0x110] sm:$0xff]
  %v481 = vld [vmem:[%s7 + $0x118] sm:$0xff]
  %v482 = vld [vmem:[%s7 + $0x120] sm:$0xff]
  %v483 = vld [vmem:[%s7 + $0x128] sm:$0xff]
  %v484 = vld [vmem:[%s7 + $0x130] sm:$0xff]
  %v485 = vld [vmem:[%s7 + $0x138] sm:$0xff]
  %v486 = vld [vmem:[%s7 + $0x140] sm:$0xff]
  %v487 = vld [vmem:[%s7 + $0x148] sm:$0xff]
  %v488 = vld [vmem:[%s7 + $0x150] sm:$0xff]
  %v489 = vld [vmem:[%s7 + $0x158] sm:$0xff]
  %v490 = vld [vmem:[%s7 + $0x160] sm:$0xff]
  %v491 = vld [vmem:[%s7 + $0x168] sm:$0xff]
  %v492 = vld [vmem:[%s7 + $0x170] sm:$0xff]
  %v493 = vld [vmem:[%s7 + $0x178] sm:$0xff]
  %v494 = vld [vmem:[%s7 + $0x180] sm:$0xff]
  %v495 = vld [vmem:[%s7 + $0x188] sm:$0xff]
  %v496 = vld [vmem:[%s7 + $0x190] sm:$0xff]
  %v497 = vld [vmem:[%s7 + $0x198] sm:$0xff]
  %v498 = vld [vmem:[%s7 + $0x1a0] sm:$0xff]
  %v499 = vld [vmem:[%s7 + $0x1a8] sm:$0xff]
  %v500 = vld [vmem:[%s7 + $0x1b0] sm:$0xff]
  %v501 = vld [vmem:[%s7 + $0x1b8] sm:$0xff]
  %v502 = vld [vmem:[%s7 + $0x1c0] sm:$0xff]
  %v503 = vld [vmem:[%s7 + $0x1c8] sm:$0xff]
  %v504 = vld [vmem:[%s7 + $0x1d0] sm:$0xff]
  %v505 = vld [vmem:[%s7 + $0x1d8] sm:$0xff]
  %v506 = vld [vmem:[%s7 + $0x1e0] sm:$0xff]
  %v507 = vld [vmem:[%s7 + $0x1e8] sm:$0xff]
  %v508 = vld [vmem:[%s7 + $0x1f0] sm:$0xff]
  %v509 = vld [vmem:[%s7 + $0x1f8] sm:$0xff]
  %v510 = vld [vmem:[%s8] sm:$0x1]
  %v512 = vlaneseq
  %v513 = vshrl.u32 %v512, 7
  %v514 = vsub.s32 0, %v513
  %v515 = vrot.slane %v510, %v514
  %517 = vmatprep.subr.mxu0 0.0
  %518 = vmatpush1.msra.mxu0 %v461
  %519 = vmatprep.subr.mxu0 0.0
  %520 = vmatpush1.msra.mxu0 %v460
  %521 = vmatprep.subr.mxu0 0.0
  %522 = vmatpush1.msra.mxu0 %v459
  %523 = vmatprep.subr.mxu0 0.0
  %524 = vmatpush1.msra.mxu0 %v458
  %525 = vmatprep.subr.mxu0 0.0
  %526 = vmatpush1.msra.mxu0 %v457
  %527 = vmatprep.subr.mxu0 0.0
  %528 = vmatpush1.msra.mxu0 %v456
  %529 = vmatprep.subr.mxu0 0.0
  %530 = vmatpush1.msra.mxu0 %v455
  %531 = vmatprep.subr.mxu0 0.0
  %532 = vmatpush1.msra.mxu0 %v454
  %533 = vmatprep.subr.mxu0 0.0
  %534 = vmatpush1.msra.mxu0 %v453
  %535 = vmatprep.subr.mxu0 0.0
  %536 = vmatpush1.msra.mxu0 %v452
  %537 = vmatprep.subr.mxu0 0.0
  %538 = vmatpush1.msra.mxu0 %v451
  %539 = vmatprep.subr.mxu0 0.0
  %540 = vmatpush1.msra.mxu0 %v450
  %541 = vmatprep.subr.mxu0 0.0
  %542 = vmatpush1.msra.mxu0 %v449
  %543 = vmatprep.subr.mxu0 0.0
  %544 = vmatpush1.msra.mxu0 %v448
  %545 = vmatprep.subr.mxu0 0.0
  %546 = vmatpush1.msra.mxu0 %v447
  %547 = vmatprep.subr.mxu0 0.0
  %548 = vmatpush1.msra.mxu0 %v446
  %549 = vmatprep.subr.mxu0 0.0
  %550 = vmatpush2.msra.mxu0 %v477
  %551 = vmatprep.subr.mxu0 0.0
  %552 = vmatpush2.msra.mxu0 %v476
  %553 = vmatprep.subr.mxu0 0.0
  %554 = vmatpush2.msra.mxu0 %v475
  %555 = vmatprep.subr.mxu0 0.0
  %556 = vmatpush2.msra.mxu0 %v474
  %557 = vmatprep.subr.mxu0 0.0
  %558 = vmatpush2.msra.mxu0 %v473
  %559 = vmatprep.subr.mxu0 0.0
  %560 = vmatpush2.msra.mxu0 %v472
  %561 = vmatprep.subr.mxu0 0.0
  %562 = vmatpush2.msra.mxu0 %v471
  %563 = vmatprep.subr.mxu0 0.0
  %564 = vmatpush2.msra.mxu0 %v470
  %565 = vmatprep.subr.mxu0 0.0
  %566 = vmatpush2.msra.mxu0 %v469
  %567 = vmatprep.subr.mxu0 0.0
  %568 = vmatpush2.msra.mxu0 %v468
  %569 = vmatprep.subr.mxu0 0.0
  %570 = vmatpush2.msra.mxu0 %v467
  %571 = vmatprep.subr.mxu0 0.0
  %572 = vmatpush2.msra.mxu0 %v466
  %573 = vmatprep.subr.mxu0 0.0
  %574 = vmatpush2.msra.mxu0 %v465
  %575 = vmatprep.subr.mxu0 0.0
  %576 = vmatpush2.msra.mxu0 %v464
  %577 = vmatprep.subr.mxu0 0.0
  %578 = vmatpush2.msra.mxu0 %v463
  %579 = vmatprep.subr.mxu0 0.0
  %580 = vmatpush2.msra.mxu0 %v462
  %581 = vmatprep.mubr.f32.mxu0 %v415
  %582 = vmatmul.mubr.f32.gmra.mxu0 %v414
  %v583 = vpop.f32.mrf.mxu0
  %v584 = vadd.f32 %v515, %v583
  %v585 = vpop.f32.mrf.mxu0
  %586 = vmatprep.mubr.f32.mxu0 %v419
  %587 = vmatmul.mubr.f32.gmra.mxu0 %v418
  %v588 = vpop.f32.mrf.mxu0
  %v589 = vadd.f32 %v515, %v588
  %v590 = vpop.f32.mrf.mxu0
  %591 = vmatprep.mubr.f32.mxu0 %v423
  %592 = vmatmul.mubr.f32.gmra.mxu0 %v422
  %v593 = vpop.f32.mrf.mxu0
  %v594 = vadd.f32 %v515, %v593
  %v595 = vpop.f32.mrf.mxu0
  %596 = vmatprep.mubr.f32.mxu0 %v427
  %597 = vmatmul.mubr.f32.gmra.mxu0 %v426
  %v598 = vpop.f32.mrf.mxu0
  %v599 = vadd.f32 %v515, %v598
  %v600 = vpop.f32.mrf.mxu0
  %601 = vmatprep.mubr.f32.mxu0 %v431
  %602 = vmatmul.mubr.f32.gmra.mxu0 %v430
  %v603 = vpop.f32.mrf.mxu0
  %v604 = vadd.f32 %v515, %v603
  %v605 = vpop.f32.mrf.mxu0
  %606 = vmatprep.mubr.f32.mxu0 %v435
  %607 = vmatmul.mubr.f32.gmra.mxu0 %v434
  %v608 = vpop.f32.mrf.mxu0
  %v609 = vadd.f32 %v515, %v608
  %v610 = vpop.f32.mrf.mxu0
  %611 = vmatprep.mubr.f32.mxu0 %v439
  %612 = vmatmul.mubr.f32.gmra.mxu0 %v438
  %v613 = vpop.f32.mrf.mxu0
  %v614 = vadd.f32 %v515, %v613
  %v615 = vpop.f32.mrf.mxu0
  %616 = vmatprep.mubr.f32.mxu0 %v443
  %617 = vmatmul.mubr.f32.gmra.mxu0 %v442
  %v618 = vpop.f32.mrf.mxu0
  %v619 = vadd.f32 %v515, %v618
  %v620 = vpop.f32.mrf.mxu0
  %621 = vdwg.mxu0
  %622 = vmatprep.subr.mxu0 0.0
  %623 = vmatpush1.msra.mxu0 %v493
  %624 = vmatprep.subr.mxu0 0.0
  %625 = vmatpush1.msra.mxu0 %v492
  %626 = vmatprep.subr.mxu0 0.0
  %627 = vmatpush1.msra.mxu0 %v491
  %628 = vmatprep.subr.mxu0 0.0
  %629 = vmatpush1.msra.mxu0 %v490
  %630 = vmatprep.subr.mxu0 0.0
  %631 = vmatpush1.msra.mxu0 %v489
  %632 = vmatprep.subr.mxu0 0.0
  %633 = vmatpush1.msra.mxu0 %v488
  %634 = vmatprep.subr.mxu0 0.0
  %635 = vmatpush1.msra.mxu0 %v487
  %636 = vmatprep.subr.mxu0 0.0
  %637 = vmatpush1.msra.mxu0 %v486
  %638 = vmatprep.subr.mxu0 0.0
  %639 = vmatpush1.msra.mxu0 %v485
  %640 = vmatprep.subr.mxu0 0.0
  %641 = vmatpush1.msra.mxu0 %v484
  %642 = vmatprep.subr.mxu0 0.0
  %643 = vmatpush1.msra.mxu0 %v483
  %644 = vmatprep.subr.mxu0 0.0
  %645 = vmatpush1.msra.mxu0 %v482
  %646 = vmatprep.subr.mxu0 0.0
  %647 = vmatpush1.msra.mxu0 %v481
  %648 = vmatprep.subr.mxu0 0.0
  %649 = vmatpush1.msra.mxu0 %v480
  %650 = vmatprep.subr.mxu0 0.0
  %651 = vmatpush1.msra.mxu0 %v479
  %652 = vmatprep.subr.mxu0 0.0
  %653 = vmatpush1.msra.mxu0 %v478
  %654 = vmatprep.subr.mxu0 0.0
  %655 = vmatpush2.msra.mxu0 %v509
  %656 = vmatprep.subr.mxu0 0.0
  %657 = vmatpush2.msra.mxu0 %v508
  %658 = vmatprep.subr.mxu0 0.0
  %659 = vmatpush2.msra.mxu0 %v507
  %660 = vmatprep.subr.mxu0 0.0
  %661 = vmatpush2.msra.mxu0 %v506
  %662 = vmatprep.subr.mxu0 0.0
  %663 = vmatpush2.msra.mxu0 %v505
  %664 = vmatprep.subr.mxu0 0.0
  %665 = vmatpush2.msra.mxu0 %v504
  %666 = vmatprep.subr.mxu0 0.0
  %667 = vmatpush2.msra.mxu0 %v503
  %668 = vmatprep.subr.mxu0 0.0
  %669 = vmatpush2.msra.mxu0 %v502
  %670 = vmatprep.subr.mxu0 0.0
  %671 = vmatpush2.msra.mxu0 %v501
  %672 = vmatprep.subr.mxu0 0.0
  %673 = vmatpush2.msra.mxu0 %v500
  %674 = vmatprep.subr.mxu0 0.0
  %675 = vmatpush2.msra.mxu0 %v499
  %676 = vmatprep.subr.mxu0 0.0
  %677 = vmatpush2.msra.mxu0 %v498
  %678 = vmatprep.subr.mxu0 0.0
  %679 = vmatpush2.msra.mxu0 %v497
  %680 = vmatprep.subr.mxu0 0.0
  %681 = vmatpush2.msra.mxu0 %v496
  %682 = vmatprep.subr.mxu0 0.0
  %683 = vmatpush2.msra.mxu0 %v495
  %684 = vmatprep.subr.mxu0 0.0
  %685 = vmatpush2.msra.mxu0 %v494
  %686 = vmatprep.mubr.f32.mxu0 %v417
  %687 = vmatmul.mubr.f32.gmra.mxu0 %v416
  %v688 = vpop.f32.mrf.mxu0
  %v689 = vadd.f32 %v584, %v688
  %v690 = vpop.f32.mrf.mxu0
  %691 = vmatprep.mubr.f32.mxu0 %v421
  %692 = vmatmul.mubr.f32.gmra.mxu0 %v420
  %v693 = vpop.f32.mrf.mxu0
  %v694 = vadd.f32 %v589, %v693
  %v695 = vpop.f32.mrf.mxu0
  %696 = vmatprep.mubr.f32.mxu0 %v425
  %697 = vmatmul.mubr.f32.gmra.mxu0 %v424
  %v698 = vpop.f32.mrf.mxu0
  %v699 = vadd.f32 %v594, %v698
  %v700 = vpop.f32.mrf.mxu0
  %701 = vmatprep.mubr.f32.mxu0 %v429
  %702 = vmatmul.mubr.f32.gmra.mxu0 %v428
  %v703 = vpop.f32.mrf.mxu0
  %v704 = vadd.f32 %v599, %v703
  %v705 = vpop.f32.mrf.mxu0
  %706 = vmatprep.mubr.f32.mxu0 %v433
  %707 = vmatmul.mubr.f32.gmra.mxu0 %v432
  %v708 = vpop.f32.mrf.mxu0
  %v709 = vadd.f32 %v604, %v708
  %v710 = vpop.f32.mrf.mxu0
  %711 = vmatprep.mubr.f32.mxu0 %v437
  %712 = vmatmul.mubr.f32.gmra.mxu0 %v436
  %v713 = vpop.f32.mrf.mxu0
  %v714 = vadd.f32 %v609, %v713
  %v715 = vpop.f32.mrf.mxu0
  %716 = vmatprep.mubr.f32.mxu0 %v441
  %717 = vmatmul.mubr.f32.gmra.mxu0 %v440
  %v718 = vpop.f32.mrf.mxu0
  %v719 = vadd.f32 %v614, %v718
  %v720 = vpop.f32.mrf.mxu0
  %721 = vmatprep.mubr.f32.mxu0 %v445
  %722 = vmatmul.mubr.f32.gmra.mxu0 %v444
  %v723 = vpop.f32.mrf.mxu0
  %v724 = vadd.f32 %v619, %v723
  %v725 = vpop.f32.mrf.mxu0
  %726 = vdwg.mxu0
  %v727 = vadd.f32 %v94, %v689
  %v728 = vadd.f32 %v95, %v694
  %v729 = vadd.f32 %v96, %v699
  %v730 = vadd.f32 %v97, %v704
  %v731 = vadd.f32 %v98, %v709
  %v732 = vadd.f32 %v99, %v714
  %v733 = vadd.f32 %v100, %v719
  %v734 = vadd.f32 %v101, %v724
  %735 = vst [vmem:[%s9] sm:$0xff] %v727
  %736 = vst [vmem:[%s9 + $0x8] sm:$0xff] %v728
  %737 = vst [vmem:[%s9 + $0x10] sm:$0xff] %v729
  %738 = vst [vmem:[%s9 + $0x18] sm:$0xff] %v730
  %739 = vst [vmem:[%s9 + $0x20] sm:$0xff] %v731
  %740 = vst [vmem:[%s9 + $0x28] sm:$0xff] %v732
  %741 = vst [vmem:[%s9 + $0x30] sm:$0xff] %v733
  %742 = vst [vmem:[%s9 + $0x38] sm:$0xff] %v734
  // Predicated region
  $region38: #{graph_attention_encoder.14} parent=0 // pred_check
    _
  $region39: #{graph_attention_encoder.14} parent=0 // pred_check_branch
    %744 = sbr.rel (0) target = $region41
  $region40: #{graph_attention_encoder.14} parent=0 // pred_region
    _
  $region41: #{graph_attention_encoder.14} parent=0 // pred_fallthru
    _
  // Predicated region
  $region42: #{graph_attention_encoder.14} parent=0 // pred_check
    _
  $region43: #{graph_attention_encoder.14} parent=0 // pred_check_branch
    %746 = sbr.rel (0) target = $region45
  $region44: #{graph_attention_encoder.14} parent=0 // pred_region
    _
  $region45: #{graph_attention_encoder.14} parent=0 // pred_fallthru
    _

</llo_original>
